<compile_context>
chip_gen: v7x
topology: tpu7x:2x2x1
jax: 0.10.0
libtpu: 0.0.40
codegen_flags: <defaults>
</compile_context>

<pallas_src>
import functools

import jax
import jax.numpy as jnp
from jax.experimental import pallas as pl
from jax.experimental.pallas import tpu as pltpu


LANE = 128
_VMEM = pl.BlockSpec(memory_space=pltpu.MemorySpace.VMEM)


def _round_up(x, m):
    return (x + m - 1) // m * m


# ----------------------------------------------------------------------------
# Pallas kernels
# ----------------------------------------------------------------------------
def _matmul_bias_relu_kernel(a_ref, b_ref, bias_ref, o_ref, acc_ref):
    # grid = (m_tiles, k_tiles); K is the last ("arbitrary") axis.
    k = pl.program_id(1)

    @pl.when(k == 0)
    def _():
        acc_ref[...] = jnp.zeros_like(acc_ref)

    acc_ref[...] += jnp.dot(a_ref[...], b_ref[...],
                            preferred_element_type=jnp.float32)

    @pl.when(k == pl.num_programs(1) - 1)
    def _():
        out = jnp.maximum(acc_ref[...] + bias_ref[...], 0.0)
        o_ref[...] = out.astype(o_ref.dtype)


def _head_kernel(a_ref, w4_ref, b4_ref, w5_ref, b5_ref, o_ref, *, n_valid):
    # fused fc4 + ReLU + fc5 + softmax (last dim of logits is 128-padded).
    h = jnp.dot(a_ref[...], w4_ref[...], preferred_element_type=jnp.float32)
    h = jnp.maximum(h + b4_ref[...], 0.0)
    logits = jnp.dot(h.astype(w5_ref.dtype), w5_ref[...],
                     preferred_element_type=jnp.float32) + b5_ref[...]
    col = jax.lax.broadcasted_iota(jnp.int32, logits.shape, 1)
    logits = jnp.where(col < n_valid, logits, -jnp.inf)
    m = jnp.max(logits, axis=-1, keepdims=True)
    e = jnp.exp(logits - m)
    denom = jnp.sum(e, axis=-1, keepdims=True)
    o_ref[...] = (e * pl.reciprocal(denom, approx=True)).astype(o_ref.dtype)


# ----------------------------------------------------------------------------
# Pallas wrappers
# ----------------------------------------------------------------------------
def _pick_tk(K, cap=2048):
    if K <= cap:
        return K
    for tk in range(cap, 0, -LANE):
        if K % tk == 0:
            return tk
    return K


def matmul_bias_relu(a, b, bias, *, tm_max=256):
    """a:(M,K) bf16, b:(K,N) bf16, bias:(1,N) f32.  K,N are multiples of 128."""
    M, K = a.shape
    K2, N = b.shape
    assert K == K2 and N % LANE == 0 and K % LANE == 0

    tm = min(tm_max, _round_up(M, 8))
    M_pad = _round_up(M, tm)
    if M_pad != M:
        a = jnp.pad(a, ((0, M_pad - M), (0, 0)))
    tk = _pick_tk(K)
    grid = (M_pad // tm, K // tk)

    out = pl.pallas_call(
        _matmul_bias_relu_kernel,
        out_shape=jax.ShapeDtypeStruct((M_pad, N), jnp.bfloat16),
        grid_spec=pltpu.PrefetchScalarGridSpec(
            num_scalar_prefetch=0,
            grid=grid,
            in_specs=[
                pl.BlockSpec((tm, tk), lambda i, k: (i, k)),
                pl.BlockSpec((tk, N), lambda i, k: (k, 0)),
                pl.BlockSpec((1, N), lambda i, k: (0, 0)),
            ],
            out_specs=pl.BlockSpec((tm, N), lambda i, k: (i, 0)),
            scratch_shapes=[pltpu.VMEM((tm, N), jnp.float32)],
        ),
        compiler_params=pltpu.CompilerParams(
            dimension_semantics=("parallel", "arbitrary")),
    )(a, b, bias)
    return out[:M] if M_pad != M else out


def mlp_head(a, w4, b4, w5, b5, *, n_actions):
    """Fused fc4+ReLU+fc5+softmax.  a:(M,K) bf16; returns (M, n_actions) f32."""
    M, K = a.shape
    M_pad = _round_up(max(M, 8), 8)
    if M_pad != M:
        a = jnp.pad(a, ((0, M_pad - M), (0, 0)))
    out = pl.pallas_call(
        functools.partial(_head_kernel, n_valid=n_actions),
        out_shape=jax.ShapeDtypeStruct((M_pad, w5.shape[1]), jnp.float32),
        in_specs=[_VMEM, _VMEM, _VMEM, _VMEM, _VMEM],
        out_specs=_VMEM,
    )(a, w4, b4, w5, b5)
    return out[:M, :n_actions]


# ----------------------------------------------------------------------------
# Conv-as-matmul glue (NHWC, single fused patch-extraction op)
# ----------------------------------------------------------------------------
def extract_patches_nhwc(x, kh, kw, stride):
    # x: (N, H, W, C) -> (N*Ho*Wo, C*kh*kw); feature order is (c, i, j),
    # matching torch's weight.reshape(Cout, Cin*kh*kw) contraction order.
    patches = jax.lax.conv_general_dilated_patches(
        x, filter_shape=(kh, kw), window_strides=(stride, stride),
        padding="VALID", dimension_numbers=("NHWC", "HWIO", "NHWC"))
    N, Ho, Wo, F = patches.shape
    return patches.reshape(N * Ho * Wo, F), Ho, Wo


def conv_bias_relu_nhwc(x, wmat, bias, kh, kw, stride):
    # x: (N, H, W, Cin_pad) bf16, wmat: (Cin_pad*kh*kw, Cout_pad) bf16
    N = x.shape[0]
    patches, Ho, Wo = extract_patches_nhwc(x, kh, kw, stride)
    out = matmul_bias_relu(patches, wmat, bias)          # (N*Ho*Wo, Cout_pad)
    return out.reshape(N, Ho, Wo, wmat.shape[1])


# ----------------------------------------------------------------------------
# Parameters (torch-layout init, then one-time prep into matmul layout)
# ----------------------------------------------------------------------------
def init_params(key, flat_size):
    def u(k, shape, fan_in):
        bound = 1.0 / jnp.sqrt(fan_in)
        return jax.random.uniform(k, shape, jnp.float32, -bound, bound)

    ks = jax.random.split(key, 10)
    return {
        "w1": u(ks[0], (32, 4, 8, 8), 4 * 8 * 8),    "b1": u(ks[1], (32,), 4 * 8 * 8),
        "w2": u(ks[2], (64, 32, 4, 4), 32 * 4 * 4),  "b2": u(ks[3], (64,), 32 * 4 * 4),
        "w3": u(ks[4], (64, 64, 3, 3), 64 * 3 * 3),  "b3": u(ks[5], (64,), 64 * 3 * 3),
        "w4": u(ks[6], (512, flat_size), flat_size), "b4": u(ks[7], (512,), flat_size),
        "w5": u(ks[8], (5, 512), 512),               "b5": u(ks[9], (5,), 512),
    }


def prepare_params(p, n_actions=5):
    """One-time (outside jit): pad channels to 128, transpose to (K, N), bf16."""
    def conv_wmat(w, b, cin_pad, cout_pad):
        cout, cin, kh, kw = w.shape
        w = jnp.pad(w, ((0, cout_pad - cout), (0, cin_pad - cin), (0, 0), (0, 0)))
        wmat = w.reshape(cout_pad, cin_pad * kh * kw).T.astype(jnp.bfloat16)
        bias = jnp.pad(b, (0, cout_pad - cout)).reshape(1, cout_pad).astype(jnp.float32)
        return wmat, bias

    pp = {}
    pp["w1"], pp["b1"] = conv_wmat(p["w1"], p["b1"], cin_pad=4,   cout_pad=LANE)
    pp["w2"], pp["b2"] = conv_wmat(p["w2"], p["b2"], cin_pad=LANE, cout_pad=LANE)
    pp["w3"], pp["b3"] = conv_wmat(p["w3"], p["b3"], cin_pad=LANE, cout_pad=LANE)
    pp["w4"] = p["w4"].T.astype(jnp.bfloat16)                       # (flat, 512)
    pp["b4"] = p["b4"].reshape(1, -1).astype(jnp.float32)
    w5 = jnp.pad(p["w5"], ((0, LANE - n_actions), (0, 0)))          # pad actions -> 128
    pp["w5"] = w5.T.astype(jnp.bfloat16)                            # (512, 128)
    pp["b5"] = jnp.pad(p["b5"], (0, LANE - n_actions)).reshape(1, LANE).astype(jnp.float32)
    return pp


# ----------------------------------------------------------------------------
# NeuralNetwork forward
# ----------------------------------------------------------------------------
def neural_network_forward(pp, x):
    # x: (N, C, H, W) like torch; convert to NHWC + bf16 once.
    x = jnp.transpose(x, (0, 2, 3, 1)).astype(jnp.bfloat16)
    out = conv_bias_relu_nhwc(x,   pp["w1"], pp["b1"], 8, 8, 4)
    out = conv_bias_relu_nhwc(out, pp["w2"], pp["b2"], 4, 4, 2)
    out = conv_bias_relu_nhwc(out, pp["w3"], pp["b3"], 3, 3, 1)
    # torch .view(N, -1) flattens in (C, H, W) order: strip channel padding then
    # go channel-major (tiny tensor, negligible).
    n = out.shape[0]
    out = out[..., :64]
    out = jnp.transpose(out, (0, 3, 1, 2)).reshape(n, -1)
    return mlp_head(out, pp["w4"], pp["b4"], pp["w5"], pp["b5"], n_actions=5)


if __name__ == "__main__":
    batch, channels, spatial = 2, 4, 64
    x = jax.random.normal(jax.random.PRNGKey(0),
                          (batch, channels, spatial, spatial), jnp.float32)

    # derive flat_size from the small input (original 222784 assumes 500x500)
    h1 = (spatial - 8) // 4 + 1
    h2 = (h1 - 4) // 2 + 1
    h3 = (h2 - 3) // 1 + 1
    flat_size = 64 * h3 * h3

    params = init_params(jax.random.PRNGKey(42), flat_size)
    pp = prepare_params(params)                     # one-time weight prep (eager)

    fwd = jax.jit(neural_network_forward)
    probs = fwd(pp, x)
    jax.block_until_ready(probs)

    assert probs.shape == (batch, 5)
    assert bool(jnp.all(jnp.isfinite(probs)))
    assert jnp.allclose(jnp.sum(probs, axis=-1), 1.0, atol=1e-2)
    print("KERNEL_OK")
</pallas_src>

<mosaic_0001>
module attributes {stable_mosaic.version = 11 : i64} {
  func.func @_matmul_bias_relu_kernel(%arg0: i32, %arg1: i32, %arg2: memref<256x256xbf16, #tpu.memory_space<vmem>>, %arg3: memref<256x128xbf16, #tpu.memory_space<vmem>>, %arg4: memref<1x128xf32, #tpu.memory_space<vmem>>, %arg5: memref<256x128xbf16, #tpu.memory_space<vmem>>, %arg6: memref<256x128xf32, #tpu.memory_space<vmem>>) attributes {dimension_semantics = [#tpu.dimension_semantics<parallel>, #tpu.dimension_semantics<arbitrary>], iteration_bounds = array<i64: 2, 1>, scalar_prefetch = 0 : i64, scratch_operands = 1 : i64, tpu.core_type = #tpu.core_type<tc>, window_params = [{transform_indices = @transform_0, window_bounds = array<i64: 256, 256>}, {transform_indices = @transform_1, window_bounds = array<i64: 256, 128>}, {pipeline_mode = #tpu.pipeline_mode<synchronous>, transform_indices = @transform_2, window_bounds = array<i64: 1, 128>}, {transform_indices = @transform_3, window_bounds = array<i64: 256, 128>}]} {
    %c0_i32 = arith.constant 0 : i32
    %0 = arith.cmpi eq, %arg1, %c0_i32 : i32
    %1 = arith.extui %0 : i1 to i32
    %c0_i32_0 = arith.constant 0 : i32
    %2 = arith.cmpi ne, %1, %c0_i32_0 : i32
    scf.if %2 {
      %cst_10 = arith.constant 0.000000e+00 : f32
      %12 = vector.broadcast %cst_10 : f32 to vector<256x128xf32>
      %c0_11 = arith.constant 0 : index
      %c0_12 = arith.constant 0 : index
      %13 = vector.load %arg6[%c0_11, %c0_12] : memref<256x128xf32, #tpu.memory_space<vmem>>, vector<256x128xf32>
      tpu.vector_store %arg6[%c0_11, %c0_12], %12 {strides = array<i32>} : memref<256x128xf32, #tpu.memory_space<vmem>>, vector<256x128xf32>,
    } else {
    }
    %c0 = arith.constant 0 : index
    %c0_1 = arith.constant 0 : index
    %3 = vector.load %arg6[%c0, %c0_1] : memref<256x128xf32, #tpu.memory_space<vmem>>, vector<256x128xf32>
    %c0_2 = arith.constant 0 : index
    %c0_3 = arith.constant 0 : index
    %4 = vector.load %arg2[%c0_2, %c0_3] : memref<256x256xbf16, #tpu.memory_space<vmem>>, vector<256x256xbf16>
    %c0_4 = arith.constant 0 : index
    %c0_5 = arith.constant 0 : index
    %5 = vector.load %arg3[%c0_4, %c0_5] : memref<256x128xbf16, #tpu.memory_space<vmem>>, vector<256x128xbf16>
    %cst = arith.constant dense<0.000000e+00> : vector<256x128xf32>
    %6 = tpu.matmul %4, %5, %cst {dimension_numbers = #tpu.dot_dimension_numbers<[1], [0], [0], [1], [0, 0, 1, 1], [], []>} : vector<256x256xbf16>, vector<256x128xbf16>, vector<256x128xf32> -> vector<256x128xf32>
    %7 = arith.addf %3, %6 : vector<256x128xf32>
    %c0_6 = arith.constant 0 : index
    %c0_7 = arith.constant 0 : index
    %8 = vector.load %arg6[%c0_6, %c0_7] : memref<256x128xf32, #tpu.memory_space<vmem>>, vector<256x128xf32>
    tpu.vector_store %arg6[%c0_6, %c0_7], %7 {strides = array<i32>} : memref<256x128xf32, #tpu.memory_space<vmem>>, vector<256x128xf32>,
    %c0_i32_8 = arith.constant 0 : i32
    %9 = arith.cmpi eq, %arg1, %c0_i32_8 : i32
    %10 = arith.extui %9 : i1 to i32
    %c0_i32_9 = arith.constant 0 : i32
    %11 = arith.cmpi ne, %10, %c0_i32_9 : i32
    scf.if %11 {
      %c0_10 = arith.constant 0 : index
      %c0_11 = arith.constant 0 : index
      %12 = vector.load %arg6[%c0_10, %c0_11] : memref<256x128xf32, #tpu.memory_space<vmem>>, vector<256x128xf32>
      %c0_12 = arith.constant 0 : index
      %c0_13 = arith.constant 0 : index
      %13 = vector.load %arg4[%c0_12, %c0_13] : memref<1x128xf32, #tpu.memory_space<vmem>>, vector<1x128xf32>
      %14 = vector.broadcast %13 : vector<1x128xf32> to vector<256x128xf32>
      %15 = arith.addf %12, %14 : vector<256x128xf32>
      %cst_14 = arith.constant 0.000000e+00 : f32
      %16 = vector.broadcast %cst_14 : f32 to vector<256x128xf32>
      %17 = arith.maximumf %15, %16 : vector<256x128xf32>
      %18 = arith.truncf %17 : vector<256x128xf32> to vector<256x128xbf16>
      %c0_15 = arith.constant 0 : index
      %c0_16 = arith.constant 0 : index
      %19 = vector.load %arg5[%c0_15, %c0_16] : memref<256x128xbf16, #tpu.memory_space<vmem>>, vector<256x128xbf16>
      tpu.vector_store %arg5[%c0_15, %c0_16], %18 {strides = array<i32>} : memref<256x128xbf16, #tpu.memory_space<vmem>>, vector<256x128xbf16>,
    } else {
    }
    return
  }
  func.func @transform_0(%arg0: i32, %arg1: i32) -> (i32, i32) {
    %c0_i32 = arith.constant 0 : i32
    return %arg0, %arg1 : i32, i32
  }
  func.func @transform_1(%arg0: i32, %arg1: i32) -> (i32, i32) {
    %c0_i32 = arith.constant 0 : i32
    %c0_i32_0 = arith.constant 0 : i32
    return %arg1, %c0_i32 : i32, i32
  }
  func.func @transform_2(%arg0: i32, %arg1: i32) -> (i32, i32) {
    %c0_i32 = arith.constant 0 : i32
    %c0_i32_0 = arith.constant 0 : i32
    %c0_i32_1 = arith.constant 0 : i32
    return %c0_i32, %c0_i32_0 : i32, i32
  }
  func.func @transform_3(%arg0: i32, %arg1: i32) -> (i32, i32) {
    %c0_i32 = arith.constant 0 : i32
    %c0_i32_0 = arith.constant 0 : i32
    return %arg0, %c0_i32 : i32, i32
  }
}

module attributes {stable_mosaic.version = 11 : i64} {
  func.func @_matmul_bias_relu_kernel(%arg0: i32, %arg1: i32, %arg2: memref<72x2048xbf16, #tpu.memory_space<vmem>>, %arg3: memref<2048x128xbf16, #tpu.memory_space<vmem>>, %arg4: memref<1x128xf32, #tpu.memory_space<vmem>>, %arg5: memref<72x128xbf16, #tpu.memory_space<vmem>>, %arg6: memref<72x128xf32, #tpu.memory_space<vmem>>) attributes {dimension_semantics = [#tpu.dimension_semantics<parallel>, #tpu.dimension_semantics<arbitrary>], iteration_bounds = array<i64: 1, 1>, scalar_prefetch = 0 : i64, scratch_operands = 1 : i64, tpu.core_type = #tpu.core_type<tc>, window_params = [{transform_indices = @transform_0, window_bounds = array<i64: 72, 2048>}, {transform_indices = @transform_1, window_bounds = array<i64: 2048, 128>}, {pipeline_mode = #tpu.pipeline_mode<synchronous>, transform_indices = @transform_2, window_bounds = array<i64: 1, 128>}, {transform_indices = @transform_3, window_bounds = array<i64: 72, 128>}]} {
    %c0_i32 = arith.constant 0 : i32
    %0 = arith.cmpi eq, %arg1, %c0_i32 : i32
    %1 = arith.extui %0 : i1 to i32
    %c0_i32_0 = arith.constant 0 : i32
    %2 = arith.cmpi ne, %1, %c0_i32_0 : i32
    scf.if %2 {
      %cst_10 = arith.constant 0.000000e+00 : f32
      %12 = vector.broadcast %cst_10 : f32 to vector<72x128xf32>
      %c0_11 = arith.constant 0 : index
      %c0_12 = arith.constant 0 : index
      %13 = vector.load %arg6[%c0_11, %c0_12] : memref<72x128xf32, #tpu.memory_space<vmem>>, vector<72x128xf32>
      tpu.vector_store %arg6[%c0_11, %c0_12], %12 {strides = array<i32>} : memref<72x128xf32, #tpu.memory_space<vmem>>, vector<72x128xf32>,
    } else {
    }
    %c0 = arith.constant 0 : index
    %c0_1 = arith.constant 0 : index
    %3 = vector.load %arg6[%c0, %c0_1] : memref<72x128xf32, #tpu.memory_space<vmem>>, vector<72x128xf32>
    %c0_2 = arith.constant 0 : index
    %c0_3 = arith.constant 0 : index
    %4 = vector.load %arg2[%c0_2, %c0_3] : memref<72x2048xbf16, #tpu.memory_space<vmem>>, vector<72x2048xbf16>
    %c0_4 = arith.constant 0 : index
    %c0_5 = arith.constant 0 : index
    %5 = vector.load %arg3[%c0_4, %c0_5] : memref<2048x128xbf16, #tpu.memory_space<vmem>>, vector<2048x128xbf16>
    %cst = arith.constant dense<0.000000e+00> : vector<72x128xf32>
    %6 = tpu.matmul %4, %5, %cst {dimension_numbers = #tpu.dot_dimension_numbers<[1], [0], [0], [1], [0, 0, 1, 1], [], []>} : vector<72x2048xbf16>, vector<2048x128xbf16>, vector<72x128xf32> -> vector<72x128xf32>
    %7 = arith.addf %3, %6 : vector<72x128xf32>
    %c0_6 = arith.constant 0 : index
    %c0_7 = arith.constant 0 : index
    %8 = vector.load %arg6[%c0_6, %c0_7] : memref<72x128xf32, #tpu.memory_space<vmem>>, vector<72x128xf32>
    tpu.vector_store %arg6[%c0_6, %c0_7], %7 {strides = array<i32>} : memref<72x128xf32, #tpu.memory_space<vmem>>, vector<72x128xf32>,
    %c0_i32_8 = arith.constant 0 : i32
    %9 = arith.cmpi eq, %arg1, %c0_i32_8 : i32
    %10 = arith.extui %9 : i1 to i32
    %c0_i32_9 = arith.constant 0 : i32
    %11 = arith.cmpi ne, %10, %c0_i32_9 : i32
    scf.if %11 {
      %c0_10 = arith.constant 0 : index
      %c0_11 = arith.constant 0 : index
      %12 = vector.load %arg6[%c0_10, %c0_11] : memref<72x128xf32, #tpu.memory_space<vmem>>, vector<72x128xf32>
      %c0_12 = arith.constant 0 : index
      %c0_13 = arith.constant 0 : index
      %13 = vector.load %arg4[%c0_12, %c0_13] : memref<1x128xf32, #tpu.memory_space<vmem>>, vector<1x128xf32>
      %14 = vector.broadcast %13 : vector<1x128xf32> to vector<72x128xf32>
      %15 = arith.addf %12, %14 : vector<72x128xf32>
      %cst_14 = arith.constant 0.000000e+00 : f32
      %16 = vector.broadcast %cst_14 : f32 to vector<72x128xf32>
      %17 = arith.maximumf %15, %16 : vector<72x128xf32>
      %18 = arith.truncf %17 : vector<72x128xf32> to vector<72x128xbf16>
      %c0_15 = arith.constant 0 : index
      %c0_16 = arith.constant 0 : index
      %19 = vector.load %arg5[%c0_15, %c0_16] : memref<72x128xbf16, #tpu.memory_space<vmem>>, vector<72x128xbf16>
      tpu.vector_store %arg5[%c0_15, %c0_16], %18 {strides = array<i32>} : memref<72x128xbf16, #tpu.memory_space<vmem>>, vector<72x128xbf16>,
    } else {
    }
    return
  }
  func.func @transform_0(%arg0: i32, %arg1: i32) -> (i32, i32) {
    %c0_i32 = arith.constant 0 : i32
    return %arg0, %arg1 : i32, i32
  }
  func.func @transform_1(%arg0: i32, %arg1: i32) -> (i32, i32) {
    %c0_i32 = arith.constant 0 : i32
    %c0_i32_0 = arith.constant 0 : i32
    return %arg1, %c0_i32 : i32, i32
  }
  func.func @transform_2(%arg0: i32, %arg1: i32) -> (i32, i32) {
    %c0_i32 = arith.constant 0 : i32
    %c0_i32_0 = arith.constant 0 : i32
    %c0_i32_1 = arith.constant 0 : i32
    return %c0_i32, %c0_i32_0 : i32, i32
  }
  func.func @transform_3(%arg0: i32, %arg1: i32) -> (i32, i32) {
    %c0_i32 = arith.constant 0 : i32
    %c0_i32_0 = arith.constant 0 : i32
    return %arg0, %c0_i32 : i32, i32
  }
}

module attributes {stable_mosaic.version = 11 : i64} {
  func.func @_matmul_bias_relu_kernel(%arg0: i32, %arg1: i32, %arg2: memref<32x1152xbf16, #tpu.memory_space<vmem>>, %arg3: memref<1152x128xbf16, #tpu.memory_space<vmem>>, %arg4: memref<1x128xf32, #tpu.memory_space<vmem>>, %arg5: memref<32x128xbf16, #tpu.memory_space<vmem>>, %arg6: memref<32x128xf32, #tpu.memory_space<vmem>>) attributes {dimension_semantics = [#tpu.dimension_semantics<parallel>, #tpu.dimension_semantics<arbitrary>], iteration_bounds = array<i64: 1, 1>, scalar_prefetch = 0 : i64, scratch_operands = 1 : i64, tpu.core_type = #tpu.core_type<tc>, window_params = [{transform_indices = @transform_0, window_bounds = array<i64: 32, 1152>}, {transform_indices = @transform_1, window_bounds = array<i64: 1152, 128>}, {pipeline_mode = #tpu.pipeline_mode<synchronous>, transform_indices = @transform_2, window_bounds = array<i64: 1, 128>}, {transform_indices = @transform_3, window_bounds = array<i64: 32, 128>}]} {
    %c0_i32 = arith.constant 0 : i32
    %0 = arith.cmpi eq, %arg1, %c0_i32 : i32
    %1 = arith.extui %0 : i1 to i32
    %c0_i32_0 = arith.constant 0 : i32
    %2 = arith.cmpi ne, %1, %c0_i32_0 : i32
    scf.if %2 {
      %cst_10 = arith.constant 0.000000e+00 : f32
      %12 = vector.broadcast %cst_10 : f32 to vector<32x128xf32>
      %c0_11 = arith.constant 0 : index
      %c0_12 = arith.constant 0 : index
      %13 = vector.load %arg6[%c0_11, %c0_12] : memref<32x128xf32, #tpu.memory_space<vmem>>, vector<32x128xf32>
      tpu.vector_store %arg6[%c0_11, %c0_12], %12 {strides = array<i32>} : memref<32x128xf32, #tpu.memory_space<vmem>>, vector<32x128xf32>,
    } else {
    }
    %c0 = arith.constant 0 : index
    %c0_1 = arith.constant 0 : index
    %3 = vector.load %arg6[%c0, %c0_1] : memref<32x128xf32, #tpu.memory_space<vmem>>, vector<32x128xf32>
    %c0_2 = arith.constant 0 : index
    %c0_3 = arith.constant 0 : index
    %4 = vector.load %arg2[%c0_2, %c0_3] : memref<32x1152xbf16, #tpu.memory_space<vmem>>, vector<32x1152xbf16>
    %c0_4 = arith.constant 0 : index
    %c0_5 = arith.constant 0 : index
    %5 = vector.load %arg3[%c0_4, %c0_5] : memref<1152x128xbf16, #tpu.memory_space<vmem>>, vector<1152x128xbf16>
    %cst = arith.constant dense<0.000000e+00> : vector<32x128xf32>
    %6 = tpu.matmul %4, %5, %cst {dimension_numbers = #tpu.dot_dimension_numbers<[1], [0], [0], [1], [0, 0, 1, 1], [], []>} : vector<32x1152xbf16>, vector<1152x128xbf16>, vector<32x128xf32> -> vector<32x128xf32>
    %7 = arith.addf %3, %6 : vector<32x128xf32>
    %c0_6 = arith.constant 0 : index
    %c0_7 = arith.constant 0 : index
    %8 = vector.load %arg6[%c0_6, %c0_7] : memref<32x128xf32, #tpu.memory_space<vmem>>, vector<32x128xf32>
    tpu.vector_store %arg6[%c0_6, %c0_7], %7 {strides = array<i32>} : memref<32x128xf32, #tpu.memory_space<vmem>>, vector<32x128xf32>,
    %c0_i32_8 = arith.constant 0 : i32
    %9 = arith.cmpi eq, %arg1, %c0_i32_8 : i32
    %10 = arith.extui %9 : i1 to i32
    %c0_i32_9 = arith.constant 0 : i32
    %11 = arith.cmpi ne, %10, %c0_i32_9 : i32
    scf.if %11 {
      %c0_10 = arith.constant 0 : index
      %c0_11 = arith.constant 0 : index
      %12 = vector.load %arg6[%c0_10, %c0_11] : memref<32x128xf32, #tpu.memory_space<vmem>>, vector<32x128xf32>
      %c0_12 = arith.constant 0 : index
      %c0_13 = arith.constant 0 : index
      %13 = vector.load %arg4[%c0_12, %c0_13] : memref<1x128xf32, #tpu.memory_space<vmem>>, vector<1x128xf32>
      %14 = vector.broadcast %13 : vector<1x128xf32> to vector<32x128xf32>
      %15 = arith.addf %12, %14 : vector<32x128xf32>
      %cst_14 = arith.constant 0.000000e+00 : f32
      %16 = vector.broadcast %cst_14 : f32 to vector<32x128xf32>
      %17 = arith.maximumf %15, %16 : vector<32x128xf32>
      %18 = arith.truncf %17 : vector<32x128xf32> to vector<32x128xbf16>
      %c0_15 = arith.constant 0 : index
      %c0_16 = arith.constant 0 : index
      %19 = vector.load %arg5[%c0_15, %c0_16] : memref<32x128xbf16, #tpu.memory_space<vmem>>, vector<32x128xbf16>
      tpu.vector_store %arg5[%c0_15, %c0_16], %18 {strides = array<i32>} : memref<32x128xbf16, #tpu.memory_space<vmem>>, vector<32x128xbf16>,
    } else {
    }
    return
  }
  func.func @transform_0(%arg0: i32, %arg1: i32) -> (i32, i32) {
    %c0_i32 = arith.constant 0 : i32
    return %arg0, %arg1 : i32, i32
  }
  func.func @transform_1(%arg0: i32, %arg1: i32) -> (i32, i32) {
    %c0_i32 = arith.constant 0 : i32
    %c0_i32_0 = arith.constant 0 : i32
    return %arg1, %c0_i32 : i32, i32
  }
  func.func @transform_2(%arg0: i32, %arg1: i32) -> (i32, i32) {
    %c0_i32 = arith.constant 0 : i32
    %c0_i32_0 = arith.constant 0 : i32
    %c0_i32_1 = arith.constant 0 : i32
    return %c0_i32, %c0_i32_0 : i32, i32
  }
  func.func @transform_3(%arg0: i32, %arg1: i32) -> (i32, i32) {
    %c0_i32 = arith.constant 0 : i32
    %c0_i32_0 = arith.constant 0 : i32
    return %arg0, %c0_i32 : i32, i32
  }
}

module attributes {stable_mosaic.version = 11 : i64} {
  func.func @_head_kernel(%arg0: memref<8x1024xbf16, #tpu.memory_space<vmem>>, %arg1: memref<1024x512xbf16, #tpu.memory_space<vmem>>, %arg2: memref<1x512xf32, #tpu.memory_space<vmem>>, %arg3: memref<512x128xbf16, #tpu.memory_space<vmem>>, %arg4: memref<1x128xf32, #tpu.memory_space<vmem>>, %arg5: memref<8x128xf32, #tpu.memory_space<vmem>>) attributes {dimension_semantics = [], scalar_prefetch = 0 : i64, scratch_operands = 0 : i64, tpu.core_type = #tpu.core_type<tc>} {
    %c0 = arith.constant 0 : index
    %c0_0 = arith.constant 0 : index
    %0 = vector.load %arg0[%c0, %c0_0] : memref<8x1024xbf16, #tpu.memory_space<vmem>>, vector<8x1024xbf16>
    %c0_1 = arith.constant 0 : index
    %c0_2 = arith.constant 0 : index
    %1 = vector.load %arg1[%c0_1, %c0_2] : memref<1024x512xbf16, #tpu.memory_space<vmem>>, vector<1024x512xbf16>
    %cst = arith.constant dense<0.000000e+00> : vector<8x512xf32>
    %2 = tpu.matmul %0, %1, %cst {dimension_numbers = #tpu.dot_dimension_numbers<[1], [0], [0], [1], [0, 0, 1, 1], [], []>} : vector<8x1024xbf16>, vector<1024x512xbf16>, vector<8x512xf32> -> vector<8x512xf32>
    %c0_3 = arith.constant 0 : index
    %c0_4 = arith.constant 0 : index
    %3 = vector.load %arg2[%c0_3, %c0_4] : memref<1x512xf32, #tpu.memory_space<vmem>>, vector<1x512xf32>
    %4 = vector.broadcast %3 : vector<1x512xf32> to vector<8x512xf32>
    %5 = arith.addf %2, %4 : vector<8x512xf32>
    %cst_5 = arith.constant 0.000000e+00 : f32
    %6 = vector.broadcast %cst_5 : f32 to vector<8x512xf32>
    %7 = arith.maximumf %5, %6 : vector<8x512xf32>
    %8 = arith.truncf %7 : vector<8x512xf32> to vector<8x512xbf16>
    %c0_6 = arith.constant 0 : index
    %c0_7 = arith.constant 0 : index
    %9 = vector.load %arg3[%c0_6, %c0_7] : memref<512x128xbf16, #tpu.memory_space<vmem>>, vector<512x128xbf16>
    %cst_8 = arith.constant dense<0.000000e+00> : vector<8x128xf32>
    %10 = tpu.matmul %8, %9, %cst_8 {dimension_numbers = #tpu.dot_dimension_numbers<[1], [0], [0], [1], [0, 0, 1, 1], [], []>} : vector<8x512xbf16>, vector<512x128xbf16>, vector<8x128xf32> -> vector<8x128xf32>
    %c0_9 = arith.constant 0 : index
    %c0_10 = arith.constant 0 : index
    %11 = vector.load %arg4[%c0_9, %c0_10] : memref<1x128xf32, #tpu.memory_space<vmem>>, vector<1x128xf32>
    %12 = vector.broadcast %11 : vector<1x128xf32> to vector<8x128xf32>
    %13 = arith.addf %10, %12 : vector<8x128xf32>
    %14 = tpu.iota {dimensions = array<i32: 1>} : vector<8x128xi32>
    %c5_i32 = arith.constant 5 : i32
    %15 = vector.broadcast %c5_i32 : i32 to vector<8x128xi32>
    %16 = arith.cmpi slt, %14, %15 : vector<8x128xi32>
    %cst_11 = arith.constant 0xFF800000 : f32
    %17 = vector.broadcast %cst_11 : f32 to vector<8x128xf32>
    %18 = arith.select %16, %13, %17 : vector<8x128xi1>, vector<8x128xf32>
    %cst_12 = arith.constant dense<0xFF800000> : vector<8xf32>
    %19 = vector.multi_reduction <maximumf>, %18, %cst_12 [1] : vector<8x128xf32> to vector<8xf32>
    %20 = vector.shape_cast %19 : vector<8xf32> to vector<8x1xf32>
    %21 = vector.broadcast %20 : vector<8x1xf32> to vector<8x128xf32>
    %22 = arith.subf %18, %21 : vector<8x128xf32>
    %23 = math.exp %22 : vector<8x128xf32>
    %cst_13 = arith.constant dense<0.000000e+00> : vector<8xf32>
    %24 = vector.multi_reduction <add>, %23, %cst_13 [1] : vector<8x128xf32> to vector<8xf32>
    %25 = vector.shape_cast %24 : vector<8xf32> to vector<8x1xf32>
    %26 = tpu.reciprocal %25 {approx = true} : vector<8x1xf32> -> vector<8x1xf32>
    %27 = vector.broadcast %26 : vector<8x1xf32> to vector<8x128xf32>
    %28 = arith.mulf %23, %27 : vector<8x128xf32>
    %c0_14 = arith.constant 0 : index
    %c0_15 = arith.constant 0 : index
    %29 = vector.load %arg5[%c0_14, %c0_15] : memref<8x128xf32, #tpu.memory_space<vmem>>, vector<8x128xf32>
    tpu.vector_store %arg5[%c0_14, %c0_15], %28 {strides = array<i32>} : memref<8x128xf32, #tpu.memory_space<vmem>>, vector<8x128xf32>,
    return
  }
}

</mosaic_0001>

<llo_original>
// kernel: neural_network_forward.4
$region0: #{neural_network_forward.4}
  #allocation0 [shape = 'u32[]', space=smem, size = 0x4, offset = 0x4, fixed_abs, tag = 'smem constant byte address 0x4 - core index']
  #allocation1 [shape = 'u32[144,128]{1,0:T(1,128)}', space=vmem, size = 0x12000, scoped, tag = 'internal scratch']
  #allocation2 [shape = 'f32[256,128]{1,0:T(8,128)}', space=vmem, size = 0x20000, scoped, tag = 'scratch operand']
  %s0 = inlined_call_operand.vmem [shape: bf16[512,256], index: 0, kind: input, shape index: {}]
  %s1 = inlined_call_operand.vmem [shape: bf16[256,128], index: 1, kind: input, shape index: {}]
  %s2 = inlined_call_operand.vmem [shape: f32[1,128], index: 2, kind: input, shape index: {}]
  %s3 = inlined_call_operand.vmem [shape: bf16[512,128], index: 3, kind: output, shape index: {}]
  %s4 = sld [smem:[#allocation0]]
  $region53: #{neural_network_forward.4} parent=0
    _
  %s6 = ssub.s32 1, %s4
  %s7 = scalar_select 0, %s6, %s4
  loop: start=0, step=1, limit=4
  $region2: #{neural_network_forward.4} parent=0 // loop_pre_header
    _
  $region3: #{neural_network_forward.4} parent=0 // loop_header
    %s9 = sphi 0, %s13
    %p10 = scmp.ge.s32.totalorder %s9, 4
    %s16 = sphi 0, %s28
    %s17 = sphi 0, %s24
    %s18 = sphi 0, %s16
    %s19 = sphi 0, %s17
    %s20 = sphi 0, %s18
    %s21 = sphi 0, %s19
    %s33 = sphi 0, %s35
    %s36 = sphi 0, %s33
    %s37 = sphi 0, %s36
    %s53 = sphi 0, %s37
    %s59 = sphi 0, %s61
    %s62 = sphi 0, %s59
    %s63 = sphi 0, %s62
    %s79 = sphi 0, %s63
    %s83 = sphi 0, %s83
    %s85 = sphi 0, %s83
    %s86 = sphi 0, %s85
    %s100 = sphi 0, %s86
    %s106 = sphi 0, %s108
    %s109 = sphi 0, %s106
    %s110 = sphi 0, %s109
    %s126 = sphi 0, %s110
  $region4: #{neural_network_forward.4} parent=0 // loop_header_branch
    %12 = sbr.rel (%p10) target = $region8
  $region5: #{neural_network_forward.4} parent=0 // loop_body
    %s14 = ssub.s32 %s9, 1
    %s15 = ssub.s32 %s9, 2
    %s22 = sadd.s32 1, %s17
    %p23 = scmp.ge.s32.totalorder %s22, 1
    %s24 = scalar_select %p23, 0, %s22
    %s25 = sadd.s32 1, %s16
    %s26 = scalar_select %p23, %s25, %s16
    %p27 = scmp.ge.s32.totalorder %s26, 2
    %s28 = scalar_select %p27, 0, %s26
    %s29 = ssub.s32 %s16, %s28
    %s30 = ssub.s32 %s17, %s24
    %s31 = sor.u32 %s29, %s30
    %p32 = scmp.eq.s32.totalorder %s31, 0
    %s34 = sadd.s32 %s33, 1
    %s35 = scalar_select %p32, %s33, %s34
    %p38 = pneg %p32
    %p39 = scmp.eq.s32.totalorder %s9, 1
    %p40 = por %p38, %p39
    %p41 = scmp.ne.s32.totalorder %s33, %s36
    %p42 = scmp.eq.s32.totalorder %s9, 0
    %p43 = por %p41, %p42
    %p44 = scmp.ne.s32.totalorder %s33, %s36
    %p45 = scmp.eq.s32.totalorder %s14, 1
    %p46 = por %p44, %p45
    %p47 = scmp.ne.s32.totalorder %s36, %s37
    %p48 = scmp.eq.s32.totalorder %s14, 0
    %p49 = por %p47, %p48
    %p50 = scmp.ne.s32.totalorder %s36, %s37
    %p51 = scmp.eq.s32.totalorder %s15, 1
    %p52 = por %p50, %p51
    %p54 = scmp.ne.s32.totalorder %s37, %s53
    %p55 = scmp.eq.s32.totalorder %s15, 0
    %p56 = por %p54, %p55
    %s57 = ssub.s32 %s17, %s24
    %p58 = scmp.eq.s32.totalorder %s57, 0
    %s60 = sadd.s32 %s59, 1
    %s61 = scalar_select %p58, %s59, %s60
    %p64 = pneg %p58
    %p65 = scmp.eq.s32.totalorder %s9, 1
    %p66 = por %p64, %p65
    %p67 = scmp.ne.s32.totalorder %s59, %s62
    %p68 = scmp.eq.s32.totalorder %s9, 0
    %p69 = por %p67, %p68
    %p70 = scmp.ne.s32.totalorder %s59, %s62
    %p71 = scmp.eq.s32.totalorder %s14, 1
    %p72 = por %p70, %p71
    %p73 = scmp.ne.s32.totalorder %s62, %s63
    %p74 = scmp.eq.s32.totalorder %s14, 0
    %p75 = por %p73, %p74
    %p76 = scmp.ne.s32.totalorder %s62, %s63
    %p77 = scmp.eq.s32.totalorder %s15, 1
    %p78 = por %p76, %p77
    %p80 = scmp.ne.s32.totalorder %s63, %s79
    %p81 = scmp.eq.s32.totalorder %s15, 0
    %p82 = por %p80, %p81
    %s84 = sadd.s32 %s83, 1
    %p87 = scmp.eq.s32.totalorder %s9, 1
    %p88 = scmp.ne.s32.totalorder %s83, %s85
    %p89 = scmp.eq.s32.totalorder %s9, 0
    %p90 = por %p88, %p89
    %p91 = scmp.ne.s32.totalorder %s83, %s85
    %p92 = scmp.eq.s32.totalorder %s14, 1
    %p93 = por %p91, %p92
    %p94 = scmp.ne.s32.totalorder %s85, %s86
    %p95 = scmp.eq.s32.totalorder %s14, 0
    %p96 = por %p94, %p95
    %p97 = scmp.ne.s32.totalorder %s85, %s86
    %p98 = scmp.eq.s32.totalorder %s15, 1
    %p99 = por %p97, %p98
    %p101 = scmp.ne.s32.totalorder %s86, %s100
    %p102 = scmp.eq.s32.totalorder %s15, 0
    %p103 = por %p101, %p102
    %s104 = ssub.s32 %s16, %s28
    %p105 = scmp.eq.s32.totalorder %s104, 0
    %s107 = sadd.s32 %s106, 1
    %s108 = scalar_select %p105, %s106, %s107
    %p111 = pneg %p105
    %p112 = scmp.eq.s32.totalorder %s9, 1
    %p113 = por %p111, %p112
    %p114 = scmp.ne.s32.totalorder %s106, %s109
    %p115 = scmp.eq.s32.totalorder %s9, 0
    %p116 = por %p114, %p115
    %p117 = scmp.ne.s32.totalorder %s106, %s109
    %p118 = scmp.eq.s32.totalorder %s14, 1
    %p119 = por %p117, %p118
    %p120 = scmp.ne.s32.totalorder %s109, %s110
    %p121 = scmp.eq.s32.totalorder %s14, 0
    %p122 = por %p120, %p121
    %p123 = scmp.ne.s32.totalorder %s109, %s110
    %p124 = scmp.eq.s32.totalorder %s15, 1
    %p125 = por %p123, %p124
    %p127 = scmp.ne.s32.totalorder %s110, %s126
    %p128 = scmp.eq.s32.totalorder %s15, 0
    %p129 = por %p127, %p128
    %p130 = scmp.le.s32.totalorder 1, %s9
    %p131 = scmp.lt.s32.totalorder %s9, 3
    %p132 = pnand %p130, %p131
    %p133 = pneg %p132
    // Predicated region
    $region9: #{neural_network_forward.4} parent=5 // pred_check
      _
    $region10: #{neural_network_forward.4} parent=5 // pred_check_branch
      %135 = sbr.rel (%p132) target = $region12
    $region11: #{neural_network_forward.4} parent=5 // pred_region
      %s136 = ssub.s32 %s9, 1
      // Predicated region
      $region13: #{neural_network_forward.4} parent=11 // pred_check
        %p137 = pneg %p75
      $region14: #{neural_network_forward.4} parent=11 // pred_check_branch
        %139 = sbr.rel (%p137) target = $region16
      $region15: #{neural_network_forward.4} parent=11 // pred_region
        %s140 = smul.u32 32, %s19
        %p141 = scmp.lt.s32.totalorder %s140, 31
        %s142 = scalar_select %p141, %s140, 31
        %s143 = smul.addr %s142, 4
        %s144 = scalar_lea.vmem %s1, %s143
        %s145 = smul.u32 32, %s19
      $region16: #{neural_network_forward.4} parent=11 // pred_fallthru
        _
      // Predicated region
      $region17: #{neural_network_forward.4} parent=11 // pred_check
        %p146 = pneg %p96
      $region18: #{neural_network_forward.4} parent=11 // pred_check_branch
        %148 = sbr.rel (%p146) target = $region20
      $region19: #{neural_network_forward.4} parent=11 // pred_region
        _
      $region20: #{neural_network_forward.4} parent=11 // pred_fallthru
        _
    $region12: #{neural_network_forward.4} parent=5 // pred_fallthru
      _
    %p149 = scmp.lt.s32.totalorder %s9, 2
    // Predicated region
    $region21: #{neural_network_forward.4} parent=5 // pred_check
      %p150 = pneg %p149
    $region22: #{neural_network_forward.4} parent=5 // pred_check_branch
      %152 = sbr.rel (%p150) target = $region24
    $region23: #{neural_network_forward.4} parent=5 // pred_region
      // Predicated region
      $region25: #{neural_network_forward.4} parent=23 // pred_check
        %p153 = pneg %p43
      $region26: #{neural_network_forward.4} parent=23 // pred_check_branch
        %155 = sbr.rel (%p153) target = $region28
      $region27: #{neural_network_forward.4} parent=23 // pred_region
        %s156 = smul.u32 32, %s16
        %s157 = smul.u32 2, %s17
        %p158 = scmp.lt.s32.totalorder %s156, 63
        %s159 = scalar_select %p158, %s156, 63
        %p160 = scmp.lt.s32.totalorder %s157, 1
        %s161 = scalar_select %p160, %s157, 1
        %s162 = smul.addr %s159, 2
        %s163 = sadd.s32 %s161, %s162
        %s164 = smul.addr %s163, 4
        %s165 = scalar_lea.vmem %s0, %s164
        %s166 = smul.u32 32, %s16
        %s167 = smul.u32 2, %s17
      $region28: #{neural_network_forward.4} parent=23 // pred_fallthru
        _
    $region24: #{neural_network_forward.4} parent=5 // pred_fallthru
      _
    %p168 = scmp.le.s32.totalorder 1, %s9
    %p169 = scmp.lt.s32.totalorder %s9, 3
    %p170 = pnand %p168, %p169
    %p171 = pneg %p170
    // Predicated region
    $region29: #{neural_network_forward.4} parent=5 // pred_check
      _
    $region30: #{neural_network_forward.4} parent=5 // pred_check_branch
      %173 = sbr.rel (%p170) target = $region32
    $region31: #{neural_network_forward.4} parent=5 // pred_region
      %s174 = ssub.s32 %s9, 1
      %s175 = smul.u32 32, %s18
      %s176 = smul.u32 2, %s19
      %p177 = scmp.lt.s32.totalorder %s175, 63
      %s178 = scalar_select %p177, %s175, 63
      %p179 = scmp.lt.s32.totalorder %s176, 1
      %s180 = scalar_select %p179, %s176, 1
      %s181 = smul.addr %s178, 2
      %s182 = sadd.s32 %s180, %s181
      %s183 = smul.addr %s182, 4
      %s184 = scalar_lea.vmem %s0, %s183
      %p185 = pneg %p49
      %p186 = pneg %p46
      %s187 = smul.u32 32, %s19
      %p188 = scmp.lt.s32.totalorder %s187, 31
      %s189 = scalar_select %p188, %s187, 31
      %s190 = smul.addr %s189, 4
      %s191 = scalar_lea.vmem %s1, %s190
      %p192 = pneg %p75
      %p193 = pneg %p72
      %p194 = pneg %p96
      %p195 = pneg %p93
      %p196 = pneg %p122
      %p197 = pneg %p119
      %s198 = smul.u32 32, %s18
      %p199 = scmp.lt.s32.totalorder %s198, 63
      %s200 = scalar_select %p199, %s198, 63
      %s201 = smul.addr %s200, 4
      %s202 = scalar_lea.vmem %s3, %s201
      %s203 = smul.u32 32, %s18
      %s204 = smul.u32 2, %s19
      %p205 = scmp.lt.s32.totalorder %s203, 63
      %s206 = scalar_select %p205, %s203, 63
      %p207 = scmp.lt.s32.totalorder %s204, 1
      %s208 = scalar_select %p207, %s204, 1
      %s209 = smul.addr %s206, 2
      %s210 = sadd.s32 %s208, %s209
      %s211 = smul.addr %s210, 4
      %s212 = scalar_lea.vmem %s0, %s211
      %s213 = smul.u32 32, %s18
      %s214 = smul.u32 2, %s19
      %s215 = smul.u32 32, %s19
      %p216 = scmp.lt.s32.totalorder %s215, 31
      %s217 = scalar_select %p216, %s215, 31
      %s218 = smul.addr %s217, 4
      %s219 = scalar_lea.vmem %s1, %s218
      %s220 = smul.u32 32, %s19
      %s221 = smul.u32 32, %s18
      %p222 = scmp.lt.s32.totalorder %s221, 63
      %s223 = scalar_select %p222, %s221, 63
      %s224 = smul.addr %s223, 4
      %s225 = scalar_lea.vmem %s3, %s224
      %s226 = smul.u32 32, %s18
      %p228 = scmp.eq.s32.totalorder %s19, 0
      // Predicated region
      $region33: #{neural_network_forward.4} parent=31 // pred_check
        %p229 = pneg %p228
      $region34: #{neural_network_forward.4} parent=31 // pred_check_branch
        %231 = sbr.rel (%p229) target = $region36
      $region35: #{neural_network_forward.4} parent=31 // pred_region
        %232 = vst [vmem:[#allocation2] sm:$0xff] 0.0
        %233 = vst [vmem:[#allocation2 + $0x8] sm:$0xff] 0.0
        %234 = vst [vmem:[#allocation2 + $0x10] sm:$0xff] 0.0
        %235 = vst [vmem:[#allocation2 + $0x18] sm:$0xff] 0.0
        %236 = vst [vmem:[#allocation2 + $0x20] sm:$0xff] 0.0
        %237 = vst [vmem:[#allocation2 + $0x28] sm:$0xff] 0.0
        %238 = vst [vmem:[#allocation2 + $0x30] sm:$0xff] 0.0
        %239 = vst [vmem:[#allocation2 + $0x38] sm:$0xff] 0.0
        %240 = vst [vmem:[#allocation2 + $0x40] sm:$0xff] 0.0
        %241 = vst [vmem:[#allocation2 + $0x48] sm:$0xff] 0.0
        %242 = vst [vmem:[#allocation2 + $0x50] sm:$0xff] 0.0
        %243 = vst [vmem:[#allocation2 + $0x58] sm:$0xff] 0.0
        %244 = vst [vmem:[#allocation2 + $0x60] sm:$0xff] 0.0
        %245 = vst [vmem:[#allocation2 + $0x68] sm:$0xff] 0.0
        %246 = vst [vmem:[#allocation2 + $0x70] sm:$0xff] 0.0
        %247 = vst [vmem:[#allocation2 + $0x78] sm:$0xff] 0.0
        %248 = vst [vmem:[#allocation2 + $0x80] sm:$0xff] 0.0
        %249 = vst [vmem:[#allocation2 + $0x88] sm:$0xff] 0.0
        %250 = vst [vmem:[#allocation2 + $0x90] sm:$0xff] 0.0
        %251 = vst [vmem:[#allocation2 + $0x98] sm:$0xff] 0.0
        %252 = vst [vmem:[#allocation2 + $0xa0] sm:$0xff] 0.0
        %253 = vst [vmem:[#allocation2 + $0xa8] sm:$0xff] 0.0
        %254 = vst [vmem:[#allocation2 + $0xb0] sm:$0xff] 0.0
        %255 = vst [vmem:[#allocation2 + $0xb8] sm:$0xff] 0.0
        %256 = vst [vmem:[#allocation2 + $0xc0] sm:$0xff] 0.0
        %257 = vst [vmem:[#allocation2 + $0xc8] sm:$0xff] 0.0
        %258 = vst [vmem:[#allocation2 + $0xd0] sm:$0xff] 0.0
        %259 = vst [vmem:[#allocation2 + $0xd8] sm:$0xff] 0.0
        %260 = vst [vmem:[#allocation2 + $0xe0] sm:$0xff] 0.0
        %261 = vst [vmem:[#allocation2 + $0xe8] sm:$0xff] 0.0
        %262 = vst [vmem:[#allocation2 + $0xf0] sm:$0xff] 0.0
        %263 = vst [vmem:[#allocation2 + $0xf8] sm:$0xff] 0.0
      $region36: #{neural_network_forward.4} parent=31 // pred_fallthru
        _
      %v264 = vld [vmem:[#allocation2] sm:$0xff]
      %v265 = vld [vmem:[#allocation2 + $0x8] sm:$0xff]
      %v266 = vld [vmem:[#allocation2 + $0x10] sm:$0xff]
      %v267 = vld [vmem:[#allocation2 + $0x18] sm:$0xff]
      %v268 = vld [vmem:[#allocation2 + $0x20] sm:$0xff]
      %v269 = vld [vmem:[#allocation2 + $0x28] sm:$0xff]
      %v270 = vld [vmem:[#allocation2 + $0x30] sm:$0xff]
      %v271 = vld [vmem:[#allocation2 + $0x38] sm:$0xff]
      %v272 = vld [vmem:[#allocation2 + $0x40] sm:$0xff]
      %v273 = vld [vmem:[#allocation2 + $0x48] sm:$0xff]
      %v274 = vld [vmem:[#allocation2 + $0x50] sm:$0xff]
      %v275 = vld [vmem:[#allocation2 + $0x58] sm:$0xff]
      %v276 = vld [vmem:[#allocation2 + $0x60] sm:$0xff]
      %v277 = vld [vmem:[#allocation2 + $0x68] sm:$0xff]
      %v278 = vld [vmem:[#allocation2 + $0x70] sm:$0xff]
      %v279 = vld [vmem:[#allocation2 + $0x78] sm:$0xff]
      %v280 = vld [vmem:[#allocation2 + $0x80] sm:$0xff]
      %v281 = vld [vmem:[#allocation2 + $0x88] sm:$0xff]
      %v282 = vld [vmem:[#allocation2 + $0x90] sm:$0xff]
      %v283 = vld [vmem:[#allocation2 + $0x98] sm:$0xff]
      %v284 = vld [vmem:[#allocation2 + $0xa0] sm:$0xff]
      %v285 = vld [vmem:[#allocation2 + $0xa8] sm:$0xff]
      %v286 = vld [vmem:[#allocation2 + $0xb0] sm:$0xff]
      %v287 = vld [vmem:[#allocation2 + $0xb8] sm:$0xff]
      %v288 = vld [vmem:[#allocation2 + $0xc0] sm:$0xff]
      %v289 = vld [vmem:[#allocation2 + $0xc8] sm:$0xff]
      %v290 = vld [vmem:[#allocation2 + $0xd0] sm:$0xff]
      %v291 = vld [vmem:[#allocation2 + $0xd8] sm:$0xff]
      %v292 = vld [vmem:[#allocation2 + $0xe0] sm:$0xff]
      %v293 = vld [vmem:[#allocation2 + $0xe8] sm:$0xff]
      %v294 = vld [vmem:[#allocation2 + $0xf0] sm:$0xff]
      %v295 = vld [vmem:[#allocation2 + $0xf8] sm:$0xff]
      %v296 = vld [vmem:[%s212] sm:$0xff]
      %v297 = vld [vmem:[%s212 + $0x8] sm:$0xff]
      %v298 = vld [vmem:[%s212 + $0x10] sm:$0xff]
      %v299 = vld [vmem:[%s212 + $0x18] sm:$0xff]
      %v300 = vld [vmem:[%s212 + $0x20] sm:$0xff]
      %v301 = vld [vmem:[%s212 + $0x28] sm:$0xff]
      %v302 = vld [vmem:[%s212 + $0x30] sm:$0xff]
      %v303 = vld [vmem:[%s212 + $0x38] sm:$0xff]
      %v304 = vld [vmem:[%s212 + $0x40] sm:$0xff]
      %v305 = vld [vmem:[%s212 + $0x48] sm:$0xff]
      %v306 = vld [vmem:[%s212 + $0x50] sm:$0xff]
      %v307 = vld [vmem:[%s212 + $0x58] sm:$0xff]
      %v308 = vld [vmem:[%s212 + $0x60] sm:$0xff]
      %v309 = vld [vmem:[%s212 + $0x68] sm:$0xff]
      %v310 = vld [vmem:[%s212 + $0x70] sm:$0xff]
      %v311 = vld [vmem:[%s212 + $0x78] sm:$0xff]
      %v312 = vld [vmem:[%s212 + $0x80] sm:$0xff]
      %v313 = vld [vmem:[%s212 + $0x88] sm:$0xff]
      %v314 = vld [vmem:[%s212 + $0x90] sm:$0xff]
      %v315 = vld [vmem:[%s212 + $0x98] sm:$0xff]
      %v316 = vld [vmem:[%s212 + $0xa0] sm:$0xff]
      %v317 = vld [vmem:[%s212 + $0xa8] sm:$0xff]
      %v318 = vld [vmem:[%s212 + $0xb0] sm:$0xff]
      %v319 = vld [vmem:[%s212 + $0xb8] sm:$0xff]
      %v320 = vld [vmem:[%s212 + $0xc0] sm:$0xff]
      %v321 = vld [vmem:[%s212 + $0xc8] sm:$0xff]
      %v322 = vld [vmem:[%s212 + $0xd0] sm:$0xff]
      %v323 = vld [vmem:[%s212 + $0xd8] sm:$0xff]
      %v324 = vld [vmem:[%s212 + $0xe0] sm:$0xff]
      %v325 = vld [vmem:[%s212 + $0xe8] sm:$0xff]
      %v326 = vld [vmem:[%s212 + $0xf0] sm:$0xff]
      %v327 = vld [vmem:[%s212 + $0xf8] sm:$0xff]
      %v328 = vld [vmem:[%s219] sm:$0xf]
      %v329 = vld [vmem:[%s219 + $0x4] sm:$0xf]
      %v330 = vld [vmem:[%s219 + $0x8] sm:$0xf]
      %v331 = vld [vmem:[%s219 + $0xc] sm:$0xf]
      %v332 = vld [vmem:[%s219 + $0x10] sm:$0xf]
      %v333 = vld [vmem:[%s219 + $0x14] sm:$0xf]
      %v334 = vld [vmem:[%s219 + $0x18] sm:$0xf]
      %v335 = vld [vmem:[%s219 + $0x1c] sm:$0xf]
      %v336 = vld [vmem:[%s219 + $0x20] sm:$0xf]
      %v337 = vld [vmem:[%s219 + $0x24] sm:$0xf]
      %v338 = vld [vmem:[%s219 + $0x28] sm:$0xf]
      %v339 = vld [vmem:[%s219 + $0x2c] sm:$0xf]
      %v340 = vld [vmem:[%s219 + $0x30] sm:$0xf]
      %v341 = vld [vmem:[%s219 + $0x34] sm:$0xf]
      %v342 = vld [vmem:[%s219 + $0x38] sm:$0xf]
      %v343 = vld [vmem:[%s219 + $0x3c] sm:$0xf]
      %v344 = vld [vmem:[%s219 + $0x40] sm:$0xf]
      %v345 = vld [vmem:[%s219 + $0x44] sm:$0xf]
      %v346 = vld [vmem:[%s219 + $0x48] sm:$0xf]
      %v347 = vld [vmem:[%s219 + $0x4c] sm:$0xf]
      %v348 = vld [vmem:[%s219 + $0x50] sm:$0xf]
      %v349 = vld [vmem:[%s219 + $0x54] sm:$0xf]
      %v350 = vld [vmem:[%s219 + $0x58] sm:$0xf]
      %v351 = vld [vmem:[%s219 + $0x5c] sm:$0xf]
      %v352 = vld [vmem:[%s219 + $0x60] sm:$0xf]
      %v353 = vld [vmem:[%s219 + $0x64] sm:$0xf]
      %v354 = vld [vmem:[%s219 + $0x68] sm:$0xf]
      %v355 = vld [vmem:[%s219 + $0x6c] sm:$0xf]
      %v356 = vld [vmem:[%s219 + $0x70] sm:$0xf]
      %v357 = vld [vmem:[%s219 + $0x74] sm:$0xf]
      %v358 = vld [vmem:[%s219 + $0x78] sm:$0xf]
      %v359 = vld [vmem:[%s219 + $0x7c] sm:$0xf]
      %v392 = vunpack.c.l.b16 %v296
      %v393 = vunpack.c.h.b16 %v296
      %v394 = vunpack.c.l.b16 %v297
      %v395 = vunpack.c.h.b16 %v297
      %v396 = vunpack.c.l.b16 %v298
      %v397 = vunpack.c.h.b16 %v298
      %v398 = vunpack.c.l.b16 %v299
      %v399 = vunpack.c.h.b16 %v299
      %v400 = vunpack.c.l.b16 %v300
      %v401 = vunpack.c.h.b16 %v300
      %v402 = vunpack.c.l.b16 %v301
      %v403 = vunpack.c.h.b16 %v301
      %v404 = vunpack.c.l.b16 %v302
      %v405 = vunpack.c.h.b16 %v302
      %v406 = vunpack.c.l.b16 %v303
      %v407 = vunpack.c.h.b16 %v303
      %v408 = vunpack.c.l.b16 %v304
      %v409 = vunpack.c.h.b16 %v304
      %v410 = vunpack.c.l.b16 %v305
      %v411 = vunpack.c.h.b16 %v305
      %v412 = vunpack.c.l.b16 %v306
      %v413 = vunpack.c.h.b16 %v306
      %v414 = vunpack.c.l.b16 %v307
      %v415 = vunpack.c.h.b16 %v307
      %v416 = vunpack.c.l.b16 %v308
      %v417 = vunpack.c.h.b16 %v308
      %v418 = vunpack.c.l.b16 %v309
      %v419 = vunpack.c.h.b16 %v309
      %v420 = vunpack.c.l.b16 %v310
      %v421 = vunpack.c.h.b16 %v310
      %v422 = vunpack.c.l.b16 %v311
      %v423 = vunpack.c.h.b16 %v311
      %v424 = vunpack.c.l.b16 %v312
      %v425 = vunpack.c.h.b16 %v312
      %v426 = vunpack.c.l.b16 %v313
      %v427 = vunpack.c.h.b16 %v313
      %v428 = vunpack.c.l.b16 %v314
      %v429 = vunpack.c.h.b16 %v314
      %v430 = vunpack.c.l.b16 %v315
      %v431 = vunpack.c.h.b16 %v315
      %v432 = vunpack.c.l.b16 %v316
      %v433 = vunpack.c.h.b16 %v316
      %v434 = vunpack.c.l.b16 %v317
      %v435 = vunpack.c.h.b16 %v317
      %v436 = vunpack.c.l.b16 %v318
      %v437 = vunpack.c.h.b16 %v318
      %v438 = vunpack.c.l.b16 %v319
      %v439 = vunpack.c.h.b16 %v319
      %v440 = vunpack.c.l.b16 %v320
      %v441 = vunpack.c.h.b16 %v320
      %v442 = vunpack.c.l.b16 %v321
      %v443 = vunpack.c.h.b16 %v321
      %v444 = vunpack.c.l.b16 %v322
      %v445 = vunpack.c.h.b16 %v322
      %v446 = vunpack.c.l.b16 %v323
      %v447 = vunpack.c.h.b16 %v323
      %v448 = vunpack.c.l.b16 %v324
      %v449 = vunpack.c.h.b16 %v324
      %v450 = vunpack.c.l.b16 %v325
      %v451 = vunpack.c.h.b16 %v325
      %v452 = vunpack.c.l.b16 %v326
      %v453 = vunpack.c.h.b16 %v326
      %v454 = vunpack.c.l.b16 %v327
      %v455 = vunpack.c.h.b16 %v327
      %v456 = vpack.c.b16 %v394, %v392
      %v457 = vpack.c.b16 %v395, %v393
      %v458 = vpack.c.b16 %v398, %v396
      %v459 = vpack.c.b16 %v399, %v397
      %v460 = vpack.c.b16 %v402, %v400
      %v461 = vpack.c.b16 %v403, %v401
      %v462 = vpack.c.b16 %v406, %v404
      %v463 = vpack.c.b16 %v407, %v405
      %v464 = vpack.c.b16 %v410, %v408
      %v465 = vpack.c.b16 %v411, %v409
      %v466 = vpack.c.b16 %v414, %v412
      %v467 = vpack.c.b16 %v415, %v413
      %v468 = vpack.c.b16 %v418, %v416
      %v469 = vpack.c.b16 %v419, %v417
      %v470 = vpack.c.b16 %v422, %v420
      %v471 = vpack.c.b16 %v423, %v421
      %v472 = vpack.c.b16 %v426, %v424
      %v473 = vpack.c.b16 %v427, %v425
      %v474 = vpack.c.b16 %v430, %v428
      %v475 = vpack.c.b16 %v431, %v429
      %v476 = vpack.c.b16 %v434, %v432
      %v477 = vpack.c.b16 %v435, %v433
      %v478 = vpack.c.b16 %v438, %v436
      %v479 = vpack.c.b16 %v439, %v437
      %v480 = vpack.c.b16 %v442, %v440
      %v481 = vpack.c.b16 %v443, %v441
      %v482 = vpack.c.b16 %v446, %v444
      %v483 = vpack.c.b16 %v447, %v445
      %v484 = vpack.c.b16 %v450, %v448
      %v485 = vpack.c.b16 %v451, %v449
      %v486 = vpack.c.b16 %v454, %v452
      %v487 = vpack.c.b16 %v455, %v453
      %v552 = vunpack.c.l.b16 %v328
      %v553 = vunpack.c.l.b16 %v329
      %v554 = vunpack.c.l.b16 %v330
      %v555 = vunpack.c.l.b16 %v331
      %v556 = vunpack.c.l.b16 %v332
      %v557 = vunpack.c.l.b16 %v333
      %v558 = vunpack.c.l.b16 %v334
      %v559 = vunpack.c.l.b16 %v335
      %v560 = vunpack.c.l.b16 %v336
      %v561 = vunpack.c.l.b16 %v337
      %v562 = vunpack.c.l.b16 %v338
      %v563 = vunpack.c.l.b16 %v339
      %v564 = vunpack.c.l.b16 %v340
      %v565 = vunpack.c.l.b16 %v341
      %v566 = vunpack.c.l.b16 %v342
      %v567 = vunpack.c.l.b16 %v343
      %v568 = vunpack.c.l.b16 %v344
      %v569 = vunpack.c.l.b16 %v345
      %v570 = vunpack.c.l.b16 %v346
      %v571 = vunpack.c.l.b16 %v347
      %v572 = vunpack.c.l.b16 %v348
      %v573 = vunpack.c.l.b16 %v349
      %v574 = vunpack.c.l.b16 %v350
      %v575 = vunpack.c.l.b16 %v351
      %v576 = vunpack.c.l.b16 %v352
      %v577 = vunpack.c.l.b16 %v353
      %v578 = vunpack.c.l.b16 %v354
      %v579 = vunpack.c.l.b16 %v355
      %v580 = vunpack.c.l.b16 %v356
      %v581 = vunpack.c.l.b16 %v357
      %v582 = vunpack.c.l.b16 %v358
      %v583 = vunpack.c.l.b16 %v359
      %v584 = vpack.c.b16 %v553, %v552
      %v585 = vpack.c.b16 %v555, %v554
      %v586 = vpack.c.b16 %v557, %v556
      %v587 = vpack.c.b16 %v559, %v558
      %v588 = vpack.c.b16 %v561, %v560
      %v589 = vpack.c.b16 %v563, %v562
      %v590 = vpack.c.b16 %v565, %v564
      %v591 = vpack.c.b16 %v567, %v566
      %v592 = vpack.c.b16 %v569, %v568
      %v593 = vpack.c.b16 %v571, %v570
      %v594 = vpack.c.b16 %v573, %v572
      %v595 = vpack.c.b16 %v575, %v574
      %v596 = vpack.c.b16 %v577, %v576
      %v597 = vpack.c.b16 %v579, %v578
      %v598 = vpack.c.b16 %v581, %v580
      %v599 = vpack.c.b16 %v583, %v582
      %616 = vmatprep.subr.bf16.mxu0 0
      %617 = vmatpush1.bf16.msra.mxu0 %v584
      %618 = vmatprep.subr.bf16.mxu0 0
      %619 = vmatpush1.bf16.msra.mxu0 %v585
      %620 = vmatprep.subr.bf16.mxu0 0
      %621 = vmatpush1.bf16.msra.mxu0 %v586
      %622 = vmatprep.subr.bf16.mxu0 0
      %623 = vmatpush1.bf16.msra.mxu0 %v587
      %624 = vmatprep.subr.bf16.mxu0 0
      %625 = vmatpush1.bf16.msra.mxu0 %v588
      %626 = vmatprep.subr.bf16.mxu0 0
      %627 = vmatpush1.bf16.msra.mxu0 %v589
      %628 = vmatprep.subr.bf16.mxu0 0
      %629 = vmatpush1.bf16.msra.mxu0 %v590
      %630 = vmatprep.subr.bf16.mxu0 0
      %631 = vmatpush1.bf16.msra.mxu0 %v591
      %632 = vmatprep.subr.bf16.mxu0 0
      %633 = vmatpush1.bf16.msra.mxu0 %v592
      %634 = vmatprep.subr.bf16.mxu0 0
      %635 = vmatpush1.bf16.msra.mxu0 %v593
      %636 = vmatprep.subr.bf16.mxu0 0
      %637 = vmatpush1.bf16.msra.mxu0 %v594
      %638 = vmatprep.subr.bf16.mxu0 0
      %639 = vmatpush1.bf16.msra.mxu0 %v595
      %640 = vmatprep.subr.bf16.mxu0 0
      %641 = vmatpush1.bf16.msra.mxu0 %v596
      %642 = vmatprep.subr.bf16.mxu0 0
      %643 = vmatpush1.bf16.msra.mxu0 %v597
      %644 = vmatprep.subr.bf16.mxu0 0
      %645 = vmatpush1.bf16.msra.mxu0 %v598
      %646 = vmatprep.subr.bf16.mxu0 0
      %647 = vmatpush1.bf16.msra.mxu0 %v599
      %648 = vmatprep.mubr.bf16.mxu0 %v457
      %649 = vmatmul.mubr.bf16.gmra.mrb[0].mxu0 %v456
      %v650 = vpop.f32.mrb[0].mxu0
      %v651 = vadd.f32 0.0, %v650
      %v652 = vpop.f32.mrb[0].mxu0
      %v653 = vpop.f32.mrb[0].mxu0
      %v654 = vadd.f32 0.0, %v653
      %v655 = vpop.f32.mrb[0].mxu0
      %656 = vmatprep.mubr.bf16.mxu0 %v459
      %657 = vmatmul.mubr.bf16.gmra.mrb[0].mxu0 %v458
      %v658 = vpop.f32.mrb[0].mxu0
      %v659 = vadd.f32 0.0, %v658
      %v660 = vpop.f32.mrb[0].mxu0
      %v661 = vpop.f32.mrb[0].mxu0
      %v662 = vadd.f32 0.0, %v661
      %v663 = vpop.f32.mrb[0].mxu0
      %664 = vmatprep.mubr.bf16.mxu0 %v461
      %665 = vmatmul.mubr.bf16.gmra.mrb[0].mxu0 %v460
      %v666 = vpop.f32.mrb[0].mxu0
      %v667 = vadd.f32 0.0, %v666
      %v668 = vpop.f32.mrb[0].mxu0
      %v669 = vpop.f32.mrb[0].mxu0
      %v670 = vadd.f32 0.0, %v669
      %v671 = vpop.f32.mrb[0].mxu0
      %672 = vmatprep.mubr.bf16.mxu0 %v463
      %673 = vmatmul.mubr.bf16.gmra.mrb[0].mxu0 %v462
      %v674 = vpop.f32.mrb[0].mxu0
      %v675 = vadd.f32 0.0, %v674
      %v676 = vpop.f32.mrb[0].mxu0
      %v677 = vpop.f32.mrb[0].mxu0
      %v678 = vadd.f32 0.0, %v677
      %v679 = vpop.f32.mrb[0].mxu0
      %680 = vmatprep.mubr.bf16.mxu0 %v465
      %681 = vmatmul.mubr.bf16.gmra.mrb[0].mxu0 %v464
      %v682 = vpop.f32.mrb[0].mxu0
      %v683 = vadd.f32 0.0, %v682
      %v684 = vpop.f32.mrb[0].mxu0
      %v685 = vpop.f32.mrb[0].mxu0
      %v686 = vadd.f32 0.0, %v685
      %v687 = vpop.f32.mrb[0].mxu0
      %688 = vmatprep.mubr.bf16.mxu0 %v467
      %689 = vmatmul.mubr.bf16.gmra.mrb[0].mxu0 %v466
      %v690 = vpop.f32.mrb[0].mxu0
      %v691 = vadd.f32 0.0, %v690
      %v692 = vpop.f32.mrb[0].mxu0
      %v693 = vpop.f32.mrb[0].mxu0
      %v694 = vadd.f32 0.0, %v693
      %v695 = vpop.f32.mrb[0].mxu0
      %696 = vmatprep.mubr.bf16.mxu0 %v469
      %697 = vmatmul.mubr.bf16.gmra.mrb[0].mxu0 %v468
      %v698 = vpop.f32.mrb[0].mxu0
      %v699 = vadd.f32 0.0, %v698
      %v700 = vpop.f32.mrb[0].mxu0
      %v701 = vpop.f32.mrb[0].mxu0
      %v702 = vadd.f32 0.0, %v701
      %v703 = vpop.f32.mrb[0].mxu0
      %704 = vmatprep.mubr.bf16.mxu0 %v471
      %705 = vmatmul.mubr.bf16.gmra.mrb[0].mxu0 %v470
      %v706 = vpop.f32.mrb[0].mxu0
      %v707 = vadd.f32 0.0, %v706
      %v708 = vpop.f32.mrb[0].mxu0
      %v709 = vpop.f32.mrb[0].mxu0
      %v710 = vadd.f32 0.0, %v709
      %v711 = vpop.f32.mrb[0].mxu0
      %712 = vmatprep.mubr.bf16.mxu0 %v473
      %713 = vmatmul.mubr.bf16.gmra.mrb[0].mxu0 %v472
      %v714 = vpop.f32.mrb[0].mxu0
      %v715 = vadd.f32 0.0, %v714
      %v716 = vpop.f32.mrb[0].mxu0
      %v717 = vpop.f32.mrb[0].mxu0
      %v718 = vadd.f32 0.0, %v717
      %v719 = vpop.f32.mrb[0].mxu0
      %720 = vmatprep.mubr.bf16.mxu0 %v475
      %721 = vmatmul.mubr.bf16.gmra.mrb[0].mxu0 %v474
      %v722 = vpop.f32.mrb[0].mxu0
      %v723 = vadd.f32 0.0, %v722
      %v724 = vpop.f32.mrb[0].mxu0
      %v725 = vpop.f32.mrb[0].mxu0
      %v726 = vadd.f32 0.0, %v725
      %v727 = vpop.f32.mrb[0].mxu0
      %728 = vmatprep.mubr.bf16.mxu0 %v477
      %729 = vmatmul.mubr.bf16.gmra.mrb[0].mxu0 %v476
      %v730 = vpop.f32.mrb[0].mxu0
      %v731 = vadd.f32 0.0, %v730
      %v732 = vpop.f32.mrb[0].mxu0
      %v733 = vpop.f32.mrb[0].mxu0
      %v734 = vadd.f32 0.0, %v733
      %v735 = vpop.f32.mrb[0].mxu0
      %736 = vmatprep.mubr.bf16.mxu0 %v479
      %737 = vmatmul.mubr.bf16.gmra.mrb[0].mxu0 %v478
      %v738 = vpop.f32.mrb[0].mxu0
      %v739 = vadd.f32 0.0, %v738
      %v740 = vpop.f32.mrb[0].mxu0
      %v741 = vpop.f32.mrb[0].mxu0
      %v742 = vadd.f32 0.0, %v741
      %v743 = vpop.f32.mrb[0].mxu0
      %744 = vmatprep.mubr.bf16.mxu0 %v481
      %745 = vmatmul.mubr.bf16.gmra.mrb[0].mxu0 %v480
      %v746 = vpop.f32.mrb[0].mxu0
      %v747 = vadd.f32 0.0, %v746
      %v748 = vpop.f32.mrb[0].mxu0
      %v749 = vpop.f32.mrb[0].mxu0
      %v750 = vadd.f32 0.0, %v749
      %v751 = vpop.f32.mrb[0].mxu0
      %752 = vmatprep.mubr.bf16.mxu0 %v483
      %753 = vmatmul.mubr.bf16.gmra.mrb[0].mxu0 %v482
      %v754 = vpop.f32.mrb[0].mxu0
      %v755 = vadd.f32 0.0, %v754
      %v756 = vpop.f32.mrb[0].mxu0
      %v757 = vpop.f32.mrb[0].mxu0
      %v758 = vadd.f32 0.0, %v757
      %v759 = vpop.f32.mrb[0].mxu0
      %760 = vmatprep.mubr.bf16.mxu0 %v485
      %761 = vmatmul.mubr.bf16.gmra.mrb[0].mxu0 %v484
      %v762 = vpop.f32.mrb[0].mxu0
      %v763 = vadd.f32 0.0, %v762
      %v764 = vpop.f32.mrb[0].mxu0
      %v765 = vpop.f32.mrb[0].mxu0
      %v766 = vadd.f32 0.0, %v765
      %v767 = vpop.f32.mrb[0].mxu0
      %768 = vmatprep.mubr.bf16.mxu0 %v487
      %769 = vmatmul.mubr.bf16.gmra.mrb[0].mxu0 %v486
      %v770 = vpop.f32.mrb[0].mxu0
      %v771 = vadd.f32 0.0, %v770
      %v772 = vpop.f32.mrb[0].mxu0
      %v773 = vpop.f32.mrb[0].mxu0
      %v774 = vadd.f32 0.0, %v773
      %v775 = vpop.f32.mrb[0].mxu0
      %776 = vdwg.mxu0
      %v777 = vadd.f32 %v264, %v651
      %v778 = vadd.f32 %v265, %v654
      %v779 = vadd.f32 %v266, %v659
      %v780 = vadd.f32 %v267, %v662
      %v781 = vadd.f32 %v268, %v667
      %v782 = vadd.f32 %v269, %v670
      %v783 = vadd.f32 %v270, %v675
      %v784 = vadd.f32 %v271, %v678
      %v785 = vadd.f32 %v272, %v683
      %v786 = vadd.f32 %v273, %v686
      %v787 = vadd.f32 %v274, %v691
      %v788 = vadd.f32 %v275, %v694
      %v789 = vadd.f32 %v276, %v699
      %v790 = vadd.f32 %v277, %v702
      %v791 = vadd.f32 %v278, %v707
      %v792 = vadd.f32 %v279, %v710
      %v793 = vadd.f32 %v280, %v715
      %v794 = vadd.f32 %v281, %v718
      %v795 = vadd.f32 %v282, %v723
      %v796 = vadd.f32 %v283, %v726
      %v797 = vadd.f32 %v284, %v731
      %v798 = vadd.f32 %v285, %v734
      %v799 = vadd.f32 %v286, %v739
      %v800 = vadd.f32 %v287, %v742
      %v801 = vadd.f32 %v288, %v747
      %v802 = vadd.f32 %v289, %v750
      %v803 = vadd.f32 %v290, %v755
      %v804 = vadd.f32 %v291, %v758
      %v805 = vadd.f32 %v292, %v763
      %v806 = vadd.f32 %v293, %v766
      %v807 = vadd.f32 %v294, %v771
      %v808 = vadd.f32 %v295, %v774
      %809 = vst [vmem:[#allocation2] sm:$0xff] %v777
      %810 = vst [vmem:[#allocation2 + $0x8] sm:$0xff] %v778
      %811 = vst [vmem:[#allocation2 + $0x10] sm:$0xff] %v779
      %812 = vst [vmem:[#allocation2 + $0x18] sm:$0xff] %v780
      %813 = vst [vmem:[#allocation2 + $0x20] sm:$0xff] %v781
      %814 = vst [vmem:[#allocation2 + $0x28] sm:$0xff] %v782
      %815 = vst [vmem:[#allocation2 + $0x30] sm:$0xff] %v783
      %816 = vst [vmem:[#allocation2 + $0x38] sm:$0xff] %v784
      %817 = vst [vmem:[#allocation2 + $0x40] sm:$0xff] %v785
      %818 = vst [vmem:[#allocation2 + $0x48] sm:$0xff] %v786
      %819 = vst [vmem:[#allocation2 + $0x50] sm:$0xff] %v787
      %820 = vst [vmem:[#allocation2 + $0x58] sm:$0xff] %v788
      %821 = vst [vmem:[#allocation2 + $0x60] sm:$0xff] %v789
      %822 = vst [vmem:[#allocation2 + $0x68] sm:$0xff] %v790
      %823 = vst [vmem:[#allocation2 + $0x70] sm:$0xff] %v791
      %824 = vst [vmem:[#allocation2 + $0x78] sm:$0xff] %v792
      %825 = vst [vmem:[#allocation2 + $0x80] sm:$0xff] %v793
      %826 = vst [vmem:[#allocation2 + $0x88] sm:$0xff] %v794
      %827 = vst [vmem:[#allocation2 + $0x90] sm:$0xff] %v795
      %828 = vst [vmem:[#allocation2 + $0x98] sm:$0xff] %v796
      %829 = vst [vmem:[#allocation2 + $0xa0] sm:$0xff] %v797
      %830 = vst [vmem:[#allocation2 + $0xa8] sm:$0xff] %v798
      %831 = vst [vmem:[#allocation2 + $0xb0] sm:$0xff] %v799
      %832 = vst [vmem:[#allocation2 + $0xb8] sm:$0xff] %v800
      %833 = vst [vmem:[#allocation2 + $0xc0] sm:$0xff] %v801
      %834 = vst [vmem:[#allocation2 + $0xc8] sm:$0xff] %v802
      %835 = vst [vmem:[#allocation2 + $0xd0] sm:$0xff] %v803
      %836 = vst [vmem:[#allocation2 + $0xd8] sm:$0xff] %v804
      %837 = vst [vmem:[#allocation2 + $0xe0] sm:$0xff] %v805
      %838 = vst [vmem:[#allocation2 + $0xe8] sm:$0xff] %v806
      %839 = vst [vmem:[#allocation2 + $0xf0] sm:$0xff] %v807
      %840 = vst [vmem:[#allocation2 + $0xf8] sm:$0xff] %v808
      // Predicated region
      $region37: #{neural_network_forward.4} parent=31 // pred_check
        %p841 = pneg %p228
      $region38: #{neural_network_forward.4} parent=31 // pred_check_branch
        %843 = sbr.rel (%p841) target = $region40
      $region39: #{neural_network_forward.4} parent=31 // pred_region
        %v844 = vld [vmem:[#allocation2] sm:$0xff]
        %v845 = vld [vmem:[#allocation2 + $0x8] sm:$0xff]
        %v846 = vld [vmem:[#allocation2 + $0x10] sm:$0xff]
        %v847 = vld [vmem:[#allocation2 + $0x18] sm:$0xff]
        %v848 = vld [vmem:[#allocation2 + $0x20] sm:$0xff]
        %v849 = vld [vmem:[#allocation2 + $0x28] sm:$0xff]
        %v850 = vld [vmem:[#allocation2 + $0x30] sm:$0xff]
        %v851 = vld [vmem:[#allocation2 + $0x38] sm:$0xff]
        %v852 = vld [vmem:[#allocation2 + $0x40] sm:$0xff]
        %v853 = vld [vmem:[#allocation2 + $0x48] sm:$0xff]
        %v854 = vld [vmem:[#allocation2 + $0x50] sm:$0xff]
        %v855 = vld [vmem:[#allocation2 + $0x58] sm:$0xff]
        %v856 = vld [vmem:[#allocation2 + $0x60] sm:$0xff]
        %v857 = vld [vmem:[#allocation2 + $0x68] sm:$0xff]
        %v858 = vld [vmem:[#allocation2 + $0x70] sm:$0xff]
        %v859 = vld [vmem:[#allocation2 + $0x78] sm:$0xff]
        %v860 = vld [vmem:[#allocation2 + $0x80] sm:$0xff]
        %v861 = vld [vmem:[#allocation2 + $0x88] sm:$0xff]
        %v862 = vld [vmem:[#allocation2 + $0x90] sm:$0xff]
        %v863 = vld [vmem:[#allocation2 + $0x98] sm:$0xff]
        %v864 = vld [vmem:[#allocation2 + $0xa0] sm:$0xff]
        %v865 = vld [vmem:[#allocation2 + $0xa8] sm:$0xff]
        %v866 = vld [vmem:[#allocation2 + $0xb0] sm:$0xff]
        %v867 = vld [vmem:[#allocation2 + $0xb8] sm:$0xff]
        %v868 = vld [vmem:[#allocation2 + $0xc0] sm:$0xff]
        %v869 = vld [vmem:[#allocation2 + $0xc8] sm:$0xff]
        %v870 = vld [vmem:[#allocation2 + $0xd0] sm:$0xff]
        %v871 = vld [vmem:[#allocation2 + $0xd8] sm:$0xff]
        %v872 = vld [vmem:[#allocation2 + $0xe0] sm:$0xff]
        %v873 = vld [vmem:[#allocation2 + $0xe8] sm:$0xff]
        %v874 = vld [vmem:[#allocation2 + $0xf0] sm:$0xff]
        %v875 = vld [vmem:[#allocation2 + $0xf8] sm:$0xff]
        %v876 = vld [vmem:[%s2] sm:$0x1]
        %v878 = vlaneseq
        %v879 = vshrl.u32 %v878, 7
        %v880 = vsub.s32 0, %v879
        %v881 = vrot.slane %v876, %v880
        %v883 = vadd.f32 %v844, %v881
        %v884 = vadd.f32 %v845, %v881
        %v885 = vadd.f32 %v846, %v881
        %v886 = vadd.f32 %v847, %v881
        %v887 = vadd.f32 %v848, %v881
        %v888 = vadd.f32 %v849, %v881
        %v889 = vadd.f32 %v850, %v881
        %v890 = vadd.f32 %v851, %v881
        %v891 = vadd.f32 %v852, %v881
        %v892 = vadd.f32 %v853, %v881
        %v893 = vadd.f32 %v854, %v881
        %v894 = vadd.f32 %v855, %v881
        %v895 = vadd.f32 %v856, %v881
        %v896 = vadd.f32 %v857, %v881
        %v897 = vadd.f32 %v858, %v881
        %v898 = vadd.f32 %v859, %v881
        %v899 = vadd.f32 %v860, %v881
        %v900 = vadd.f32 %v861, %v881
        %v901 = vadd.f32 %v862, %v881
        %v902 = vadd.f32 %v863, %v881
        %v903 = vadd.f32 %v864, %v881
        %v904 = vadd.f32 %v865, %v881
        %v905 = vadd.f32 %v866, %v881
        %v906 = vadd.f32 %v867, %v881
        %v907 = vadd.f32 %v868, %v881
        %v908 = vadd.f32 %v869, %v881
        %v909 = vadd.f32 %v870, %v881
        %v910 = vadd.f32 %v871, %v881
        %v911 = vadd.f32 %v872, %v881
        %v912 = vadd.f32 %v873, %v881
        %v913 = vadd.f32 %v874, %v881
        %v914 = vadd.f32 %v875, %v881
        %v915 = vmax.f32 %v883, 0.0
        %v916 = vmax.f32 %v884, 0.0
        %v917 = vmax.f32 %v885, 0.0
        %v918 = vmax.f32 %v886, 0.0
        %v919 = vmax.f32 %v887, 0.0
        %v920 = vmax.f32 %v888, 0.0
        %v921 = vmax.f32 %v889, 0.0
        %v922 = vmax.f32 %v890, 0.0
        %v923 = vmax.f32 %v891, 0.0
        %v924 = vmax.f32 %v892, 0.0
        %v925 = vmax.f32 %v893, 0.0
        %v926 = vmax.f32 %v894, 0.0
        %v927 = vmax.f32 %v895, 0.0
        %v928 = vmax.f32 %v896, 0.0
        %v929 = vmax.f32 %v897, 0.0
        %v930 = vmax.f32 %v898, 0.0
        %v931 = vmax.f32 %v899, 0.0
        %v932 = vmax.f32 %v900, 0.0
        %v933 = vmax.f32 %v901, 0.0
        %v934 = vmax.f32 %v902, 0.0
        %v935 = vmax.f32 %v903, 0.0
        %v936 = vmax.f32 %v904, 0.0
        %v937 = vmax.f32 %v905, 0.0
        %v938 = vmax.f32 %v906, 0.0
        %v939 = vmax.f32 %v907, 0.0
        %v940 = vmax.f32 %v908, 0.0
        %v941 = vmax.f32 %v909, 0.0
        %v942 = vmax.f32 %v910, 0.0
        %v943 = vmax.f32 %v911, 0.0
        %v944 = vmax.f32 %v912, 0.0
        %v945 = vmax.f32 %v913, 0.0
        %v946 = vmax.f32 %v914, 0.0
        %v947 = vpack.c.bf16 %v916, %v915
        %v948 = vpack.c.bf16 %v918, %v917
        %v949 = vpack.c.bf16 %v920, %v919
        %v950 = vpack.c.bf16 %v922, %v921
        %v951 = vpack.c.bf16 %v924, %v923
        %v952 = vpack.c.bf16 %v926, %v925
        %v953 = vpack.c.bf16 %v928, %v927
        %v954 = vpack.c.bf16 %v930, %v929
        %v955 = vpack.c.bf16 %v932, %v931
        %v956 = vpack.c.bf16 %v934, %v933
        %v957 = vpack.c.bf16 %v936, %v935
        %v958 = vpack.c.bf16 %v938, %v937
        %v959 = vpack.c.bf16 %v940, %v939
        %v960 = vpack.c.bf16 %v942, %v941
        %v961 = vpack.c.bf16 %v944, %v943
        %v962 = vpack.c.bf16 %v946, %v945
        %v979 = vunpack.c.l.b16 %v947
        %v980 = vunpack.c.h.b16 %v947
        %v981 = vunpack.c.l.b16 %v948
        %v982 = vunpack.c.h.b16 %v948
        %v983 = vunpack.c.l.b16 %v949
        %v984 = vunpack.c.h.b16 %v949
        %v985 = vunpack.c.l.b16 %v950
        %v986 = vunpack.c.h.b16 %v950
        %v987 = vunpack.c.l.b16 %v951
        %v988 = vunpack.c.h.b16 %v951
        %v989 = vunpack.c.l.b16 %v952
        %v990 = vunpack.c.h.b16 %v952
        %v991 = vunpack.c.l.b16 %v953
        %v992 = vunpack.c.h.b16 %v953
        %v993 = vunpack.c.l.b16 %v954
        %v994 = vunpack.c.h.b16 %v954
        %v995 = vunpack.c.l.b16 %v955
        %v996 = vunpack.c.h.b16 %v955
        %v997 = vunpack.c.l.b16 %v956
        %v998 = vunpack.c.h.b16 %v956
        %v999 = vunpack.c.l.b16 %v957
        %v1000 = vunpack.c.h.b16 %v957
        %v1001 = vunpack.c.l.b16 %v958
        %v1002 = vunpack.c.h.b16 %v958
        %v1003 = vunpack.c.l.b16 %v959
        %v1004 = vunpack.c.h.b16 %v959
        %v1005 = vunpack.c.l.b16 %v960
        %v1006 = vunpack.c.h.b16 %v960
        %v1007 = vunpack.c.l.b16 %v961
        %v1008 = vunpack.c.h.b16 %v961
        %v1009 = vunpack.c.l.b16 %v962
        %v1010 = vunpack.c.h.b16 %v962
        %v1011 = vpack.c.b16 %v979, %v979
        %v1012 = vpack.c.b16 %v980, %v980
        %v1013 = vpack.c.b16 %v981, %v981
        %v1014 = vpack.c.b16 %v982, %v982
        %v1015 = vpack.c.b16 %v983, %v983
        %v1016 = vpack.c.b16 %v984, %v984
        %v1017 = vpack.c.b16 %v985, %v985
        %v1018 = vpack.c.b16 %v986, %v986
        %v1019 = vpack.c.b16 %v987, %v987
        %v1020 = vpack.c.b16 %v988, %v988
        %v1021 = vpack.c.b16 %v989, %v989
        %v1022 = vpack.c.b16 %v990, %v990
        %v1023 = vpack.c.b16 %v991, %v991
        %v1024 = vpack.c.b16 %v992, %v992
        %v1025 = vpack.c.b16 %v993, %v993
        %v1026 = vpack.c.b16 %v994, %v994
        %v1027 = vpack.c.b16 %v995, %v995
        %v1028 = vpack.c.b16 %v996, %v996
        %v1029 = vpack.c.b16 %v997, %v997
        %v1030 = vpack.c.b16 %v998, %v998
        %v1031 = vpack.c.b16 %v999, %v999
        %v1032 = vpack.c.b16 %v1000, %v1000
        %v1033 = vpack.c.b16 %v1001, %v1001
        %v1034 = vpack.c.b16 %v1002, %v1002
        %v1035 = vpack.c.b16 %v1003, %v1003
        %v1036 = vpack.c.b16 %v1004, %v1004
        %v1037 = vpack.c.b16 %v1005, %v1005
        %v1038 = vpack.c.b16 %v1006, %v1006
        %v1039 = vpack.c.b16 %v1007, %v1007
        %v1040 = vpack.c.b16 %v1008, %v1008
        %v1041 = vpack.c.b16 %v1009, %v1009
        %v1042 = vpack.c.b16 %v1010, %v1010
        %1075 = vst [vmem:[%s225] sm:$0xf] %v1011
        %1076 = vst [vmem:[%s225 + $0x4] sm:$0xf] %v1012
        %1077 = vst [vmem:[%s225 + $0x8] sm:$0xf] %v1013
        %1078 = vst [vmem:[%s225 + $0xc] sm:$0xf] %v1014
        %1079 = vst [vmem:[%s225 + $0x10] sm:$0xf] %v1015
        %1080 = vst [vmem:[%s225 + $0x14] sm:$0xf] %v1016
        %1081 = vst [vmem:[%s225 + $0x18] sm:$0xf] %v1017
        %1082 = vst [vmem:[%s225 + $0x1c] sm:$0xf] %v1018
        %1083 = vst [vmem:[%s225 + $0x20] sm:$0xf] %v1019
        %1084 = vst [vmem:[%s225 + $0x24] sm:$0xf] %v1020
        %1085 = vst [vmem:[%s225 + $0x28] sm:$0xf] %v1021
        %1086 = vst [vmem:[%s225 + $0x2c] sm:$0xf] %v1022
        %1087 = vst [vmem:[%s225 + $0x30] sm:$0xf] %v1023
        %1088 = vst [vmem:[%s225 + $0x34] sm:$0xf] %v1024
        %1089 = vst [vmem:[%s225 + $0x38] sm:$0xf] %v1025
        %1090 = vst [vmem:[%s225 + $0x3c] sm:$0xf] %v1026
        %1091 = vst [vmem:[%s225 + $0x40] sm:$0xf] %v1027
        %1092 = vst [vmem:[%s225 + $0x44] sm:$0xf] %v1028
        %1093 = vst [vmem:[%s225 + $0x48] sm:$0xf] %v1029
        %1094 = vst [vmem:[%s225 + $0x4c] sm:$0xf] %v1030
        %1095 = vst [vmem:[%s225 + $0x50] sm:$0xf] %v1031
        %1096 = vst [vmem:[%s225 + $0x54] sm:$0xf] %v1032
        %1097 = vst [vmem:[%s225 + $0x58] sm:$0xf] %v1033
        %1098 = vst [vmem:[%s225 + $0x5c] sm:$0xf] %v1034
        %1099 = vst [vmem:[%s225 + $0x60] sm:$0xf] %v1035
        %1100 = vst [vmem:[%s225 + $0x64] sm:$0xf] %v1036
        %1101 = vst [vmem:[%s225 + $0x68] sm:$0xf] %v1037
        %1102 = vst [vmem:[%s225 + $0x6c] sm:$0xf] %v1038
        %1103 = vst [vmem:[%s225 + $0x70] sm:$0xf] %v1039
        %1104 = vst [vmem:[%s225 + $0x74] sm:$0xf] %v1040
        %1105 = vst [vmem:[%s225 + $0x78] sm:$0xf] %v1041
        %1106 = vst [vmem:[%s225 + $0x7c] sm:$0xf] %v1042
      $region40: #{neural_network_forward.4} parent=31 // pred_fallthru
        _
      %s1107 = smul.u32 32, %s18
      %p1108 = scmp.lt.s32.totalorder %s1107, 63
      %s1109 = scalar_select %p1108, %s1107, 63
      %s1110 = smul.addr %s1109, 4
      %s1111 = scalar_lea.vmem %s3, %s1110
      // Predicated region
      $region41: #{neural_network_forward.4} parent=31 // pred_check
        %p1112 = pneg %p119
      $region42: #{neural_network_forward.4} parent=31 // pred_check_branch
        %1114 = sbr.rel (%p1112) target = $region44
      $region43: #{neural_network_forward.4} parent=31 // pred_region
        %s1115 = smul.u32 32, %s18
      $region44: #{neural_network_forward.4} parent=31 // pred_fallthru
        _
    $region32: #{neural_network_forward.4} parent=5 // pred_fallthru
      _
    %p1116 = scmp.le.s32.totalorder 2, %s9
    // Predicated region
    $region45: #{neural_network_forward.4} parent=5 // pred_check
      %p1117 = pneg %p1116
    $region46: #{neural_network_forward.4} parent=5 // pred_check_branch
      %1119 = sbr.rel (%p1117) target = $region48
    $region47: #{neural_network_forward.4} parent=5 // pred_region
      %s1120 = ssub.s32 %s9, 2
      // Predicated region
      $region49: #{neural_network_forward.4} parent=47 // pred_check
        %p1121 = pneg %p125
      $region50: #{neural_network_forward.4} parent=47 // pred_check_branch
        %1123 = sbr.rel (%p1121) target = $region52
      $region51: #{neural_network_forward.4} parent=47 // pred_region
        %s1124 = smul.u32 32, %s20
        %p1125 = scmp.lt.s32.totalorder %s1124, 63
        %s1126 = scalar_select %p1125, %s1124, 63
        %s1127 = smul.addr %s1126, 4
        %s1128 = scalar_lea.vmem %s3, %s1127
      $region52: #{neural_network_forward.4} parent=47 // pred_fallthru
        _
    $region48: #{neural_network_forward.4} parent=5 // pred_fallthru
      _
  $region6: #{neural_network_forward.4} parent=0 // loop_footer
    %s13 = sadd.s32 1, %s9
  $region7: #{neural_network_forward.4} parent=0 // loop_footer_branch
    %8 = sbr.rel target = $region3
  $region8: #{neural_network_forward.4} parent=0 // loop_exit
    _

// kernel: neural_network_forward.5
$region0: #{neural_network_forward.5}
  #allocation0 [shape = 'u32[]', space=smem, size = 0x4, offset = 0x4, fixed_abs, tag = 'smem constant byte address 0x4 - core index']
  #allocation1 [shape = 'u32[144,128]{1,0:T(1,128)}', space=vmem, size = 0x12000, scoped, tag = 'internal scratch']
  #allocation2 [shape = 'f32[72,128]{1,0:T(8,128)}', space=vmem, size = 0x9000, scoped, tag = 'scratch operand']
  %s0 = inlined_call_operand.vmem [shape: bf16[72,2048], index: 0, kind: input, shape index: {}]
  %s1 = inlined_call_operand.vmem [shape: bf16[2048,128], index: 1, kind: input, shape index: {}]
  %s2 = inlined_call_operand.vmem [shape: f32[1,128], index: 2, kind: input, shape index: {}]
  %s3 = inlined_call_operand.vmem [shape: bf16[72,128], index: 3, kind: output, shape index: {}]
  %s4 = sld [smem:[#allocation0]]
  $region30: #{neural_network_forward.5} parent=0
    _
  %s6 = ssub.s32 1, %s4
  %s7 = scalar_select 0, %s6, %s4
  // Predicated region
  $region2: #{neural_network_forward.5} parent=0 // pred_check
    _
  $region3: #{neural_network_forward.5} parent=0 // pred_check_branch
    %9 = sbr.rel (0) target = $region5
  $region4: #{neural_network_forward.5} parent=0 // pred_region
    _
  $region5: #{neural_network_forward.5} parent=0 // pred_fallthru
    _
  // Predicated region
  $region6: #{neural_network_forward.5} parent=0 // pred_check
    _
  $region7: #{neural_network_forward.5} parent=0 // pred_check_branch
    %11 = sbr.rel (0) target = $region9
  $region8: #{neural_network_forward.5} parent=0 // pred_region
    _
  $region9: #{neural_network_forward.5} parent=0 // pred_fallthru
    _
  // Predicated region
  $region10: #{neural_network_forward.5} parent=0 // pred_check
    _
  $region11: #{neural_network_forward.5} parent=0 // pred_check_branch
    %13 = sbr.rel (0) target = $region13
  $region12: #{neural_network_forward.5} parent=0 // pred_region
    _
  $region13: #{neural_network_forward.5} parent=0 // pred_fallthru
    _
  %p15 = scmp.eq.s32.totalorder 0, 0
  // Predicated region
  $region14: #{neural_network_forward.5} parent=0 // pred_check
    %p16 = pneg %p15
  $region15: #{neural_network_forward.5} parent=0 // pred_check_branch
    %18 = sbr.rel (%p16) target = $region17
  $region16: #{neural_network_forward.5} parent=0 // pred_region
    %19 = vst [vmem:[#allocation2] sm:$0xff] 0.0
    %20 = vst [vmem:[#allocation2 + $0x8] sm:$0xff] 0.0
    %21 = vst [vmem:[#allocation2 + $0x10] sm:$0xff] 0.0
    %22 = vst [vmem:[#allocation2 + $0x18] sm:$0xff] 0.0
    %23 = vst [vmem:[#allocation2 + $0x20] sm:$0xff] 0.0
    %24 = vst [vmem:[#allocation2 + $0x28] sm:$0xff] 0.0
    %25 = vst [vmem:[#allocation2 + $0x30] sm:$0xff] 0.0
    %26 = vst [vmem:[#allocation2 + $0x38] sm:$0xff] 0.0
    %27 = vst [vmem:[#allocation2 + $0x40] sm:$0xff] 0.0
  $region17: #{neural_network_forward.5} parent=0 // pred_fallthru
    _
  %v28 = vld [vmem:[#allocation2] sm:$0xff]
  %v29 = vld [vmem:[#allocation2 + $0x8] sm:$0xff]
  %v30 = vld [vmem:[#allocation2 + $0x10] sm:$0xff]
  %v31 = vld [vmem:[#allocation2 + $0x18] sm:$0xff]
  %v32 = vld [vmem:[#allocation2 + $0x20] sm:$0xff]
  %v33 = vld [vmem:[#allocation2 + $0x28] sm:$0xff]
  %v34 = vld [vmem:[#allocation2 + $0x30] sm:$0xff]
  %v35 = vld [vmem:[#allocation2 + $0x38] sm:$0xff]
  %v36 = vld [vmem:[#allocation2 + $0x40] sm:$0xff]
  %v37 = vld [vmem:[%s0] sm:$0xff]
  %v38 = vld [vmem:[%s0 + $0x8] sm:$0xff]
  %v39 = vld [vmem:[%s0 + $0x10] sm:$0xff]
  %v40 = vld [vmem:[%s0 + $0x18] sm:$0xff]
  %v41 = vld [vmem:[%s0 + $0x20] sm:$0xff]
  %v42 = vld [vmem:[%s0 + $0x28] sm:$0xff]
  %v43 = vld [vmem:[%s0 + $0x30] sm:$0xff]
  %v44 = vld [vmem:[%s0 + $0x38] sm:$0xff]
  %v45 = vld [vmem:[%s0 + $0x40] sm:$0xff]
  %v46 = vld [vmem:[%s0 + $0x48] sm:$0xff]
  %v47 = vld [vmem:[%s0 + $0x50] sm:$0xff]
  %v48 = vld [vmem:[%s0 + $0x58] sm:$0xff]
  %v49 = vld [vmem:[%s0 + $0x60] sm:$0xff]
  %v50 = vld [vmem:[%s0 + $0x68] sm:$0xff]
  %v51 = vld [vmem:[%s0 + $0x70] sm:$0xff]
  %v52 = vld [vmem:[%s0 + $0x78] sm:$0xff]
  %v53 = vld [vmem:[%s0 + $0x80] sm:$0xff]
  %v54 = vld [vmem:[%s0 + $0x88] sm:$0xff]
  %v55 = vld [vmem:[%s0 + $0x90] sm:$0xff]
  %v56 = vld [vmem:[%s0 + $0x98] sm:$0xff]
  %v57 = vld [vmem:[%s0 + $0xa0] sm:$0xff]
  %v58 = vld [vmem:[%s0 + $0xa8] sm:$0xff]
  %v59 = vld [vmem:[%s0 + $0xb0] sm:$0xff]
  %v60 = vld [vmem:[%s0 + $0xb8] sm:$0xff]
  %v61 = vld [vmem:[%s0 + $0xc0] sm:$0xff]
  %v62 = vld [vmem:[%s0 + $0xc8] sm:$0xff]
  %v63 = vld [vmem:[%s0 + $0xd0] sm:$0xff]
  %v64 = vld [vmem:[%s0 + $0xd8] sm:$0xff]
  %v65 = vld [vmem:[%s0 + $0xe0] sm:$0xff]
  %v66 = vld [vmem:[%s0 + $0xe8] sm:$0xff]
  %v67 = vld [vmem:[%s0 + $0xf0] sm:$0xff]
  %v68 = vld [vmem:[%s0 + $0xf8] sm:$0xff]
  %v69 = vld [vmem:[%s0 + $0x100] sm:$0xff]
  %v70 = vld [vmem:[%s0 + $0x108] sm:$0xff]
  %v71 = vld [vmem:[%s0 + $0x110] sm:$0xff]
  %v72 = vld [vmem:[%s0 + $0x118] sm:$0xff]
  %v73 = vld [vmem:[%s0 + $0x120] sm:$0xff]
  %v74 = vld [vmem:[%s0 + $0x128] sm:$0xff]
  %v75 = vld [vmem:[%s0 + $0x130] sm:$0xff]
  %v76 = vld [vmem:[%s0 + $0x138] sm:$0xff]
  %v77 = vld [vmem:[%s0 + $0x140] sm:$0xff]
  %v78 = vld [vmem:[%s0 + $0x148] sm:$0xff]
  %v79 = vld [vmem:[%s0 + $0x150] sm:$0xff]
  %v80 = vld [vmem:[%s0 + $0x158] sm:$0xff]
  %v81 = vld [vmem:[%s0 + $0x160] sm:$0xff]
  %v82 = vld [vmem:[%s0 + $0x168] sm:$0xff]
  %v83 = vld [vmem:[%s0 + $0x170] sm:$0xff]
  %v84 = vld [vmem:[%s0 + $0x178] sm:$0xff]
  %v85 = vld [vmem:[%s0 + $0x180] sm:$0xff]
  %v86 = vld [vmem:[%s0 + $0x188] sm:$0xff]
  %v87 = vld [vmem:[%s0 + $0x190] sm:$0xff]
  %v88 = vld [vmem:[%s0 + $0x198] sm:$0xff]
  %v89 = vld [vmem:[%s0 + $0x1a0] sm:$0xff]
  %v90 = vld [vmem:[%s0 + $0x1a8] sm:$0xff]
  %v91 = vld [vmem:[%s0 + $0x1b0] sm:$0xff]
  %v92 = vld [vmem:[%s0 + $0x1b8] sm:$0xff]
  %v93 = vld [vmem:[%s0 + $0x1c0] sm:$0xff]
  %v94 = vld [vmem:[%s0 + $0x1c8] sm:$0xff]
  %v95 = vld [vmem:[%s0 + $0x1d0] sm:$0xff]
  %v96 = vld [vmem:[%s0 + $0x1d8] sm:$0xff]
  %v97 = vld [vmem:[%s0 + $0x1e0] sm:$0xff]
  %v98 = vld [vmem:[%s0 + $0x1e8] sm:$0xff]
  %v99 = vld [vmem:[%s0 + $0x1f0] sm:$0xff]
  %v100 = vld [vmem:[%s0 + $0x1f8] sm:$0xff]
  %v101 = vld [vmem:[%s0 + $0x200] sm:$0xff]
  %v102 = vld [vmem:[%s0 + $0x208] sm:$0xff]
  %v103 = vld [vmem:[%s0 + $0x210] sm:$0xff]
  %v104 = vld [vmem:[%s0 + $0x218] sm:$0xff]
  %v105 = vld [vmem:[%s0 + $0x220] sm:$0xff]
  %v106 = vld [vmem:[%s0 + $0x228] sm:$0xff]
  %v107 = vld [vmem:[%s0 + $0x230] sm:$0xff]
  %v108 = vld [vmem:[%s0 + $0x238] sm:$0xff]
  %v109 = vld [vmem:[%s1] sm:$0xf]
  %v110 = vld [vmem:[%s1 + $0x4] sm:$0xf]
  %v111 = vld [vmem:[%s1 + $0x8] sm:$0xf]
  %v112 = vld [vmem:[%s1 + $0xc] sm:$0xf]
  %v113 = vld [vmem:[%s1 + $0x10] sm:$0xf]
  %v114 = vld [vmem:[%s1 + $0x14] sm:$0xf]
  %v115 = vld [vmem:[%s1 + $0x18] sm:$0xf]
  %v116 = vld [vmem:[%s1 + $0x1c] sm:$0xf]
  %v117 = vld [vmem:[%s1 + $0x20] sm:$0xf]
  %v118 = vld [vmem:[%s1 + $0x24] sm:$0xf]
  %v119 = vld [vmem:[%s1 + $0x28] sm:$0xf]
  %v120 = vld [vmem:[%s1 + $0x2c] sm:$0xf]
  %v121 = vld [vmem:[%s1 + $0x30] sm:$0xf]
  %v122 = vld [vmem:[%s1 + $0x34] sm:$0xf]
  %v123 = vld [vmem:[%s1 + $0x38] sm:$0xf]
  %v124 = vld [vmem:[%s1 + $0x3c] sm:$0xf]
  %v125 = vld [vmem:[%s1 + $0x40] sm:$0xf]
  %v126 = vld [vmem:[%s1 + $0x44] sm:$0xf]
  %v127 = vld [vmem:[%s1 + $0x48] sm:$0xf]
  %v128 = vld [vmem:[%s1 + $0x4c] sm:$0xf]
  %v129 = vld [vmem:[%s1 + $0x50] sm:$0xf]
  %v130 = vld [vmem:[%s1 + $0x54] sm:$0xf]
  %v131 = vld [vmem:[%s1 + $0x58] sm:$0xf]
  %v132 = vld [vmem:[%s1 + $0x5c] sm:$0xf]
  %v133 = vld [vmem:[%s1 + $0x60] sm:$0xf]
  %v134 = vld [vmem:[%s1 + $0x64] sm:$0xf]
  %v135 = vld [vmem:[%s1 + $0x68] sm:$0xf]
  %v136 = vld [vmem:[%s1 + $0x6c] sm:$0xf]
  %v137 = vld [vmem:[%s1 + $0x70] sm:$0xf]
  %v138 = vld [vmem:[%s1 + $0x74] sm:$0xf]
  %v139 = vld [vmem:[%s1 + $0x78] sm:$0xf]
  %v140 = vld [vmem:[%s1 + $0x7c] sm:$0xf]
  %v141 = vld [vmem:[%s1 + $0x80] sm:$0xf]
  %v142 = vld [vmem:[%s1 + $0x84] sm:$0xf]
  %v143 = vld [vmem:[%s1 + $0x88] sm:$0xf]
  %v144 = vld [vmem:[%s1 + $0x8c] sm:$0xf]
  %v145 = vld [vmem:[%s1 + $0x90] sm:$0xf]
  %v146 = vld [vmem:[%s1 + $0x94] sm:$0xf]
  %v147 = vld [vmem:[%s1 + $0x98] sm:$0xf]
  %v148 = vld [vmem:[%s1 + $0x9c] sm:$0xf]
  %v149 = vld [vmem:[%s1 + $0xa0] sm:$0xf]
  %v150 = vld [vmem:[%s1 + $0xa4] sm:$0xf]
  %v151 = vld [vmem:[%s1 + $0xa8] sm:$0xf]
  %v152 = vld [vmem:[%s1 + $0xac] sm:$0xf]
  %v153 = vld [vmem:[%s1 + $0xb0] sm:$0xf]
  %v154 = vld [vmem:[%s1 + $0xb4] sm:$0xf]
  %v155 = vld [vmem:[%s1 + $0xb8] sm:$0xf]
  %v156 = vld [vmem:[%s1 + $0xbc] sm:$0xf]
  %v157 = vld [vmem:[%s1 + $0xc0] sm:$0xf]
  %v158 = vld [vmem:[%s1 + $0xc4] sm:$0xf]
  %v159 = vld [vmem:[%s1 + $0xc8] sm:$0xf]
  %v160 = vld [vmem:[%s1 + $0xcc] sm:$0xf]
  %v161 = vld [vmem:[%s1 + $0xd0] sm:$0xf]
  %v162 = vld [vmem:[%s1 + $0xd4] sm:$0xf]
  %v163 = vld [vmem:[%s1 + $0xd8] sm:$0xf]
  %v164 = vld [vmem:[%s1 + $0xdc] sm:$0xf]
  %v165 = vld [vmem:[%s1 + $0xe0] sm:$0xf]
  %v166 = vld [vmem:[%s1 + $0xe4] sm:$0xf]
  %v167 = vld [vmem:[%s1 + $0xe8] sm:$0xf]
  %v168 = vld [vmem:[%s1 + $0xec] sm:$0xf]
  %v169 = vld [vmem:[%s1 + $0xf0] sm:$0xf]
  %v170 = vld [vmem:[%s1 + $0xf4] sm:$0xf]
  %v171 = vld [vmem:[%s1 + $0xf8] sm:$0xf]
  %v172 = vld [vmem:[%s1 + $0xfc] sm:$0xf]
  %v173 = vld [vmem:[%s1 + $0x100] sm:$0xf]
  %v174 = vld [vmem:[%s1 + $0x104] sm:$0xf]
  %v175 = vld [vmem:[%s1 + $0x108] sm:$0xf]
  %v176 = vld [vmem:[%s1 + $0x10c] sm:$0xf]
  %v177 = vld [vmem:[%s1 + $0x110] sm:$0xf]
  %v178 = vld [vmem:[%s1 + $0x114] sm:$0xf]
  %v179 = vld [vmem:[%s1 + $0x118] sm:$0xf]
  %v180 = vld [vmem:[%s1 + $0x11c] sm:$0xf]
  %v181 = vld [vmem:[%s1 + $0x120] sm:$0xf]
  %v182 = vld [vmem:[%s1 + $0x124] sm:$0xf]
  %v183 = vld [vmem:[%s1 + $0x128] sm:$0xf]
  %v184 = vld [vmem:[%s1 + $0x12c] sm:$0xf]
  %v185 = vld [vmem:[%s1 + $0x130] sm:$0xf]
  %v186 = vld [vmem:[%s1 + $0x134] sm:$0xf]
  %v187 = vld [vmem:[%s1 + $0x138] sm:$0xf]
  %v188 = vld [vmem:[%s1 + $0x13c] sm:$0xf]
  %v189 = vld [vmem:[%s1 + $0x140] sm:$0xf]
  %v190 = vld [vmem:[%s1 + $0x144] sm:$0xf]
  %v191 = vld [vmem:[%s1 + $0x148] sm:$0xf]
  %v192 = vld [vmem:[%s1 + $0x14c] sm:$0xf]
  %v193 = vld [vmem:[%s1 + $0x150] sm:$0xf]
  %v194 = vld [vmem:[%s1 + $0x154] sm:$0xf]
  %v195 = vld [vmem:[%s1 + $0x158] sm:$0xf]
  %v196 = vld [vmem:[%s1 + $0x15c] sm:$0xf]
  %v197 = vld [vmem:[%s1 + $0x160] sm:$0xf]
  %v198 = vld [vmem:[%s1 + $0x164] sm:$0xf]
  %v199 = vld [vmem:[%s1 + $0x168] sm:$0xf]
  %v200 = vld [vmem:[%s1 + $0x16c] sm:$0xf]
  %v201 = vld [vmem:[%s1 + $0x170] sm:$0xf]
  %v202 = vld [vmem:[%s1 + $0x174] sm:$0xf]
  %v203 = vld [vmem:[%s1 + $0x178] sm:$0xf]
  %v204 = vld [vmem:[%s1 + $0x17c] sm:$0xf]
  %v205 = vld [vmem:[%s1 + $0x180] sm:$0xf]
  %v206 = vld [vmem:[%s1 + $0x184] sm:$0xf]
  %v207 = vld [vmem:[%s1 + $0x188] sm:$0xf]
  %v208 = vld [vmem:[%s1 + $0x18c] sm:$0xf]
  %v209 = vld [vmem:[%s1 + $0x190] sm:$0xf]
  %v210 = vld [vmem:[%s1 + $0x194] sm:$0xf]
  %v211 = vld [vmem:[%s1 + $0x198] sm:$0xf]
  %v212 = vld [vmem:[%s1 + $0x19c] sm:$0xf]
  %v213 = vld [vmem:[%s1 + $0x1a0] sm:$0xf]
  %v214 = vld [vmem:[%s1 + $0x1a4] sm:$0xf]
  %v215 = vld [vmem:[%s1 + $0x1a8] sm:$0xf]
  %v216 = vld [vmem:[%s1 + $0x1ac] sm:$0xf]
  %v217 = vld [vmem:[%s1 + $0x1b0] sm:$0xf]
  %v218 = vld [vmem:[%s1 + $0x1b4] sm:$0xf]
  %v219 = vld [vmem:[%s1 + $0x1b8] sm:$0xf]
  %v220 = vld [vmem:[%s1 + $0x1bc] sm:$0xf]
  %v221 = vld [vmem:[%s1 + $0x1c0] sm:$0xf]
  %v222 = vld [vmem:[%s1 + $0x1c4] sm:$0xf]
  %v223 = vld [vmem:[%s1 + $0x1c8] sm:$0xf]
  %v224 = vld [vmem:[%s1 + $0x1cc] sm:$0xf]
  %v225 = vld [vmem:[%s1 + $0x1d0] sm:$0xf]
  %v226 = vld [vmem:[%s1 + $0x1d4] sm:$0xf]
  %v227 = vld [vmem:[%s1 + $0x1d8] sm:$0xf]
  %v228 = vld [vmem:[%s1 + $0x1dc] sm:$0xf]
  %v229 = vld [vmem:[%s1 + $0x1e0] sm:$0xf]
  %v230 = vld [vmem:[%s1 + $0x1e4] sm:$0xf]
  %v231 = vld [vmem:[%s1 + $0x1e8] sm:$0xf]
  %v232 = vld [vmem:[%s1 + $0x1ec] sm:$0xf]
  %v233 = vld [vmem:[%s1 + $0x1f0] sm:$0xf]
  %v234 = vld [vmem:[%s1 + $0x1f4] sm:$0xf]
  %v235 = vld [vmem:[%s1 + $0x1f8] sm:$0xf]
  %v236 = vld [vmem:[%s1 + $0x1fc] sm:$0xf]
  %v237 = vld [vmem:[%s1 + $0x200] sm:$0xf]
  %v238 = vld [vmem:[%s1 + $0x204] sm:$0xf]
  %v239 = vld [vmem:[%s1 + $0x208] sm:$0xf]
  %v240 = vld [vmem:[%s1 + $0x20c] sm:$0xf]
  %v241 = vld [vmem:[%s1 + $0x210] sm:$0xf]
  %v242 = vld [vmem:[%s1 + $0x214] sm:$0xf]
  %v243 = vld [vmem:[%s1 + $0x218] sm:$0xf]
  %v244 = vld [vmem:[%s1 + $0x21c] sm:$0xf]
  %v245 = vld [vmem:[%s1 + $0x220] sm:$0xf]
  %v246 = vld [vmem:[%s1 + $0x224] sm:$0xf]
  %v247 = vld [vmem:[%s1 + $0x228] sm:$0xf]
  %v248 = vld [vmem:[%s1 + $0x22c] sm:$0xf]
  %v249 = vld [vmem:[%s1 + $0x230] sm:$0xf]
  %v250 = vld [vmem:[%s1 + $0x234] sm:$0xf]
  %v251 = vld [vmem:[%s1 + $0x238] sm:$0xf]
  %v252 = vld [vmem:[%s1 + $0x23c] sm:$0xf]
  %v253 = vld [vmem:[%s1 + $0x240] sm:$0xf]
  %v254 = vld [vmem:[%s1 + $0x244] sm:$0xf]
  %v255 = vld [vmem:[%s1 + $0x248] sm:$0xf]
  %v256 = vld [vmem:[%s1 + $0x24c] sm:$0xf]
  %v257 = vld [vmem:[%s1 + $0x250] sm:$0xf]
  %v258 = vld [vmem:[%s1 + $0x254] sm:$0xf]
  %v259 = vld [vmem:[%s1 + $0x258] sm:$0xf]
  %v260 = vld [vmem:[%s1 + $0x25c] sm:$0xf]
  %v261 = vld [vmem:[%s1 + $0x260] sm:$0xf]
  %v262 = vld [vmem:[%s1 + $0x264] sm:$0xf]
  %v263 = vld [vmem:[%s1 + $0x268] sm:$0xf]
  %v264 = vld [vmem:[%s1 + $0x26c] sm:$0xf]
  %v265 = vld [vmem:[%s1 + $0x270] sm:$0xf]
  %v266 = vld [vmem:[%s1 + $0x274] sm:$0xf]
  %v267 = vld [vmem:[%s1 + $0x278] sm:$0xf]
  %v268 = vld [vmem:[%s1 + $0x27c] sm:$0xf]
  %v269 = vld [vmem:[%s1 + $0x280] sm:$0xf]
  %v270 = vld [vmem:[%s1 + $0x284] sm:$0xf]
  %v271 = vld [vmem:[%s1 + $0x288] sm:$0xf]
  %v272 = vld [vmem:[%s1 + $0x28c] sm:$0xf]
  %v273 = vld [vmem:[%s1 + $0x290] sm:$0xf]
  %v274 = vld [vmem:[%s1 + $0x294] sm:$0xf]
  %v275 = vld [vmem:[%s1 + $0x298] sm:$0xf]
  %v276 = vld [vmem:[%s1 + $0x29c] sm:$0xf]
  %v277 = vld [vmem:[%s1 + $0x2a0] sm:$0xf]
  %v278 = vld [vmem:[%s1 + $0x2a4] sm:$0xf]
  %v279 = vld [vmem:[%s1 + $0x2a8] sm:$0xf]
  %v280 = vld [vmem:[%s1 + $0x2ac] sm:$0xf]
  %v281 = vld [vmem:[%s1 + $0x2b0] sm:$0xf]
  %v282 = vld [vmem:[%s1 + $0x2b4] sm:$0xf]
  %v283 = vld [vmem:[%s1 + $0x2b8] sm:$0xf]
  %v284 = vld [vmem:[%s1 + $0x2bc] sm:$0xf]
  %v285 = vld [vmem:[%s1 + $0x2c0] sm:$0xf]
  %v286 = vld [vmem:[%s1 + $0x2c4] sm:$0xf]
  %v287 = vld [vmem:[%s1 + $0x2c8] sm:$0xf]
  %v288 = vld [vmem:[%s1 + $0x2cc] sm:$0xf]
  %v289 = vld [vmem:[%s1 + $0x2d0] sm:$0xf]
  %v290 = vld [vmem:[%s1 + $0x2d4] sm:$0xf]
  %v291 = vld [vmem:[%s1 + $0x2d8] sm:$0xf]
  %v292 = vld [vmem:[%s1 + $0x2dc] sm:$0xf]
  %v293 = vld [vmem:[%s1 + $0x2e0] sm:$0xf]
  %v294 = vld [vmem:[%s1 + $0x2e4] sm:$0xf]
  %v295 = vld [vmem:[%s1 + $0x2e8] sm:$0xf]
  %v296 = vld [vmem:[%s1 + $0x2ec] sm:$0xf]
  %v297 = vld [vmem:[%s1 + $0x2f0] sm:$0xf]
  %v298 = vld [vmem:[%s1 + $0x2f4] sm:$0xf]
  %v299 = vld [vmem:[%s1 + $0x2f8] sm:$0xf]
  %v300 = vld [vmem:[%s1 + $0x2fc] sm:$0xf]
  %v301 = vld [vmem:[%s1 + $0x300] sm:$0xf]
  %v302 = vld [vmem:[%s1 + $0x304] sm:$0xf]
  %v303 = vld [vmem:[%s1 + $0x308] sm:$0xf]
  %v304 = vld [vmem:[%s1 + $0x30c] sm:$0xf]
  %v305 = vld [vmem:[%s1 + $0x310] sm:$0xf]
  %v306 = vld [vmem:[%s1 + $0x314] sm:$0xf]
  %v307 = vld [vmem:[%s1 + $0x318] sm:$0xf]
  %v308 = vld [vmem:[%s1 + $0x31c] sm:$0xf]
  %v309 = vld [vmem:[%s1 + $0x320] sm:$0xf]
  %v310 = vld [vmem:[%s1 + $0x324] sm:$0xf]
  %v311 = vld [vmem:[%s1 + $0x328] sm:$0xf]
  %v312 = vld [vmem:[%s1 + $0x32c] sm:$0xf]
  %v313 = vld [vmem:[%s1 + $0x330] sm:$0xf]
  %v314 = vld [vmem:[%s1 + $0x334] sm:$0xf]
  %v315 = vld [vmem:[%s1 + $0x338] sm:$0xf]
  %v316 = vld [vmem:[%s1 + $0x33c] sm:$0xf]
  %v317 = vld [vmem:[%s1 + $0x340] sm:$0xf]
  %v318 = vld [vmem:[%s1 + $0x344] sm:$0xf]
  %v319 = vld [vmem:[%s1 + $0x348] sm:$0xf]
  %v320 = vld [vmem:[%s1 + $0x34c] sm:$0xf]
  %v321 = vld [vmem:[%s1 + $0x350] sm:$0xf]
  %v322 = vld [vmem:[%s1 + $0x354] sm:$0xf]
  %v323 = vld [vmem:[%s1 + $0x358] sm:$0xf]
  %v324 = vld [vmem:[%s1 + $0x35c] sm:$0xf]
  %v325 = vld [vmem:[%s1 + $0x360] sm:$0xf]
  %v326 = vld [vmem:[%s1 + $0x364] sm:$0xf]
  %v327 = vld [vmem:[%s1 + $0x368] sm:$0xf]
  %v328 = vld [vmem:[%s1 + $0x36c] sm:$0xf]
  %v329 = vld [vmem:[%s1 + $0x370] sm:$0xf]
  %v330 = vld [vmem:[%s1 + $0x374] sm:$0xf]
  %v331 = vld [vmem:[%s1 + $0x378] sm:$0xf]
  %v332 = vld [vmem:[%s1 + $0x37c] sm:$0xf]
  %v333 = vld [vmem:[%s1 + $0x380] sm:$0xf]
  %v334 = vld [vmem:[%s1 + $0x384] sm:$0xf]
  %v335 = vld [vmem:[%s1 + $0x388] sm:$0xf]
  %v336 = vld [vmem:[%s1 + $0x38c] sm:$0xf]
  %v337 = vld [vmem:[%s1 + $0x390] sm:$0xf]
  %v338 = vld [vmem:[%s1 + $0x394] sm:$0xf]
  %v339 = vld [vmem:[%s1 + $0x398] sm:$0xf]
  %v340 = vld [vmem:[%s1 + $0x39c] sm:$0xf]
  %v341 = vld [vmem:[%s1 + $0x3a0] sm:$0xf]
  %v342 = vld [vmem:[%s1 + $0x3a4] sm:$0xf]
  %v343 = vld [vmem:[%s1 + $0x3a8] sm:$0xf]
  %v344 = vld [vmem:[%s1 + $0x3ac] sm:$0xf]
  %v345 = vld [vmem:[%s1 + $0x3b0] sm:$0xf]
  %v346 = vld [vmem:[%s1 + $0x3b4] sm:$0xf]
  %v347 = vld [vmem:[%s1 + $0x3b8] sm:$0xf]
  %v348 = vld [vmem:[%s1 + $0x3bc] sm:$0xf]
  %v349 = vld [vmem:[%s1 + $0x3c0] sm:$0xf]
  %v350 = vld [vmem:[%s1 + $0x3c4] sm:$0xf]
  %v351 = vld [vmem:[%s1 + $0x3c8] sm:$0xf]
  %v352 = vld [vmem:[%s1 + $0x3cc] sm:$0xf]
  %v353 = vld [vmem:[%s1 + $0x3d0] sm:$0xf]
  %v354 = vld [vmem:[%s1 + $0x3d4] sm:$0xf]
  %v355 = vld [vmem:[%s1 + $0x3d8] sm:$0xf]
  %v356 = vld [vmem:[%s1 + $0x3dc] sm:$0xf]
  %v357 = vld [vmem:[%s1 + $0x3e0] sm:$0xf]
  %v358 = vld [vmem:[%s1 + $0x3e4] sm:$0xf]
  %v359 = vld [vmem:[%s1 + $0x3e8] sm:$0xf]
  %v360 = vld [vmem:[%s1 + $0x3ec] sm:$0xf]
  %v361 = vld [vmem:[%s1 + $0x3f0] sm:$0xf]
  %v362 = vld [vmem:[%s1 + $0x3f4] sm:$0xf]
  %v363 = vld [vmem:[%s1 + $0x3f8] sm:$0xf]
  %v364 = vld [vmem:[%s1 + $0x3fc] sm:$0xf]
  %v437 = vunpack.c.l.b16 %v37
  %v438 = vunpack.c.h.b16 %v37
  %v439 = vunpack.c.l.b16 %v38
  %v440 = vunpack.c.h.b16 %v38
  %v441 = vunpack.c.l.b16 %v39
  %v442 = vunpack.c.h.b16 %v39
  %v443 = vunpack.c.l.b16 %v40
  %v444 = vunpack.c.h.b16 %v40
  %v445 = vunpack.c.l.b16 %v41
  %v446 = vunpack.c.h.b16 %v41
  %v447 = vunpack.c.l.b16 %v42
  %v448 = vunpack.c.h.b16 %v42
  %v449 = vunpack.c.l.b16 %v43
  %v450 = vunpack.c.h.b16 %v43
  %v451 = vunpack.c.l.b16 %v44
  %v452 = vunpack.c.h.b16 %v44
  %v453 = vunpack.c.l.b16 %v45
  %v454 = vunpack.c.h.b16 %v45
  %v455 = vunpack.c.l.b16 %v46
  %v456 = vunpack.c.h.b16 %v46
  %v457 = vunpack.c.l.b16 %v47
  %v458 = vunpack.c.h.b16 %v47
  %v459 = vunpack.c.l.b16 %v48
  %v460 = vunpack.c.h.b16 %v48
  %v461 = vunpack.c.l.b16 %v49
  %v462 = vunpack.c.h.b16 %v49
  %v463 = vunpack.c.l.b16 %v50
  %v464 = vunpack.c.h.b16 %v50
  %v465 = vunpack.c.l.b16 %v51
  %v466 = vunpack.c.h.b16 %v51
  %v467 = vunpack.c.l.b16 %v52
  %v468 = vunpack.c.h.b16 %v52
  %v469 = vunpack.c.l.b16 %v53
  %v470 = vunpack.c.h.b16 %v53
  %v471 = vunpack.c.l.b16 %v54
  %v472 = vunpack.c.h.b16 %v54
  %v473 = vunpack.c.l.b16 %v55
  %v474 = vunpack.c.h.b16 %v55
  %v475 = vunpack.c.l.b16 %v56
  %v476 = vunpack.c.h.b16 %v56
  %v477 = vunpack.c.l.b16 %v57
  %v478 = vunpack.c.h.b16 %v57
  %v479 = vunpack.c.l.b16 %v58
  %v480 = vunpack.c.h.b16 %v58
  %v481 = vunpack.c.l.b16 %v59
  %v482 = vunpack.c.h.b16 %v59
  %v483 = vunpack.c.l.b16 %v60
  %v484 = vunpack.c.h.b16 %v60
  %v485 = vunpack.c.l.b16 %v61
  %v486 = vunpack.c.h.b16 %v61
  %v487 = vunpack.c.l.b16 %v62
  %v488 = vunpack.c.h.b16 %v62
  %v489 = vunpack.c.l.b16 %v63
  %v490 = vunpack.c.h.b16 %v63
  %v491 = vunpack.c.l.b16 %v64
  %v492 = vunpack.c.h.b16 %v64
  %v493 = vunpack.c.l.b16 %v65
  %v494 = vunpack.c.h.b16 %v65
  %v495 = vunpack.c.l.b16 %v66
  %v496 = vunpack.c.h.b16 %v66
  %v497 = vunpack.c.l.b16 %v67
  %v498 = vunpack.c.h.b16 %v67
  %v499 = vunpack.c.l.b16 %v68
  %v500 = vunpack.c.h.b16 %v68
  %v501 = vunpack.c.l.b16 %v69
  %v502 = vunpack.c.h.b16 %v69
  %v503 = vunpack.c.l.b16 %v70
  %v504 = vunpack.c.h.b16 %v70
  %v505 = vunpack.c.l.b16 %v71
  %v506 = vunpack.c.h.b16 %v71
  %v507 = vunpack.c.l.b16 %v72
  %v508 = vunpack.c.h.b16 %v72
  %v509 = vunpack.c.l.b16 %v73
  %v510 = vunpack.c.h.b16 %v73
  %v511 = vunpack.c.l.b16 %v74
  %v512 = vunpack.c.h.b16 %v74
  %v513 = vunpack.c.l.b16 %v75
  %v514 = vunpack.c.h.b16 %v75
  %v515 = vunpack.c.l.b16 %v76
  %v516 = vunpack.c.h.b16 %v76
  %v517 = vunpack.c.l.b16 %v77
  %v518 = vunpack.c.h.b16 %v77
  %v519 = vunpack.c.l.b16 %v78
  %v520 = vunpack.c.h.b16 %v78
  %v521 = vunpack.c.l.b16 %v79
  %v522 = vunpack.c.h.b16 %v79
  %v523 = vunpack.c.l.b16 %v80
  %v524 = vunpack.c.h.b16 %v80
  %v525 = vunpack.c.l.b16 %v81
  %v526 = vunpack.c.h.b16 %v81
  %v527 = vunpack.c.l.b16 %v82
  %v528 = vunpack.c.h.b16 %v82
  %v529 = vunpack.c.l.b16 %v83
  %v530 = vunpack.c.h.b16 %v83
  %v531 = vunpack.c.l.b16 %v84
  %v532 = vunpack.c.h.b16 %v84
  %v533 = vunpack.c.l.b16 %v85
  %v534 = vunpack.c.h.b16 %v85
  %v535 = vunpack.c.l.b16 %v86
  %v536 = vunpack.c.h.b16 %v86
  %v537 = vunpack.c.l.b16 %v87
  %v538 = vunpack.c.h.b16 %v87
  %v539 = vunpack.c.l.b16 %v88
  %v540 = vunpack.c.h.b16 %v88
  %v541 = vunpack.c.l.b16 %v89
  %v542 = vunpack.c.h.b16 %v89
  %v543 = vunpack.c.l.b16 %v90
  %v544 = vunpack.c.h.b16 %v90
  %v545 = vunpack.c.l.b16 %v91
  %v546 = vunpack.c.h.b16 %v91
  %v547 = vunpack.c.l.b16 %v92
  %v548 = vunpack.c.h.b16 %v92
  %v549 = vunpack.c.l.b16 %v93
  %v550 = vunpack.c.h.b16 %v93
  %v551 = vunpack.c.l.b16 %v94
  %v552 = vunpack.c.h.b16 %v94
  %v553 = vunpack.c.l.b16 %v95
  %v554 = vunpack.c.h.b16 %v95
  %v555 = vunpack.c.l.b16 %v96
  %v556 = vunpack.c.h.b16 %v96
  %v557 = vunpack.c.l.b16 %v97
  %v558 = vunpack.c.h.b16 %v97
  %v559 = vunpack.c.l.b16 %v98
  %v560 = vunpack.c.h.b16 %v98
  %v561 = vunpack.c.l.b16 %v99
  %v562 = vunpack.c.h.b16 %v99
  %v563 = vunpack.c.l.b16 %v100
  %v564 = vunpack.c.h.b16 %v100
  %v565 = vunpack.c.l.b16 %v101
  %v566 = vunpack.c.h.b16 %v101
  %v567 = vunpack.c.l.b16 %v102
  %v568 = vunpack.c.h.b16 %v102
  %v569 = vunpack.c.l.b16 %v103
  %v570 = vunpack.c.h.b16 %v103
  %v571 = vunpack.c.l.b16 %v104
  %v572 = vunpack.c.h.b16 %v104
  %v573 = vunpack.c.l.b16 %v105
  %v574 = vunpack.c.h.b16 %v105
  %v575 = vunpack.c.l.b16 %v106
  %v576 = vunpack.c.h.b16 %v106
  %v577 = vunpack.c.l.b16 %v107
  %v578 = vunpack.c.h.b16 %v107
  %v579 = vunpack.c.l.b16 %v108
  %v580 = vunpack.c.h.b16 %v108
  %v581 = vpack.c.b16 %v453, %v437
  %v582 = vpack.c.b16 %v454, %v438
  %v583 = vpack.c.b16 %v455, %v439
  %v584 = vpack.c.b16 %v456, %v440
  %v585 = vpack.c.b16 %v457, %v441
  %v586 = vpack.c.b16 %v458, %v442
  %v587 = vpack.c.b16 %v459, %v443
  %v588 = vpack.c.b16 %v460, %v444
  %v589 = vpack.c.b16 %v461, %v445
  %v590 = vpack.c.b16 %v462, %v446
  %v591 = vpack.c.b16 %v463, %v447
  %v592 = vpack.c.b16 %v464, %v448
  %v593 = vpack.c.b16 %v465, %v449
  %v594 = vpack.c.b16 %v466, %v450
  %v595 = vpack.c.b16 %v467, %v451
  %v596 = vpack.c.b16 %v468, %v452
  %v597 = vpack.c.b16 %v485, %v469
  %v598 = vpack.c.b16 %v486, %v470
  %v599 = vpack.c.b16 %v487, %v471
  %v600 = vpack.c.b16 %v488, %v472
  %v601 = vpack.c.b16 %v489, %v473
  %v602 = vpack.c.b16 %v490, %v474
  %v603 = vpack.c.b16 %v491, %v475
  %v604 = vpack.c.b16 %v492, %v476
  %v605 = vpack.c.b16 %v493, %v477
  %v606 = vpack.c.b16 %v494, %v478
  %v607 = vpack.c.b16 %v495, %v479
  %v608 = vpack.c.b16 %v496, %v480
  %v609 = vpack.c.b16 %v497, %v481
  %v610 = vpack.c.b16 %v498, %v482
  %v611 = vpack.c.b16 %v499, %v483
  %v612 = vpack.c.b16 %v500, %v484
  %v613 = vpack.c.b16 %v517, %v501
  %v614 = vpack.c.b16 %v518, %v502
  %v615 = vpack.c.b16 %v519, %v503
  %v616 = vpack.c.b16 %v520, %v504
  %v617 = vpack.c.b16 %v521, %v505
  %v618 = vpack.c.b16 %v522, %v506
  %v619 = vpack.c.b16 %v523, %v507
  %v620 = vpack.c.b16 %v524, %v508
  %v621 = vpack.c.b16 %v525, %v509
  %v622 = vpack.c.b16 %v526, %v510
  %v623 = vpack.c.b16 %v527, %v511
  %v624 = vpack.c.b16 %v528, %v512
  %v625 = vpack.c.b16 %v529, %v513
  %v626 = vpack.c.b16 %v530, %v514
  %v627 = vpack.c.b16 %v531, %v515
  %v628 = vpack.c.b16 %v532, %v516
  %v629 = vpack.c.b16 %v549, %v533
  %v630 = vpack.c.b16 %v550, %v534
  %v631 = vpack.c.b16 %v551, %v535
  %v632 = vpack.c.b16 %v552, %v536
  %v633 = vpack.c.b16 %v553, %v537
  %v634 = vpack.c.b16 %v554, %v538
  %v635 = vpack.c.b16 %v555, %v539
  %v636 = vpack.c.b16 %v556, %v540
  %v637 = vpack.c.b16 %v557, %v541
  %v638 = vpack.c.b16 %v558, %v542
  %v639 = vpack.c.b16 %v559, %v543
  %v640 = vpack.c.b16 %v560, %v544
  %v641 = vpack.c.b16 %v561, %v545
  %v642 = vpack.c.b16 %v562, %v546
  %v643 = vpack.c.b16 %v563, %v547
  %v644 = vpack.c.b16 %v564, %v548
  %v645 = vpack.c.b16 %v565, %v565
  %v646 = vpack.c.b16 %v566, %v566
  %v647 = vpack.c.b16 %v567, %v567
  %v648 = vpack.c.b16 %v568, %v568
  %v649 = vpack.c.b16 %v569, %v569
  %v650 = vpack.c.b16 %v570, %v570
  %v651 = vpack.c.b16 %v571, %v571
  %v652 = vpack.c.b16 %v572, %v572
  %v653 = vpack.c.b16 %v573, %v573
  %v654 = vpack.c.b16 %v574, %v574
  %v655 = vpack.c.b16 %v575, %v575
  %v656 = vpack.c.b16 %v576, %v576
  %v657 = vpack.c.b16 %v577, %v577
  %v658 = vpack.c.b16 %v578, %v578
  %v659 = vpack.c.b16 %v579, %v579
  %v660 = vpack.c.b16 %v580, %v580
  %v997 = vunpack.c.l.b16 %v109
  %v998 = vunpack.c.l.b16 %v110
  %v999 = vunpack.c.l.b16 %v111
  %v1000 = vunpack.c.l.b16 %v112
  %v1001 = vunpack.c.l.b16 %v113
  %v1002 = vunpack.c.l.b16 %v114
  %v1003 = vunpack.c.l.b16 %v115
  %v1004 = vunpack.c.l.b16 %v116
  %v1005 = vunpack.c.l.b16 %v117
  %v1006 = vunpack.c.l.b16 %v118
  %v1007 = vunpack.c.l.b16 %v119
  %v1008 = vunpack.c.l.b16 %v120
  %v1009 = vunpack.c.l.b16 %v121
  %v1010 = vunpack.c.l.b16 %v122
  %v1011 = vunpack.c.l.b16 %v123
  %v1012 = vunpack.c.l.b16 %v124
  %v1013 = vunpack.c.l.b16 %v125
  %v1014 = vunpack.c.l.b16 %v126
  %v1015 = vunpack.c.l.b16 %v127
  %v1016 = vunpack.c.l.b16 %v128
  %v1017 = vunpack.c.l.b16 %v129
  %v1018 = vunpack.c.l.b16 %v130
  %v1019 = vunpack.c.l.b16 %v131
  %v1020 = vunpack.c.l.b16 %v132
  %v1021 = vunpack.c.l.b16 %v133
  %v1022 = vunpack.c.l.b16 %v134
  %v1023 = vunpack.c.l.b16 %v135
  %v1024 = vunpack.c.l.b16 %v136
  %v1025 = vunpack.c.l.b16 %v137
  %v1026 = vunpack.c.l.b16 %v138
  %v1027 = vunpack.c.l.b16 %v139
  %v1028 = vunpack.c.l.b16 %v140
  %v1029 = vunpack.c.l.b16 %v141
  %v1030 = vunpack.c.l.b16 %v142
  %v1031 = vunpack.c.l.b16 %v143
  %v1032 = vunpack.c.l.b16 %v144
  %v1033 = vunpack.c.l.b16 %v145
  %v1034 = vunpack.c.l.b16 %v146
  %v1035 = vunpack.c.l.b16 %v147
  %v1036 = vunpack.c.l.b16 %v148
  %v1037 = vunpack.c.l.b16 %v149
  %v1038 = vunpack.c.l.b16 %v150
  %v1039 = vunpack.c.l.b16 %v151
  %v1040 = vunpack.c.l.b16 %v152
  %v1041 = vunpack.c.l.b16 %v153
  %v1042 = vunpack.c.l.b16 %v154
  %v1043 = vunpack.c.l.b16 %v155
  %v1044 = vunpack.c.l.b16 %v156
  %v1045 = vunpack.c.l.b16 %v157
  %v1046 = vunpack.c.l.b16 %v158
  %v1047 = vunpack.c.l.b16 %v159
  %v1048 = vunpack.c.l.b16 %v160
  %v1049 = vunpack.c.l.b16 %v161
  %v1050 = vunpack.c.l.b16 %v162
  %v1051 = vunpack.c.l.b16 %v163
  %v1052 = vunpack.c.l.b16 %v164
  %v1053 = vunpack.c.l.b16 %v165
  %v1054 = vunpack.c.l.b16 %v166
  %v1055 = vunpack.c.l.b16 %v167
  %v1056 = vunpack.c.l.b16 %v168
  %v1057 = vunpack.c.l.b16 %v169
  %v1058 = vunpack.c.l.b16 %v170
  %v1059 = vunpack.c.l.b16 %v171
  %v1060 = vunpack.c.l.b16 %v172
  %v1061 = vunpack.c.l.b16 %v173
  %v1062 = vunpack.c.l.b16 %v174
  %v1063 = vunpack.c.l.b16 %v175
  %v1064 = vunpack.c.l.b16 %v176
  %v1065 = vunpack.c.l.b16 %v177
  %v1066 = vunpack.c.l.b16 %v178
  %v1067 = vunpack.c.l.b16 %v179
  %v1068 = vunpack.c.l.b16 %v180
  %v1069 = vunpack.c.l.b16 %v181
  %v1070 = vunpack.c.l.b16 %v182
  %v1071 = vunpack.c.l.b16 %v183
  %v1072 = vunpack.c.l.b16 %v184
  %v1073 = vunpack.c.l.b16 %v185
  %v1074 = vunpack.c.l.b16 %v186
  %v1075 = vunpack.c.l.b16 %v187
  %v1076 = vunpack.c.l.b16 %v188
  %v1077 = vunpack.c.l.b16 %v189
  %v1078 = vunpack.c.l.b16 %v190
  %v1079 = vunpack.c.l.b16 %v191
  %v1080 = vunpack.c.l.b16 %v192
  %v1081 = vunpack.c.l.b16 %v193
  %v1082 = vunpack.c.l.b16 %v194
  %v1083 = vunpack.c.l.b16 %v195
  %v1084 = vunpack.c.l.b16 %v196
  %v1085 = vunpack.c.l.b16 %v197
  %v1086 = vunpack.c.l.b16 %v198
  %v1087 = vunpack.c.l.b16 %v199
  %v1088 = vunpack.c.l.b16 %v200
  %v1089 = vunpack.c.l.b16 %v201
  %v1090 = vunpack.c.l.b16 %v202
  %v1091 = vunpack.c.l.b16 %v203
  %v1092 = vunpack.c.l.b16 %v204
  %v1093 = vunpack.c.l.b16 %v205
  %v1094 = vunpack.c.l.b16 %v206
  %v1095 = vunpack.c.l.b16 %v207
  %v1096 = vunpack.c.l.b16 %v208
  %v1097 = vunpack.c.l.b16 %v209
  %v1098 = vunpack.c.l.b16 %v210
  %v1099 = vunpack.c.l.b16 %v211
  %v1100 = vunpack.c.l.b16 %v212
  %v1101 = vunpack.c.l.b16 %v213
  %v1102 = vunpack.c.l.b16 %v214
  %v1103 = vunpack.c.l.b16 %v215
  %v1104 = vunpack.c.l.b16 %v216
  %v1105 = vunpack.c.l.b16 %v217
  %v1106 = vunpack.c.l.b16 %v218
  %v1107 = vunpack.c.l.b16 %v219
  %v1108 = vunpack.c.l.b16 %v220
  %v1109 = vunpack.c.l.b16 %v221
  %v1110 = vunpack.c.l.b16 %v222
  %v1111 = vunpack.c.l.b16 %v223
  %v1112 = vunpack.c.l.b16 %v224
  %v1113 = vunpack.c.l.b16 %v225
  %v1114 = vunpack.c.l.b16 %v226
  %v1115 = vunpack.c.l.b16 %v227
  %v1116 = vunpack.c.l.b16 %v228
  %v1117 = vunpack.c.l.b16 %v229
  %v1118 = vunpack.c.l.b16 %v230
  %v1119 = vunpack.c.l.b16 %v231
  %v1120 = vunpack.c.l.b16 %v232
  %v1121 = vunpack.c.l.b16 %v233
  %v1122 = vunpack.c.l.b16 %v234
  %v1123 = vunpack.c.l.b16 %v235
  %v1124 = vunpack.c.l.b16 %v236
  %v1125 = vunpack.c.l.b16 %v237
  %v1126 = vunpack.c.l.b16 %v238
  %v1127 = vunpack.c.l.b16 %v239
  %v1128 = vunpack.c.l.b16 %v240
  %v1129 = vunpack.c.l.b16 %v241
  %v1130 = vunpack.c.l.b16 %v242
  %v1131 = vunpack.c.l.b16 %v243
  %v1132 = vunpack.c.l.b16 %v244
  %v1133 = vunpack.c.l.b16 %v245
  %v1134 = vunpack.c.l.b16 %v246
  %v1135 = vunpack.c.l.b16 %v247
  %v1136 = vunpack.c.l.b16 %v248
  %v1137 = vunpack.c.l.b16 %v249
  %v1138 = vunpack.c.l.b16 %v250
  %v1139 = vunpack.c.l.b16 %v251
  %v1140 = vunpack.c.l.b16 %v252
  %v1141 = vunpack.c.l.b16 %v253
  %v1142 = vunpack.c.l.b16 %v254
  %v1143 = vunpack.c.l.b16 %v255
  %v1144 = vunpack.c.l.b16 %v256
  %v1145 = vunpack.c.l.b16 %v257
  %v1146 = vunpack.c.l.b16 %v258
  %v1147 = vunpack.c.l.b16 %v259
  %v1148 = vunpack.c.l.b16 %v260
  %v1149 = vunpack.c.l.b16 %v261
  %v1150 = vunpack.c.l.b16 %v262
  %v1151 = vunpack.c.l.b16 %v263
  %v1152 = vunpack.c.l.b16 %v264
  %v1153 = vunpack.c.l.b16 %v265
  %v1154 = vunpack.c.l.b16 %v266
  %v1155 = vunpack.c.l.b16 %v267
  %v1156 = vunpack.c.l.b16 %v268
  %v1157 = vunpack.c.l.b16 %v269
  %v1158 = vunpack.c.l.b16 %v270
  %v1159 = vunpack.c.l.b16 %v271
  %v1160 = vunpack.c.l.b16 %v272
  %v1161 = vunpack.c.l.b16 %v273
  %v1162 = vunpack.c.l.b16 %v274
  %v1163 = vunpack.c.l.b16 %v275
  %v1164 = vunpack.c.l.b16 %v276
  %v1165 = vunpack.c.l.b16 %v277
  %v1166 = vunpack.c.l.b16 %v278
  %v1167 = vunpack.c.l.b16 %v279
  %v1168 = vunpack.c.l.b16 %v280
  %v1169 = vunpack.c.l.b16 %v281
  %v1170 = vunpack.c.l.b16 %v282
  %v1171 = vunpack.c.l.b16 %v283
  %v1172 = vunpack.c.l.b16 %v284
  %v1173 = vunpack.c.l.b16 %v285
  %v1174 = vunpack.c.l.b16 %v286
  %v1175 = vunpack.c.l.b16 %v287
  %v1176 = vunpack.c.l.b16 %v288
  %v1177 = vunpack.c.l.b16 %v289
  %v1178 = vunpack.c.l.b16 %v290
  %v1179 = vunpack.c.l.b16 %v291
  %v1180 = vunpack.c.l.b16 %v292
  %v1181 = vunpack.c.l.b16 %v293
  %v1182 = vunpack.c.l.b16 %v294
  %v1183 = vunpack.c.l.b16 %v295
  %v1184 = vunpack.c.l.b16 %v296
  %v1185 = vunpack.c.l.b16 %v297
  %v1186 = vunpack.c.l.b16 %v298
  %v1187 = vunpack.c.l.b16 %v299
  %v1188 = vunpack.c.l.b16 %v300
  %v1189 = vunpack.c.l.b16 %v301
  %v1190 = vunpack.c.l.b16 %v302
  %v1191 = vunpack.c.l.b16 %v303
  %v1192 = vunpack.c.l.b16 %v304
  %v1193 = vunpack.c.l.b16 %v305
  %v1194 = vunpack.c.l.b16 %v306
  %v1195 = vunpack.c.l.b16 %v307
  %v1196 = vunpack.c.l.b16 %v308
  %v1197 = vunpack.c.l.b16 %v309
  %v1198 = vunpack.c.l.b16 %v310
  %v1199 = vunpack.c.l.b16 %v311
  %v1200 = vunpack.c.l.b16 %v312
  %v1201 = vunpack.c.l.b16 %v313
  %v1202 = vunpack.c.l.b16 %v314
  %v1203 = vunpack.c.l.b16 %v315
  %v1204 = vunpack.c.l.b16 %v316
  %v1205 = vunpack.c.l.b16 %v317
  %v1206 = vunpack.c.l.b16 %v318
  %v1207 = vunpack.c.l.b16 %v319
  %v1208 = vunpack.c.l.b16 %v320
  %v1209 = vunpack.c.l.b16 %v321
  %v1210 = vunpack.c.l.b16 %v322
  %v1211 = vunpack.c.l.b16 %v323
  %v1212 = vunpack.c.l.b16 %v324
  %v1213 = vunpack.c.l.b16 %v325
  %v1214 = vunpack.c.l.b16 %v326
  %v1215 = vunpack.c.l.b16 %v327
  %v1216 = vunpack.c.l.b16 %v328
  %v1217 = vunpack.c.l.b16 %v329
  %v1218 = vunpack.c.l.b16 %v330
  %v1219 = vunpack.c.l.b16 %v331
  %v1220 = vunpack.c.l.b16 %v332
  %v1221 = vunpack.c.l.b16 %v333
  %v1222 = vunpack.c.l.b16 %v334
  %v1223 = vunpack.c.l.b16 %v335
  %v1224 = vunpack.c.l.b16 %v336
  %v1225 = vunpack.c.l.b16 %v337
  %v1226 = vunpack.c.l.b16 %v338
  %v1227 = vunpack.c.l.b16 %v339
  %v1228 = vunpack.c.l.b16 %v340
  %v1229 = vunpack.c.l.b16 %v341
  %v1230 = vunpack.c.l.b16 %v342
  %v1231 = vunpack.c.l.b16 %v343
  %v1232 = vunpack.c.l.b16 %v344
  %v1233 = vunpack.c.l.b16 %v345
  %v1234 = vunpack.c.l.b16 %v346
  %v1235 = vunpack.c.l.b16 %v347
  %v1236 = vunpack.c.l.b16 %v348
  %v1237 = vunpack.c.l.b16 %v349
  %v1238 = vunpack.c.l.b16 %v350
  %v1239 = vunpack.c.l.b16 %v351
  %v1240 = vunpack.c.l.b16 %v352
  %v1241 = vunpack.c.l.b16 %v353
  %v1242 = vunpack.c.l.b16 %v354
  %v1243 = vunpack.c.l.b16 %v355
  %v1244 = vunpack.c.l.b16 %v356
  %v1245 = vunpack.c.l.b16 %v357
  %v1246 = vunpack.c.l.b16 %v358
  %v1247 = vunpack.c.l.b16 %v359
  %v1248 = vunpack.c.l.b16 %v360
  %v1249 = vunpack.c.l.b16 %v361
  %v1250 = vunpack.c.l.b16 %v362
  %v1251 = vunpack.c.l.b16 %v363
  %v1252 = vunpack.c.l.b16 %v364
  %v1253 = vpack.c.b16 %v998, %v997
  %v1254 = vpack.c.b16 %v1000, %v999
  %v1255 = vpack.c.b16 %v1002, %v1001
  %v1256 = vpack.c.b16 %v1004, %v1003
  %v1257 = vpack.c.b16 %v1006, %v1005
  %v1258 = vpack.c.b16 %v1008, %v1007
  %v1259 = vpack.c.b16 %v1010, %v1009
  %v1260 = vpack.c.b16 %v1012, %v1011
  %v1261 = vpack.c.b16 %v1014, %v1013
  %v1262 = vpack.c.b16 %v1016, %v1015
  %v1263 = vpack.c.b16 %v1018, %v1017
  %v1264 = vpack.c.b16 %v1020, %v1019
  %v1265 = vpack.c.b16 %v1022, %v1021
  %v1266 = vpack.c.b16 %v1024, %v1023
  %v1267 = vpack.c.b16 %v1026, %v1025
  %v1268 = vpack.c.b16 %v1028, %v1027
  %v1269 = vpack.c.b16 %v1030, %v1029
  %v1270 = vpack.c.b16 %v1032, %v1031
  %v1271 = vpack.c.b16 %v1034, %v1033
  %v1272 = vpack.c.b16 %v1036, %v1035
  %v1273 = vpack.c.b16 %v1038, %v1037
  %v1274 = vpack.c.b16 %v1040, %v1039
  %v1275 = vpack.c.b16 %v1042, %v1041
  %v1276 = vpack.c.b16 %v1044, %v1043
  %v1277 = vpack.c.b16 %v1046, %v1045
  %v1278 = vpack.c.b16 %v1048, %v1047
  %v1279 = vpack.c.b16 %v1050, %v1049
  %v1280 = vpack.c.b16 %v1052, %v1051
  %v1281 = vpack.c.b16 %v1054, %v1053
  %v1282 = vpack.c.b16 %v1056, %v1055
  %v1283 = vpack.c.b16 %v1058, %v1057
  %v1284 = vpack.c.b16 %v1060, %v1059
  %v1285 = vpack.c.b16 %v1062, %v1061
  %v1286 = vpack.c.b16 %v1064, %v1063
  %v1287 = vpack.c.b16 %v1066, %v1065
  %v1288 = vpack.c.b16 %v1068, %v1067
  %v1289 = vpack.c.b16 %v1070, %v1069
  %v1290 = vpack.c.b16 %v1072, %v1071
  %v1291 = vpack.c.b16 %v1074, %v1073
  %v1292 = vpack.c.b16 %v1076, %v1075
  %v1293 = vpack.c.b16 %v1078, %v1077
  %v1294 = vpack.c.b16 %v1080, %v1079
  %v1295 = vpack.c.b16 %v1082, %v1081
  %v1296 = vpack.c.b16 %v1084, %v1083
  %v1297 = vpack.c.b16 %v1086, %v1085
  %v1298 = vpack.c.b16 %v1088, %v1087
  %v1299 = vpack.c.b16 %v1090, %v1089
  %v1300 = vpack.c.b16 %v1092, %v1091
  %v1301 = vpack.c.b16 %v1094, %v1093
  %v1302 = vpack.c.b16 %v1096, %v1095
  %v1303 = vpack.c.b16 %v1098, %v1097
  %v1304 = vpack.c.b16 %v1100, %v1099
  %v1305 = vpack.c.b16 %v1102, %v1101
  %v1306 = vpack.c.b16 %v1104, %v1103
  %v1307 = vpack.c.b16 %v1106, %v1105
  %v1308 = vpack.c.b16 %v1108, %v1107
  %v1309 = vpack.c.b16 %v1110, %v1109
  %v1310 = vpack.c.b16 %v1112, %v1111
  %v1311 = vpack.c.b16 %v1114, %v1113
  %v1312 = vpack.c.b16 %v1116, %v1115
  %v1313 = vpack.c.b16 %v1118, %v1117
  %v1314 = vpack.c.b16 %v1120, %v1119
  %v1315 = vpack.c.b16 %v1122, %v1121
  %v1316 = vpack.c.b16 %v1124, %v1123
  %v1317 = vpack.c.b16 %v1126, %v1125
  %v1318 = vpack.c.b16 %v1128, %v1127
  %v1319 = vpack.c.b16 %v1130, %v1129
  %v1320 = vpack.c.b16 %v1132, %v1131
  %v1321 = vpack.c.b16 %v1134, %v1133
  %v1322 = vpack.c.b16 %v1136, %v1135
  %v1323 = vpack.c.b16 %v1138, %v1137
  %v1324 = vpack.c.b16 %v1140, %v1139
  %v1325 = vpack.c.b16 %v1142, %v1141
  %v1326 = vpack.c.b16 %v1144, %v1143
  %v1327 = vpack.c.b16 %v1146, %v1145
  %v1328 = vpack.c.b16 %v1148, %v1147
  %v1329 = vpack.c.b16 %v1150, %v1149
  %v1330 = vpack.c.b16 %v1152, %v1151
  %v1331 = vpack.c.b16 %v1154, %v1153
  %v1332 = vpack.c.b16 %v1156, %v1155
  %v1333 = vpack.c.b16 %v1158, %v1157
  %v1334 = vpack.c.b16 %v1160, %v1159
  %v1335 = vpack.c.b16 %v1162, %v1161
  %v1336 = vpack.c.b16 %v1164, %v1163
  %v1337 = vpack.c.b16 %v1166, %v1165
  %v1338 = vpack.c.b16 %v1168, %v1167
  %v1339 = vpack.c.b16 %v1170, %v1169
  %v1340 = vpack.c.b16 %v1172, %v1171
  %v1341 = vpack.c.b16 %v1174, %v1173
  %v1342 = vpack.c.b16 %v1176, %v1175
  %v1343 = vpack.c.b16 %v1178, %v1177
  %v1344 = vpack.c.b16 %v1180, %v1179
  %v1345 = vpack.c.b16 %v1182, %v1181
  %v1346 = vpack.c.b16 %v1184, %v1183
  %v1347 = vpack.c.b16 %v1186, %v1185
  %v1348 = vpack.c.b16 %v1188, %v1187
  %v1349 = vpack.c.b16 %v1190, %v1189
  %v1350 = vpack.c.b16 %v1192, %v1191
  %v1351 = vpack.c.b16 %v1194, %v1193
  %v1352 = vpack.c.b16 %v1196, %v1195
  %v1353 = vpack.c.b16 %v1198, %v1197
  %v1354 = vpack.c.b16 %v1200, %v1199
  %v1355 = vpack.c.b16 %v1202, %v1201
  %v1356 = vpack.c.b16 %v1204, %v1203
  %v1357 = vpack.c.b16 %v1206, %v1205
  %v1358 = vpack.c.b16 %v1208, %v1207
  %v1359 = vpack.c.b16 %v1210, %v1209
  %v1360 = vpack.c.b16 %v1212, %v1211
  %v1361 = vpack.c.b16 %v1214, %v1213
  %v1362 = vpack.c.b16 %v1216, %v1215
  %v1363 = vpack.c.b16 %v1218, %v1217
  %v1364 = vpack.c.b16 %v1220, %v1219
  %v1365 = vpack.c.b16 %v1222, %v1221
  %v1366 = vpack.c.b16 %v1224, %v1223
  %v1367 = vpack.c.b16 %v1226, %v1225
  %v1368 = vpack.c.b16 %v1228, %v1227
  %v1369 = vpack.c.b16 %v1230, %v1229
  %v1370 = vpack.c.b16 %v1232, %v1231
  %v1371 = vpack.c.b16 %v1234, %v1233
  %v1372 = vpack.c.b16 %v1236, %v1235
  %v1373 = vpack.c.b16 %v1238, %v1237
  %v1374 = vpack.c.b16 %v1240, %v1239
  %v1375 = vpack.c.b16 %v1242, %v1241
  %v1376 = vpack.c.b16 %v1244, %v1243
  %v1377 = vpack.c.b16 %v1246, %v1245
  %v1378 = vpack.c.b16 %v1248, %v1247
  %v1379 = vpack.c.b16 %v1250, %v1249
  %v1380 = vpack.c.b16 %v1252, %v1251
  %1509 = vmatprep.subr.bf16.mxu0 0
  %1510 = vmatpush1.bf16.msra.mxu0 %v1253
  %1511 = vmatprep.subr.bf16.mxu0 0
  %1512 = vmatpush1.bf16.msra.mxu0 %v1254
  %1513 = vmatprep.subr.bf16.mxu0 0
  %1514 = vmatpush1.bf16.msra.mxu0 %v1255
  %1515 = vmatprep.subr.bf16.mxu0 0
  %1516 = vmatpush1.bf16.msra.mxu0 %v1256
  %1517 = vmatprep.subr.bf16.mxu0 0
  %1518 = vmatpush1.bf16.msra.mxu0 %v1257
  %1519 = vmatprep.subr.bf16.mxu0 0
  %1520 = vmatpush1.bf16.msra.mxu0 %v1258
  %1521 = vmatprep.subr.bf16.mxu0 0
  %1522 = vmatpush1.bf16.msra.mxu0 %v1259
  %1523 = vmatprep.subr.bf16.mxu0 0
  %1524 = vmatpush1.bf16.msra.mxu0 %v1260
  %1525 = vmatprep.subr.bf16.mxu0 0
  %1526 = vmatpush1.bf16.msra.mxu0 %v1261
  %1527 = vmatprep.subr.bf16.mxu0 0
  %1528 = vmatpush1.bf16.msra.mxu0 %v1262
  %1529 = vmatprep.subr.bf16.mxu0 0
  %1530 = vmatpush1.bf16.msra.mxu0 %v1263
  %1531 = vmatprep.subr.bf16.mxu0 0
  %1532 = vmatpush1.bf16.msra.mxu0 %v1264
  %1533 = vmatprep.subr.bf16.mxu0 0
  %1534 = vmatpush1.bf16.msra.mxu0 %v1265
  %1535 = vmatprep.subr.bf16.mxu0 0
  %1536 = vmatpush1.bf16.msra.mxu0 %v1266
  %1537 = vmatprep.subr.bf16.mxu0 0
  %1538 = vmatpush1.bf16.msra.mxu0 %v1267
  %1539 = vmatprep.subr.bf16.mxu0 0
  %1540 = vmatpush1.bf16.msra.mxu0 %v1268
  %1541 = vmatprep.mubr.bf16.mxu0 %v582
  %1542 = vmatmul.mubr.bf16.gmra.mrb[0].mxu0 %v581
  %v1543 = vpop.f32.mrb[0].mxu0
  %v1544 = vadd.f32 0.0, %v1543
  %v1545 = vpop.f32.mrb[0].mxu0
  %v1546 = vpop.f32.mrb[0].mxu0
  %v1547 = vadd.f32 0.0, %v1546
  %v1548 = vpop.f32.mrb[0].mxu0
  %1549 = vmatprep.mubr.bf16.mxu0 %v598
  %1550 = vmatmul.mubr.bf16.gmra.mrb[0].mxu0 %v597
  %v1551 = vpop.f32.mrb[0].mxu0
  %v1552 = vadd.f32 0.0, %v1551
  %v1553 = vpop.f32.mrb[0].mxu0
  %v1554 = vpop.f32.mrb[0].mxu0
  %v1555 = vadd.f32 0.0, %v1554
  %v1556 = vpop.f32.mrb[0].mxu0
  %1557 = vmatprep.mubr.bf16.mxu0 %v614
  %1558 = vmatmul.mubr.bf16.gmra.mrb[0].mxu0 %v613
  %v1559 = vpop.f32.mrb[0].mxu0
  %v1560 = vadd.f32 0.0, %v1559
  %v1561 = vpop.f32.mrb[0].mxu0
  %v1562 = vpop.f32.mrb[0].mxu0
  %v1563 = vadd.f32 0.0, %v1562
  %v1564 = vpop.f32.mrb[0].mxu0
  %1565 = vmatprep.mubr.bf16.mxu0 %v630
  %1566 = vmatmul.mubr.bf16.gmra.mrb[0].mxu0 %v629
  %v1567 = vpop.f32.mrb[0].mxu0
  %v1568 = vadd.f32 0.0, %v1567
  %v1569 = vpop.f32.mrb[0].mxu0
  %v1570 = vpop.f32.mrb[0].mxu0
  %v1571 = vadd.f32 0.0, %v1570
  %v1572 = vpop.f32.mrb[0].mxu0
  %1573 = vmatprep.mubr.bf16.mxu0 %v646
  %1574 = vmatmul.mubr.bf16.gmra.mrb[0].mxu0 %v645
  %v1575 = vpop.f32.mrb[0].mxu0
  %v1576 = vadd.f32 0.0, %v1575
  %v1577 = vpop.f32.mrb[0].mxu0
  %v1578 = vpop.f32.mrb[0].mxu0
  %v1579 = vpop.f32.mrb[0].mxu0
  %1580 = vdwg.mxu0
  %1581 = vmatprep.subr.bf16.mxu0 0
  %1582 = vmatpush1.bf16.msra.mxu0 %v1269
  %1583 = vmatprep.subr.bf16.mxu0 0
  %1584 = vmatpush1.bf16.msra.mxu0 %v1270
  %1585 = vmatprep.subr.bf16.mxu0 0
  %1586 = vmatpush1.bf16.msra.mxu0 %v1271
  %1587 = vmatprep.subr.bf16.mxu0 0
  %1588 = vmatpush1.bf16.msra.mxu0 %v1272
  %1589 = vmatprep.subr.bf16.mxu0 0
  %1590 = vmatpush1.bf16.msra.mxu0 %v1273
  %1591 = vmatprep.subr.bf16.mxu0 0
  %1592 = vmatpush1.bf16.msra.mxu0 %v1274
  %1593 = vmatprep.subr.bf16.mxu0 0
  %1594 = vmatpush1.bf16.msra.mxu0 %v1275
  %1595 = vmatprep.subr.bf16.mxu0 0
  %1596 = vmatpush1.bf16.msra.mxu0 %v1276
  %1597 = vmatprep.subr.bf16.mxu0 0
  %1598 = vmatpush1.bf16.msra.mxu0 %v1277
  %1599 = vmatprep.subr.bf16.mxu0 0
  %1600 = vmatpush1.bf16.msra.mxu0 %v1278
  %1601 = vmatprep.subr.bf16.mxu0 0
  %1602 = vmatpush1.bf16.msra.mxu0 %v1279
  %1603 = vmatprep.subr.bf16.mxu0 0
  %1604 = vmatpush1.bf16.msra.mxu0 %v1280
  %1605 = vmatprep.subr.bf16.mxu0 0
  %1606 = vmatpush1.bf16.msra.mxu0 %v1281
  %1607 = vmatprep.subr.bf16.mxu0 0
  %1608 = vmatpush1.bf16.msra.mxu0 %v1282
  %1609 = vmatprep.subr.bf16.mxu0 0
  %1610 = vmatpush1.bf16.msra.mxu0 %v1283
  %1611 = vmatprep.subr.bf16.mxu0 0
  %1612 = vmatpush1.bf16.msra.mxu0 %v1284
  %1613 = vmatprep.mubr.bf16.mxu0 %v584
  %1614 = vmatmul.mubr.bf16.gmra.mrb[0].mxu0 %v583
  %v1615 = vpop.f32.mrb[0].mxu0
  %v1616 = vadd.f32 %v1544, %v1615
  %v1617 = vpop.f32.mrb[0].mxu0
  %v1618 = vpop.f32.mrb[0].mxu0
  %v1619 = vadd.f32 %v1547, %v1618
  %v1620 = vpop.f32.mrb[0].mxu0
  %1621 = vmatprep.mubr.bf16.mxu0 %v600
  %1622 = vmatmul.mubr.bf16.gmra.mrb[0].mxu0 %v599
  %v1623 = vpop.f32.mrb[0].mxu0
  %v1624 = vadd.f32 %v1552, %v1623
  %v1625 = vpop.f32.mrb[0].mxu0
  %v1626 = vpop.f32.mrb[0].mxu0
  %v1627 = vadd.f32 %v1555, %v1626
  %v1628 = vpop.f32.mrb[0].mxu0
  %1629 = vmatprep.mubr.bf16.mxu0 %v616
  %1630 = vmatmul.mubr.bf16.gmra.mrb[0].mxu0 %v615
  %v1631 = vpop.f32.mrb[0].mxu0
  %v1632 = vadd.f32 %v1560, %v1631
  %v1633 = vpop.f32.mrb[0].mxu0
  %v1634 = vpop.f32.mrb[0].mxu0
  %v1635 = vadd.f32 %v1563, %v1634
  %v1636 = vpop.f32.mrb[0].mxu0
  %1637 = vmatprep.mubr.bf16.mxu0 %v632
  %1638 = vmatmul.mubr.bf16.gmra.mrb[0].mxu0 %v631
  %v1639 = vpop.f32.mrb[0].mxu0
  %v1640 = vadd.f32 %v1568, %v1639
  %v1641 = vpop.f32.mrb[0].mxu0
  %v1642 = vpop.f32.mrb[0].mxu0
  %v1643 = vadd.f32 %v1571, %v1642
  %v1644 = vpop.f32.mrb[0].mxu0
  %1645 = vmatprep.mubr.bf16.mxu0 %v648
  %1646 = vmatmul.mubr.bf16.gmra.mrb[0].mxu0 %v647
  %v1647 = vpop.f32.mrb[0].mxu0
  %v1648 = vadd.f32 %v1576, %v1647
  %v1649 = vpop.f32.mrb[0].mxu0
  %v1650 = vpop.f32.mrb[0].mxu0
  %v1651 = vpop.f32.mrb[0].mxu0
  %1652 = vdwg.mxu0
  %1653 = vmatprep.subr.bf16.mxu0 0
  %1654 = vmatpush1.bf16.msra.mxu0 %v1285
  %1655 = vmatprep.subr.bf16.mxu0 0
  %1656 = vmatpush1.bf16.msra.mxu0 %v1286
  %1657 = vmatprep.subr.bf16.mxu0 0
  %1658 = vmatpush1.bf16.msra.mxu0 %v1287
  %1659 = vmatprep.subr.bf16.mxu0 0
  %1660 = vmatpush1.bf16.msra.mxu0 %v1288
  %1661 = vmatprep.subr.bf16.mxu0 0
  %1662 = vmatpush1.bf16.msra.mxu0 %v1289
  %1663 = vmatprep.subr.bf16.mxu0 0
  %1664 = vmatpush1.bf16.msra.mxu0 %v1290
  %1665 = vmatprep.subr.bf16.mxu0 0
  %1666 = vmatpush1.bf16.msra.mxu0 %v1291
  %1667 = vmatprep.subr.bf16.mxu0 0
  %1668 = vmatpush1.bf16.msra.mxu0 %v1292
  %1669 = vmatprep.subr.bf16.mxu0 0
  %1670 = vmatpush1.bf16.msra.mxu0 %v1293
  %1671 = vmatprep.subr.bf16.mxu0 0
  %1672 = vmatpush1.bf16.msra.mxu0 %v1294
  %1673 = vmatprep.subr.bf16.mxu0 0
  %1674 = vmatpush1.bf16.msra.mxu0 %v1295
  %1675 = vmatprep.subr.bf16.mxu0 0
  %1676 = vmatpush1.bf16.msra.mxu0 %v1296
  %1677 = vmatprep.subr.bf16.mxu0 0
  %1678 = vmatpush1.bf16.msra.mxu0 %v1297
  %1679 = vmatprep.subr.bf16.mxu0 0
  %1680 = vmatpush1.bf16.msra.mxu0 %v1298
  %1681 = vmatprep.subr.bf16.mxu0 0
  %1682 = vmatpush1.bf16.msra.mxu0 %v1299
  %1683 = vmatprep.subr.bf16.mxu0 0
  %1684 = vmatpush1.bf16.msra.mxu0 %v1300
  %1685 = vmatprep.mubr.bf16.mxu0 %v586
  %1686 = vmatmul.mubr.bf16.gmra.mrb[0].mxu0 %v585
  %v1687 = vpop.f32.mrb[0].mxu0
  %v1688 = vadd.f32 %v1616, %v1687
  %v1689 = vpop.f32.mrb[0].mxu0
  %v1690 = vpop.f32.mrb[0].mxu0
  %v1691 = vadd.f32 %v1619, %v1690
  %v1692 = vpop.f32.mrb[0].mxu0
  %1693 = vmatprep.mubr.bf16.mxu0 %v602
  %1694 = vmatmul.mubr.bf16.gmra.mrb[0].mxu0 %v601
  %v1695 = vpop.f32.mrb[0].mxu0
  %v1696 = vadd.f32 %v1624, %v1695
  %v1697 = vpop.f32.mrb[0].mxu0
  %v1698 = vpop.f32.mrb[0].mxu0
  %v1699 = vadd.f32 %v1627, %v1698
  %v1700 = vpop.f32.mrb[0].mxu0
  %1701 = vmatprep.mubr.bf16.mxu0 %v618
  %1702 = vmatmul.mubr.bf16.gmra.mrb[0].mxu0 %v617
  %v1703 = vpop.f32.mrb[0].mxu0
  %v1704 = vadd.f32 %v1632, %v1703
  %v1705 = vpop.f32.mrb[0].mxu0
  %v1706 = vpop.f32.mrb[0].mxu0
  %v1707 = vadd.f32 %v1635, %v1706
  %v1708 = vpop.f32.mrb[0].mxu0
  %1709 = vmatprep.mubr.bf16.mxu0 %v634
  %1710 = vmatmul.mubr.bf16.gmra.mrb[0].mxu0 %v633
  %v1711 = vpop.f32.mrb[0].mxu0
  %v1712 = vadd.f32 %v1640, %v1711
  %v1713 = vpop.f32.mrb[0].mxu0
  %v1714 = vpop.f32.mrb[0].mxu0
  %v1715 = vadd.f32 %v1643, %v1714
  %v1716 = vpop.f32.mrb[0].mxu0
  %1717 = vmatprep.mubr.bf16.mxu0 %v650
  %1718 = vmatmul.mubr.bf16.gmra.mrb[0].mxu0 %v649
  %v1719 = vpop.f32.mrb[0].mxu0
  %v1720 = vadd.f32 %v1648, %v1719
  %v1721 = vpop.f32.mrb[0].mxu0
  %v1722 = vpop.f32.mrb[0].mxu0
  %v1723 = vpop.f32.mrb[0].mxu0
  %1724 = vdwg.mxu0
  %1725 = vmatprep.subr.bf16.mxu0 0
  %1726 = vmatpush1.bf16.msra.mxu0 %v1301
  %1727 = vmatprep.subr.bf16.mxu0 0
  %1728 = vmatpush1.bf16.msra.mxu0 %v1302
  %1729 = vmatprep.subr.bf16.mxu0 0
  %1730 = vmatpush1.bf16.msra.mxu0 %v1303
  %1731 = vmatprep.subr.bf16.mxu0 0
  %1732 = vmatpush1.bf16.msra.mxu0 %v1304
  %1733 = vmatprep.subr.bf16.mxu0 0
  %1734 = vmatpush1.bf16.msra.mxu0 %v1305
  %1735 = vmatprep.subr.bf16.mxu0 0
  %1736 = vmatpush1.bf16.msra.mxu0 %v1306
  %1737 = vmatprep.subr.bf16.mxu0 0
  %1738 = vmatpush1.bf16.msra.mxu0 %v1307
  %1739 = vmatprep.subr.bf16.mxu0 0
  %1740 = vmatpush1.bf16.msra.mxu0 %v1308
  %1741 = vmatprep.subr.bf16.mxu0 0
  %1742 = vmatpush1.bf16.msra.mxu0 %v1309
  %1743 = vmatprep.subr.bf16.mxu0 0
  %1744 = vmatpush1.bf16.msra.mxu0 %v1310
  %1745 = vmatprep.subr.bf16.mxu0 0
  %1746 = vmatpush1.bf16.msra.mxu0 %v1311
  %1747 = vmatprep.subr.bf16.mxu0 0
  %1748 = vmatpush1.bf16.msra.mxu0 %v1312
  %1749 = vmatprep.subr.bf16.mxu0 0
  %1750 = vmatpush1.bf16.msra.mxu0 %v1313
  %1751 = vmatprep.subr.bf16.mxu0 0
  %1752 = vmatpush1.bf16.msra.mxu0 %v1314
  %1753 = vmatprep.subr.bf16.mxu0 0
  %1754 = vmatpush1.bf16.msra.mxu0 %v1315
  %1755 = vmatprep.subr.bf16.mxu0 0
  %1756 = vmatpush1.bf16.msra.mxu0 %v1316
  %1757 = vmatprep.mubr.bf16.mxu0 %v588
  %1758 = vmatmul.mubr.bf16.gmra.mrb[0].mxu0 %v587
  %v1759 = vpop.f32.mrb[0].mxu0
  %v1760 = vadd.f32 %v1688, %v1759
  %v1761 = vpop.f32.mrb[0].mxu0
  %v1762 = vpop.f32.mrb[0].mxu0
  %v1763 = vadd.f32 %v1691, %v1762
  %v1764 = vpop.f32.mrb[0].mxu0
  %1765 = vmatprep.mubr.bf16.mxu0 %v604
  %1766 = vmatmul.mubr.bf16.gmra.mrb[0].mxu0 %v603
  %v1767 = vpop.f32.mrb[0].mxu0
  %v1768 = vadd.f32 %v1696, %v1767
  %v1769 = vpop.f32.mrb[0].mxu0
  %v1770 = vpop.f32.mrb[0].mxu0
  %v1771 = vadd.f32 %v1699, %v1770
  %v1772 = vpop.f32.mrb[0].mxu0
  %1773 = vmatprep.mubr.bf16.mxu0 %v620
  %1774 = vmatmul.mubr.bf16.gmra.mrb[0].mxu0 %v619
  %v1775 = vpop.f32.mrb[0].mxu0
  %v1776 = vadd.f32 %v1704, %v1775
  %v1777 = vpop.f32.mrb[0].mxu0
  %v1778 = vpop.f32.mrb[0].mxu0
  %v1779 = vadd.f32 %v1707, %v1778
  %v1780 = vpop.f32.mrb[0].mxu0
  %1781 = vmatprep.mubr.bf16.mxu0 %v636
  %1782 = vmatmul.mubr.bf16.gmra.mrb[0].mxu0 %v635
  %v1783 = vpop.f32.mrb[0].mxu0
  %v1784 = vadd.f32 %v1712, %v1783
  %v1785 = vpop.f32.mrb[0].mxu0
  %v1786 = vpop.f32.mrb[0].mxu0
  %v1787 = vadd.f32 %v1715, %v1786
  %v1788 = vpop.f32.mrb[0].mxu0
  %1789 = vmatprep.mubr.bf16.mxu0 %v652
  %1790 = vmatmul.mubr.bf16.gmra.mrb[0].mxu0 %v651
  %v1791 = vpop.f32.mrb[0].mxu0
  %v1792 = vadd.f32 %v1720, %v1791
  %v1793 = vpop.f32.mrb[0].mxu0
  %v1794 = vpop.f32.mrb[0].mxu0
  %v1795 = vpop.f32.mrb[0].mxu0
  %1796 = vdwg.mxu0
  %1797 = vmatprep.subr.bf16.mxu0 0
  %1798 = vmatpush1.bf16.msra.mxu0 %v1317
  %1799 = vmatprep.subr.bf16.mxu0 0
  %1800 = vmatpush1.bf16.msra.mxu0 %v1318
  %1801 = vmatprep.subr.bf16.mxu0 0
  %1802 = vmatpush1.bf16.msra.mxu0 %v1319
  %1803 = vmatprep.subr.bf16.mxu0 0
  %1804 = vmatpush1.bf16.msra.mxu0 %v1320
  %1805 = vmatprep.subr.bf16.mxu0 0
  %1806 = vmatpush1.bf16.msra.mxu0 %v1321
  %1807 = vmatprep.subr.bf16.mxu0 0
  %1808 = vmatpush1.bf16.msra.mxu0 %v1322
  %1809 = vmatprep.subr.bf16.mxu0 0
  %1810 = vmatpush1.bf16.msra.mxu0 %v1323
  %1811 = vmatprep.subr.bf16.mxu0 0
  %1812 = vmatpush1.bf16.msra.mxu0 %v1324
  %1813 = vmatprep.subr.bf16.mxu0 0
  %1814 = vmatpush1.bf16.msra.mxu0 %v1325
  %1815 = vmatprep.subr.bf16.mxu0 0
  %1816 = vmatpush1.bf16.msra.mxu0 %v1326
  %1817 = vmatprep.subr.bf16.mxu0 0
  %1818 = vmatpush1.bf16.msra.mxu0 %v1327
  %1819 = vmatprep.subr.bf16.mxu0 0
  %1820 = vmatpush1.bf16.msra.mxu0 %v1328
  %1821 = vmatprep.subr.bf16.mxu0 0
  %1822 = vmatpush1.bf16.msra.mxu0 %v1329
  %1823 = vmatprep.subr.bf16.mxu0 0
  %1824 = vmatpush1.bf16.msra.mxu0 %v1330
  %1825 = vmatprep.subr.bf16.mxu0 0
  %1826 = vmatpush1.bf16.msra.mxu0 %v1331
  %1827 = vmatprep.subr.bf16.mxu0 0
  %1828 = vmatpush1.bf16.msra.mxu0 %v1332
  %1829 = vmatprep.mubr.bf16.mxu0 %v590
  %1830 = vmatmul.mubr.bf16.gmra.mrb[0].mxu0 %v589
  %v1831 = vpop.f32.mrb[0].mxu0
  %v1832 = vadd.f32 %v1760, %v1831
  %v1833 = vpop.f32.mrb[0].mxu0
  %v1834 = vpop.f32.mrb[0].mxu0
  %v1835 = vadd.f32 %v1763, %v1834
  %v1836 = vpop.f32.mrb[0].mxu0
  %1837 = vmatprep.mubr.bf16.mxu0 %v606
  %1838 = vmatmul.mubr.bf16.gmra.mrb[0].mxu0 %v605
  %v1839 = vpop.f32.mrb[0].mxu0
  %v1840 = vadd.f32 %v1768, %v1839
  %v1841 = vpop.f32.mrb[0].mxu0
  %v1842 = vpop.f32.mrb[0].mxu0
  %v1843 = vadd.f32 %v1771, %v1842
  %v1844 = vpop.f32.mrb[0].mxu0
  %1845 = vmatprep.mubr.bf16.mxu0 %v622
  %1846 = vmatmul.mubr.bf16.gmra.mrb[0].mxu0 %v621
  %v1847 = vpop.f32.mrb[0].mxu0
  %v1848 = vadd.f32 %v1776, %v1847
  %v1849 = vpop.f32.mrb[0].mxu0
  %v1850 = vpop.f32.mrb[0].mxu0
  %v1851 = vadd.f32 %v1779, %v1850
  %v1852 = vpop.f32.mrb[0].mxu0
  %1853 = vmatprep.mubr.bf16.mxu0 %v638
  %1854 = vmatmul.mubr.bf16.gmra.mrb[0].mxu0 %v637
  %v1855 = vpop.f32.mrb[0].mxu0
  %v1856 = vadd.f32 %v1784, %v1855
  %v1857 = vpop.f32.mrb[0].mxu0
  %v1858 = vpop.f32.mrb[0].mxu0
  %v1859 = vadd.f32 %v1787, %v1858
  %v1860 = vpop.f32.mrb[0].mxu0
  %1861 = vmatprep.mubr.bf16.mxu0 %v654
  %1862 = vmatmul.mubr.bf16.gmra.mrb[0].mxu0 %v653
  %v1863 = vpop.f32.mrb[0].mxu0
  %v1864 = vadd.f32 %v1792, %v1863
  %v1865 = vpop.f32.mrb[0].mxu0
  %v1866 = vpop.f32.mrb[0].mxu0
  %v1867 = vpop.f32.mrb[0].mxu0
  %1868 = vdwg.mxu0
  %1869 = vmatprep.subr.bf16.mxu0 0
  %1870 = vmatpush1.bf16.msra.mxu0 %v1333
  %1871 = vmatprep.subr.bf16.mxu0 0
  %1872 = vmatpush1.bf16.msra.mxu0 %v1334
  %1873 = vmatprep.subr.bf16.mxu0 0
  %1874 = vmatpush1.bf16.msra.mxu0 %v1335
  %1875 = vmatprep.subr.bf16.mxu0 0
  %1876 = vmatpush1.bf16.msra.mxu0 %v1336
  %1877 = vmatprep.subr.bf16.mxu0 0
  %1878 = vmatpush1.bf16.msra.mxu0 %v1337
  %1879 = vmatprep.subr.bf16.mxu0 0
  %1880 = vmatpush1.bf16.msra.mxu0 %v1338
  %1881 = vmatprep.subr.bf16.mxu0 0
  %1882 = vmatpush1.bf16.msra.mxu0 %v1339
  %1883 = vmatprep.subr.bf16.mxu0 0
  %1884 = vmatpush1.bf16.msra.mxu0 %v1340
  %1885 = vmatprep.subr.bf16.mxu0 0
  %1886 = vmatpush1.bf16.msra.mxu0 %v1341
  %1887 = vmatprep.subr.bf16.mxu0 0
  %1888 = vmatpush1.bf16.msra.mxu0 %v1342
  %1889 = vmatprep.subr.bf16.mxu0 0
  %1890 = vmatpush1.bf16.msra.mxu0 %v1343
  %1891 = vmatprep.subr.bf16.mxu0 0
  %1892 = vmatpush1.bf16.msra.mxu0 %v1344
  %1893 = vmatprep.subr.bf16.mxu0 0
  %1894 = vmatpush1.bf16.msra.mxu0 %v1345
  %1895 = vmatprep.subr.bf16.mxu0 0
  %1896 = vmatpush1.bf16.msra.mxu0 %v1346
  %1897 = vmatprep.subr.bf16.mxu0 0
  %1898 = vmatpush1.bf16.msra.mxu0 %v1347
  %1899 = vmatprep.subr.bf16.mxu0 0
  %1900 = vmatpush1.bf16.msra.mxu0 %v1348
  %1901 = vmatprep.mubr.bf16.mxu0 %v592
  %1902 = vmatmul.mubr.bf16.gmra.mrb[0].mxu0 %v591
  %v1903 = vpop.f32.mrb[0].mxu0
  %v1904 = vadd.f32 %v1832, %v1903
  %v1905 = vpop.f32.mrb[0].mxu0
  %v1906 = vpop.f32.mrb[0].mxu0
  %v1907 = vadd.f32 %v1835, %v1906
  %v1908 = vpop.f32.mrb[0].mxu0
  %1909 = vmatprep.mubr.bf16.mxu0 %v608
  %1910 = vmatmul.mubr.bf16.gmra.mrb[0].mxu0 %v607
  %v1911 = vpop.f32.mrb[0].mxu0
  %v1912 = vadd.f32 %v1840, %v1911
  %v1913 = vpop.f32.mrb[0].mxu0
  %v1914 = vpop.f32.mrb[0].mxu0
  %v1915 = vadd.f32 %v1843, %v1914
  %v1916 = vpop.f32.mrb[0].mxu0
  %1917 = vmatprep.mubr.bf16.mxu0 %v624
  %1918 = vmatmul.mubr.bf16.gmra.mrb[0].mxu0 %v623
  %v1919 = vpop.f32.mrb[0].mxu0
  %v1920 = vadd.f32 %v1848, %v1919
  %v1921 = vpop.f32.mrb[0].mxu0
  %v1922 = vpop.f32.mrb[0].mxu0
  %v1923 = vadd.f32 %v1851, %v1922
  %v1924 = vpop.f32.mrb[0].mxu0
  %1925 = vmatprep.mubr.bf16.mxu0 %v640
  %1926 = vmatmul.mubr.bf16.gmra.mrb[0].mxu0 %v639
  %v1927 = vpop.f32.mrb[0].mxu0
  %v1928 = vadd.f32 %v1856, %v1927
  %v1929 = vpop.f32.mrb[0].mxu0
  %v1930 = vpop.f32.mrb[0].mxu0
  %v1931 = vadd.f32 %v1859, %v1930
  %v1932 = vpop.f32.mrb[0].mxu0
  %1933 = vmatprep.mubr.bf16.mxu0 %v656
  %1934 = vmatmul.mubr.bf16.gmra.mrb[0].mxu0 %v655
  %v1935 = vpop.f32.mrb[0].mxu0
  %v1936 = vadd.f32 %v1864, %v1935
  %v1937 = vpop.f32.mrb[0].mxu0
  %v1938 = vpop.f32.mrb[0].mxu0
  %v1939 = vpop.f32.mrb[0].mxu0
  %1940 = vdwg.mxu0
  %1941 = vmatprep.subr.bf16.mxu0 0
  %1942 = vmatpush1.bf16.msra.mxu0 %v1349
  %1943 = vmatprep.subr.bf16.mxu0 0
  %1944 = vmatpush1.bf16.msra.mxu0 %v1350
  %1945 = vmatprep.subr.bf16.mxu0 0
  %1946 = vmatpush1.bf16.msra.mxu0 %v1351
  %1947 = vmatprep.subr.bf16.mxu0 0
  %1948 = vmatpush1.bf16.msra.mxu0 %v1352
  %1949 = vmatprep.subr.bf16.mxu0 0
  %1950 = vmatpush1.bf16.msra.mxu0 %v1353
  %1951 = vmatprep.subr.bf16.mxu0 0
  %1952 = vmatpush1.bf16.msra.mxu0 %v1354
  %1953 = vmatprep.subr.bf16.mxu0 0
  %1954 = vmatpush1.bf16.msra.mxu0 %v1355
  %1955 = vmatprep.subr.bf16.mxu0 0
  %1956 = vmatpush1.bf16.msra.mxu0 %v1356
  %1957 = vmatprep.subr.bf16.mxu0 0
  %1958 = vmatpush1.bf16.msra.mxu0 %v1357
  %1959 = vmatprep.subr.bf16.mxu0 0
  %1960 = vmatpush1.bf16.msra.mxu0 %v1358
  %1961 = vmatprep.subr.bf16.mxu0 0
  %1962 = vmatpush1.bf16.msra.mxu0 %v1359
  %1963 = vmatprep.subr.bf16.mxu0 0
  %1964 = vmatpush1.bf16.msra.mxu0 %v1360
  %1965 = vmatprep.subr.bf16.mxu0 0
  %1966 = vmatpush1.bf16.msra.mxu0 %v1361
  %1967 = vmatprep.subr.bf16.mxu0 0
  %1968 = vmatpush1.bf16.msra.mxu0 %v1362
  %1969 = vmatprep.subr.bf16.mxu0 0
  %1970 = vmatpush1.bf16.msra.mxu0 %v1363
  %1971 = vmatprep.subr.bf16.mxu0 0
  %1972 = vmatpush1.bf16.msra.mxu0 %v1364
  %1973 = vmatprep.mubr.bf16.mxu0 %v594
  %1974 = vmatmul.mubr.bf16.gmra.mrb[0].mxu0 %v593
  %v1975 = vpop.f32.mrb[0].mxu0
  %v1976 = vadd.f32 %v1904, %v1975
  %v1977 = vpop.f32.mrb[0].mxu0
  %v1978 = vpop.f32.mrb[0].mxu0
  %v1979 = vadd.f32 %v1907, %v1978
  %v1980 = vpop.f32.mrb[0].mxu0
  %1981 = vmatprep.mubr.bf16.mxu0 %v610
  %1982 = vmatmul.mubr.bf16.gmra.mrb[0].mxu0 %v609
  %v1983 = vpop.f32.mrb[0].mxu0
  %v1984 = vadd.f32 %v1912, %v1983
  %v1985 = vpop.f32.mrb[0].mxu0
  %v1986 = vpop.f32.mrb[0].mxu0
  %v1987 = vadd.f32 %v1915, %v1986
  %v1988 = vpop.f32.mrb[0].mxu0
  %1989 = vmatprep.mubr.bf16.mxu0 %v626
  %1990 = vmatmul.mubr.bf16.gmra.mrb[0].mxu0 %v625
  %v1991 = vpop.f32.mrb[0].mxu0
  %v1992 = vadd.f32 %v1920, %v1991
  %v1993 = vpop.f32.mrb[0].mxu0
  %v1994 = vpop.f32.mrb[0].mxu0
  %v1995 = vadd.f32 %v1923, %v1994
  %v1996 = vpop.f32.mrb[0].mxu0
  %1997 = vmatprep.mubr.bf16.mxu0 %v642
  %1998 = vmatmul.mubr.bf16.gmra.mrb[0].mxu0 %v641
  %v1999 = vpop.f32.mrb[0].mxu0
  %v2000 = vadd.f32 %v1928, %v1999
  %v2001 = vpop.f32.mrb[0].mxu0
  %v2002 = vpop.f32.mrb[0].mxu0
  %v2003 = vadd.f32 %v1931, %v2002
  %v2004 = vpop.f32.mrb[0].mxu0
  %2005 = vmatprep.mubr.bf16.mxu0 %v658
  %2006 = vmatmul.mubr.bf16.gmra.mrb[0].mxu0 %v657
  %v2007 = vpop.f32.mrb[0].mxu0
  %v2008 = vadd.f32 %v1936, %v2007
  %v2009 = vpop.f32.mrb[0].mxu0
  %v2010 = vpop.f32.mrb[0].mxu0
  %v2011 = vpop.f32.mrb[0].mxu0
  %2012 = vdwg.mxu0
  %2013 = vmatprep.subr.bf16.mxu0 0
  %2014 = vmatpush1.bf16.msra.mxu0 %v1365
  %2015 = vmatprep.subr.bf16.mxu0 0
  %2016 = vmatpush1.bf16.msra.mxu0 %v1366
  %2017 = vmatprep.subr.bf16.mxu0 0
  %2018 = vmatpush1.bf16.msra.mxu0 %v1367
  %2019 = vmatprep.subr.bf16.mxu0 0
  %2020 = vmatpush1.bf16.msra.mxu0 %v1368
  %2021 = vmatprep.subr.bf16.mxu0 0
  %2022 = vmatpush1.bf16.msra.mxu0 %v1369
  %2023 = vmatprep.subr.bf16.mxu0 0
  %2024 = vmatpush1.bf16.msra.mxu0 %v1370
  %2025 = vmatprep.subr.bf16.mxu0 0
  %2026 = vmatpush1.bf16.msra.mxu0 %v1371
  %2027 = vmatprep.subr.bf16.mxu0 0
  %2028 = vmatpush1.bf16.msra.mxu0 %v1372
  %2029 = vmatprep.subr.bf16.mxu0 0
  %2030 = vmatpush1.bf16.msra.mxu0 %v1373
  %2031 = vmatprep.subr.bf16.mxu0 0
  %2032 = vmatpush1.bf16.msra.mxu0 %v1374
  %2033 = vmatprep.subr.bf16.mxu0 0
  %2034 = vmatpush1.bf16.msra.mxu0 %v1375
  %2035 = vmatprep.subr.bf16.mxu0 0
  %2036 = vmatpush1.bf16.msra.mxu0 %v1376
  %2037 = vmatprep.subr.bf16.mxu0 0
  %2038 = vmatpush1.bf16.msra.mxu0 %v1377
  %2039 = vmatprep.subr.bf16.mxu0 0
  %2040 = vmatpush1.bf16.msra.mxu0 %v1378
  %2041 = vmatprep.subr.bf16.mxu0 0
  %2042 = vmatpush1.bf16.msra.mxu0 %v1379
  %2043 = vmatprep.subr.bf16.mxu0 0
  %2044 = vmatpush1.bf16.msra.mxu0 %v1380
  %2045 = vmatprep.mubr.bf16.mxu0 %v596
  %2046 = vmatmul.mubr.bf16.gmra.mrb[0].mxu0 %v595
  %v2047 = vpop.f32.mrb[0].mxu0
  %v2048 = vadd.f32 %v1976, %v2047
  %v2049 = vpop.f32.mrb[0].mxu0
  %v2050 = vpop.f32.mrb[0].mxu0
  %v2051 = vadd.f32 %v1979, %v2050
  %v2052 = vpop.f32.mrb[0].mxu0
  %2053 = vmatprep.mubr.bf16.mxu0 %v612
  %2054 = vmatmul.mubr.bf16.gmra.mrb[0].mxu0 %v611
  %v2055 = vpop.f32.mrb[0].mxu0
  %v2056 = vadd.f32 %v1984, %v2055
  %v2057 = vpop.f32.mrb[0].mxu0
  %v2058 = vpop.f32.mrb[0].mxu0
  %v2059 = vadd.f32 %v1987, %v2058
  %v2060 = vpop.f32.mrb[0].mxu0
  %2061 = vmatprep.mubr.bf16.mxu0 %v628
  %2062 = vmatmul.mubr.bf16.gmra.mrb[0].mxu0 %v627
  %v2063 = vpop.f32.mrb[0].mxu0
  %v2064 = vadd.f32 %v1992, %v2063
  %v2065 = vpop.f32.mrb[0].mxu0
  %v2066 = vpop.f32.mrb[0].mxu0
  %v2067 = vadd.f32 %v1995, %v2066
  %v2068 = vpop.f32.mrb[0].mxu0
  %2069 = vmatprep.mubr.bf16.mxu0 %v644
  %2070 = vmatmul.mubr.bf16.gmra.mrb[0].mxu0 %v643
  %v2071 = vpop.f32.mrb[0].mxu0
  %v2072 = vadd.f32 %v2000, %v2071
  %v2073 = vpop.f32.mrb[0].mxu0
  %v2074 = vpop.f32.mrb[0].mxu0
  %v2075 = vadd.f32 %v2003, %v2074
  %v2076 = vpop.f32.mrb[0].mxu0
  %2077 = vmatprep.mubr.bf16.mxu0 %v660
  %2078 = vmatmul.mubr.bf16.gmra.mrb[0].mxu0 %v659
  %v2079 = vpop.f32.mrb[0].mxu0
  %v2080 = vadd.f32 %v2008, %v2079
  %v2081 = vpop.f32.mrb[0].mxu0
  %v2082 = vpop.f32.mrb[0].mxu0
  %v2083 = vpop.f32.mrb[0].mxu0
  %2084 = vdwg.mxu0
  %v2085 = vadd.f32 %v28, %v2048
  %v2086 = vadd.f32 %v29, %v2051
  %v2087 = vadd.f32 %v30, %v2056
  %v2088 = vadd.f32 %v31, %v2059
  %v2089 = vadd.f32 %v32, %v2064
  %v2090 = vadd.f32 %v33, %v2067
  %v2091 = vadd.f32 %v34, %v2072
  %v2092 = vadd.f32 %v35, %v2075
  %v2093 = vadd.f32 %v36, %v2080
  %2094 = vst [vmem:[#allocation2] sm:$0xff] %v2085
  %2095 = vst [vmem:[#allocation2 + $0x8] sm:$0xff] %v2086
  %2096 = vst [vmem:[#allocation2 + $0x10] sm:$0xff] %v2087
  %2097 = vst [vmem:[#allocation2 + $0x18] sm:$0xff] %v2088
  %2098 = vst [vmem:[#allocation2 + $0x20] sm:$0xff] %v2089
  %2099 = vst [vmem:[#allocation2 + $0x28] sm:$0xff] %v2090
  %2100 = vst [vmem:[#allocation2 + $0x30] sm:$0xff] %v2091
  %2101 = vst [vmem:[#allocation2 + $0x38] sm:$0xff] %v2092
  %2102 = vst [vmem:[#allocation2 + $0x40] sm:$0xff] %v2093
  // Predicated region
  $region18: #{neural_network_forward.5} parent=0 // pred_check
    %p2103 = pneg %p15
  $region19: #{neural_network_forward.5} parent=0 // pred_check_branch
    %2105 = sbr.rel (%p2103) target = $region21
  $region20: #{neural_network_forward.5} parent=0 // pred_region
    %v2106 = vld [vmem:[#allocation2] sm:$0xff]
    %v2107 = vld [vmem:[#allocation2 + $0x8] sm:$0xff]
    %v2108 = vld [vmem:[#allocation2 + $0x10] sm:$0xff]
    %v2109 = vld [vmem:[#allocation2 + $0x18] sm:$0xff]
    %v2110 = vld [vmem:[#allocation2 + $0x20] sm:$0xff]
    %v2111 = vld [vmem:[#allocation2 + $0x28] sm:$0xff]
    %v2112 = vld [vmem:[#allocation2 + $0x30] sm:$0xff]
    %v2113 = vld [vmem:[#allocation2 + $0x38] sm:$0xff]
    %v2114 = vld [vmem:[#allocation2 + $0x40] sm:$0xff]
    %v2115 = vld [vmem:[%s2] sm:$0x1]
    %v2117 = vlaneseq
    %v2118 = vshrl.u32 %v2117, 7
    %v2119 = vsub.s32 0, %v2118
    %v2120 = vrot.slane %v2115, %v2119
    %v2122 = vadd.f32 %v2106, %v2120
    %v2123 = vadd.f32 %v2107, %v2120
    %v2124 = vadd.f32 %v2108, %v2120
    %v2125 = vadd.f32 %v2109, %v2120
    %v2126 = vadd.f32 %v2110, %v2120
    %v2127 = vadd.f32 %v2111, %v2120
    %v2128 = vadd.f32 %v2112, %v2120
    %v2129 = vadd.f32 %v2113, %v2120
    %v2130 = vadd.f32 %v2114, %v2120
    %v2131 = vmax.f32 %v2122, 0.0
    %v2132 = vmax.f32 %v2123, 0.0
    %v2133 = vmax.f32 %v2124, 0.0
    %v2134 = vmax.f32 %v2125, 0.0
    %v2135 = vmax.f32 %v2126, 0.0
    %v2136 = vmax.f32 %v2127, 0.0
    %v2137 = vmax.f32 %v2128, 0.0
    %v2138 = vmax.f32 %v2129, 0.0
    %v2139 = vmax.f32 %v2130, 0.0
    %v2140 = vpack.c.bf16 %v2132, %v2131
    %v2141 = vpack.c.bf16 %v2134, %v2133
    %v2142 = vpack.c.bf16 %v2136, %v2135
    %v2143 = vpack.c.bf16 %v2138, %v2137
    %v2144 = vpack.c.bf16 %v2139, %v2139
    %v2150 = vunpack.c.l.b16 %v2140
    %v2151 = vunpack.c.h.b16 %v2140
    %v2152 = vunpack.c.l.b16 %v2141
    %v2153 = vunpack.c.h.b16 %v2141
    %v2154 = vunpack.c.l.b16 %v2142
    %v2155 = vunpack.c.h.b16 %v2142
    %v2156 = vunpack.c.l.b16 %v2143
    %v2157 = vunpack.c.h.b16 %v2143
    %v2158 = vunpack.c.l.b16 %v2144
    %v2159 = vpack.c.b16 %v2150, %v2150
    %v2160 = vpack.c.b16 %v2151, %v2151
    %v2161 = vpack.c.b16 %v2152, %v2152
    %v2162 = vpack.c.b16 %v2153, %v2153
    %v2163 = vpack.c.b16 %v2154, %v2154
    %v2164 = vpack.c.b16 %v2155, %v2155
    %v2165 = vpack.c.b16 %v2156, %v2156
    %v2166 = vpack.c.b16 %v2157, %v2157
    %v2167 = vpack.c.b16 %v2158, %v2158
    %2177 = vst [vmem:[%s3] sm:$0xf] %v2159
    %2178 = vst [vmem:[%s3 + $0x4] sm:$0xf] %v2160
    %2179 = vst [vmem:[%s3 + $0x8] sm:$0xf] %v2161
    %2180 = vst [vmem:[%s3 + $0xc] sm:$0xf] %v2162
    %2181 = vst [vmem:[%s3 + $0x10] sm:$0xf] %v2163
    %2182 = vst [vmem:[%s3 + $0x14] sm:$0xf] %v2164
    %2183 = vst [vmem:[%s3 + $0x18] sm:$0xf] %v2165
    %2184 = vst [vmem:[%s3 + $0x1c] sm:$0xf] %v2166
    %2185 = vst [vmem:[%s3 + $0x20] sm:$0xf] %v2167
  $region21: #{neural_network_forward.5} parent=0 // pred_fallthru
    _
  // Predicated region
  $region22: #{neural_network_forward.5} parent=0 // pred_check
    _
  $region23: #{neural_network_forward.5} parent=0 // pred_check_branch
    %2187 = sbr.rel (0) target = $region25
  $region24: #{neural_network_forward.5} parent=0 // pred_region
    _
  $region25: #{neural_network_forward.5} parent=0 // pred_fallthru
    _
  // Predicated region
  $region26: #{neural_network_forward.5} parent=0 // pred_check
    _
  $region27: #{neural_network_forward.5} parent=0 // pred_check_branch
    %2189 = sbr.rel (0) target = $region29
  $region28: #{neural_network_forward.5} parent=0 // pred_region
    _
  $region29: #{neural_network_forward.5} parent=0 // pred_fallthru
    _

// kernel: neural_network_forward.6
$region0: #{neural_network_forward.6}
  #allocation0 [shape = 'u32[]', space=smem, size = 0x4, offset = 0x4, fixed_abs, tag = 'smem constant byte address 0x4 - core index']
  #allocation1 [shape = 'u32[144,128]{1,0:T(1,128)}', space=vmem, size = 0x12000, scoped, tag = 'internal scratch']
  #allocation2 [shape = 'f32[32,128]{1,0:T(8,128)}', space=vmem, size = 0x4000, scoped, tag = 'scratch operand']
  %s0 = inlined_call_operand.vmem [shape: bf16[32,1152], index: 0, kind: input, shape index: {}]
  %s1 = inlined_call_operand.vmem [shape: bf16[1152,128], index: 1, kind: input, shape index: {}]
  %s2 = inlined_call_operand.vmem [shape: f32[1,128], index: 2, kind: input, shape index: {}]
  %s3 = inlined_call_operand.vmem [shape: bf16[32,128], index: 3, kind: output, shape index: {}]
  %s4 = sld [smem:[#allocation0]]
  $region30: #{neural_network_forward.6} parent=0
    _
  %s6 = ssub.s32 1, %s4
  %s7 = scalar_select 0, %s6, %s4
  // Predicated region
  $region2: #{neural_network_forward.6} parent=0 // pred_check
    _
  $region3: #{neural_network_forward.6} parent=0 // pred_check_branch
    %9 = sbr.rel (0) target = $region5
  $region4: #{neural_network_forward.6} parent=0 // pred_region
    _
  $region5: #{neural_network_forward.6} parent=0 // pred_fallthru
    _
  // Predicated region
  $region6: #{neural_network_forward.6} parent=0 // pred_check
    _
  $region7: #{neural_network_forward.6} parent=0 // pred_check_branch
    %11 = sbr.rel (0) target = $region9
  $region8: #{neural_network_forward.6} parent=0 // pred_region
    _
  $region9: #{neural_network_forward.6} parent=0 // pred_fallthru
    _
  // Predicated region
  $region10: #{neural_network_forward.6} parent=0 // pred_check
    _
  $region11: #{neural_network_forward.6} parent=0 // pred_check_branch
    %13 = sbr.rel (0) target = $region13
  $region12: #{neural_network_forward.6} parent=0 // pred_region
    _
  $region13: #{neural_network_forward.6} parent=0 // pred_fallthru
    _
  %p15 = scmp.eq.s32.totalorder 0, 0
  // Predicated region
  $region14: #{neural_network_forward.6} parent=0 // pred_check
    %p16 = pneg %p15
  $region15: #{neural_network_forward.6} parent=0 // pred_check_branch
    %18 = sbr.rel (%p16) target = $region17
  $region16: #{neural_network_forward.6} parent=0 // pred_region
    %19 = vst [vmem:[#allocation2] sm:$0xff] 0.0
    %20 = vst [vmem:[#allocation2 + $0x8] sm:$0xff] 0.0
    %21 = vst [vmem:[#allocation2 + $0x10] sm:$0xff] 0.0
    %22 = vst [vmem:[#allocation2 + $0x18] sm:$0xff] 0.0
  $region17: #{neural_network_forward.6} parent=0 // pred_fallthru
    _
  %v23 = vld [vmem:[#allocation2] sm:$0xff]
  %v24 = vld [vmem:[#allocation2 + $0x8] sm:$0xff]
  %v25 = vld [vmem:[#allocation2 + $0x10] sm:$0xff]
  %v26 = vld [vmem:[#allocation2 + $0x18] sm:$0xff]
  %v27 = vld [vmem:[%s0] sm:$0xff]
  %v28 = vld [vmem:[%s0 + $0x8] sm:$0xff]
  %v29 = vld [vmem:[%s0 + $0x10] sm:$0xff]
  %v30 = vld [vmem:[%s0 + $0x18] sm:$0xff]
  %v31 = vld [vmem:[%s0 + $0x20] sm:$0xf]
  %v32 = vld [vmem:[%s0 + $0x24] sm:$0xff]
  %v33 = vld [vmem:[%s0 + $0x2c] sm:$0xff]
  %v34 = vld [vmem:[%s0 + $0x34] sm:$0xff]
  %v35 = vld [vmem:[%s0 + $0x3c] sm:$0xff]
  %v36 = vld [vmem:[%s0 + $0x44] sm:$0xf]
  %v37 = vld [vmem:[%s0 + $0x48] sm:$0xff]
  %v38 = vld [vmem:[%s0 + $0x50] sm:$0xff]
  %v39 = vld [vmem:[%s0 + $0x58] sm:$0xff]
  %v40 = vld [vmem:[%s0 + $0x60] sm:$0xff]
  %v41 = vld [vmem:[%s0 + $0x68] sm:$0xf]
  %v42 = vld [vmem:[%s0 + $0x6c] sm:$0xff]
  %v43 = vld [vmem:[%s0 + $0x74] sm:$0xff]
  %v44 = vld [vmem:[%s0 + $0x7c] sm:$0xff]
  %v45 = vld [vmem:[%s0 + $0x84] sm:$0xff]
  %v46 = vld [vmem:[%s0 + $0x8c] sm:$0xf]
  %v47 = vld [vmem:[%s1] sm:$0xf]
  %v48 = vld [vmem:[%s1 + $0x4] sm:$0xf]
  %v49 = vld [vmem:[%s1 + $0x8] sm:$0xf]
  %v50 = vld [vmem:[%s1 + $0xc] sm:$0xf]
  %v51 = vld [vmem:[%s1 + $0x10] sm:$0xf]
  %v52 = vld [vmem:[%s1 + $0x14] sm:$0xf]
  %v53 = vld [vmem:[%s1 + $0x18] sm:$0xf]
  %v54 = vld [vmem:[%s1 + $0x1c] sm:$0xf]
  %v55 = vld [vmem:[%s1 + $0x20] sm:$0xf]
  %v56 = vld [vmem:[%s1 + $0x24] sm:$0xf]
  %v57 = vld [vmem:[%s1 + $0x28] sm:$0xf]
  %v58 = vld [vmem:[%s1 + $0x2c] sm:$0xf]
  %v59 = vld [vmem:[%s1 + $0x30] sm:$0xf]
  %v60 = vld [vmem:[%s1 + $0x34] sm:$0xf]
  %v61 = vld [vmem:[%s1 + $0x38] sm:$0xf]
  %v62 = vld [vmem:[%s1 + $0x3c] sm:$0xf]
  %v63 = vld [vmem:[%s1 + $0x40] sm:$0xf]
  %v64 = vld [vmem:[%s1 + $0x44] sm:$0xf]
  %v65 = vld [vmem:[%s1 + $0x48] sm:$0xf]
  %v66 = vld [vmem:[%s1 + $0x4c] sm:$0xf]
  %v67 = vld [vmem:[%s1 + $0x50] sm:$0xf]
  %v68 = vld [vmem:[%s1 + $0x54] sm:$0xf]
  %v69 = vld [vmem:[%s1 + $0x58] sm:$0xf]
  %v70 = vld [vmem:[%s1 + $0x5c] sm:$0xf]
  %v71 = vld [vmem:[%s1 + $0x60] sm:$0xf]
  %v72 = vld [vmem:[%s1 + $0x64] sm:$0xf]
  %v73 = vld [vmem:[%s1 + $0x68] sm:$0xf]
  %v74 = vld [vmem:[%s1 + $0x6c] sm:$0xf]
  %v75 = vld [vmem:[%s1 + $0x70] sm:$0xf]
  %v76 = vld [vmem:[%s1 + $0x74] sm:$0xf]
  %v77 = vld [vmem:[%s1 + $0x78] sm:$0xf]
  %v78 = vld [vmem:[%s1 + $0x7c] sm:$0xf]
  %v79 = vld [vmem:[%s1 + $0x80] sm:$0xf]
  %v80 = vld [vmem:[%s1 + $0x84] sm:$0xf]
  %v81 = vld [vmem:[%s1 + $0x88] sm:$0xf]
  %v82 = vld [vmem:[%s1 + $0x8c] sm:$0xf]
  %v83 = vld [vmem:[%s1 + $0x90] sm:$0xf]
  %v84 = vld [vmem:[%s1 + $0x94] sm:$0xf]
  %v85 = vld [vmem:[%s1 + $0x98] sm:$0xf]
  %v86 = vld [vmem:[%s1 + $0x9c] sm:$0xf]
  %v87 = vld [vmem:[%s1 + $0xa0] sm:$0xf]
  %v88 = vld [vmem:[%s1 + $0xa4] sm:$0xf]
  %v89 = vld [vmem:[%s1 + $0xa8] sm:$0xf]
  %v90 = vld [vmem:[%s1 + $0xac] sm:$0xf]
  %v91 = vld [vmem:[%s1 + $0xb0] sm:$0xf]
  %v92 = vld [vmem:[%s1 + $0xb4] sm:$0xf]
  %v93 = vld [vmem:[%s1 + $0xb8] sm:$0xf]
  %v94 = vld [vmem:[%s1 + $0xbc] sm:$0xf]
  %v95 = vld [vmem:[%s1 + $0xc0] sm:$0xf]
  %v96 = vld [vmem:[%s1 + $0xc4] sm:$0xf]
  %v97 = vld [vmem:[%s1 + $0xc8] sm:$0xf]
  %v98 = vld [vmem:[%s1 + $0xcc] sm:$0xf]
  %v99 = vld [vmem:[%s1 + $0xd0] sm:$0xf]
  %v100 = vld [vmem:[%s1 + $0xd4] sm:$0xf]
  %v101 = vld [vmem:[%s1 + $0xd8] sm:$0xf]
  %v102 = vld [vmem:[%s1 + $0xdc] sm:$0xf]
  %v103 = vld [vmem:[%s1 + $0xe0] sm:$0xf]
  %v104 = vld [vmem:[%s1 + $0xe4] sm:$0xf]
  %v105 = vld [vmem:[%s1 + $0xe8] sm:$0xf]
  %v106 = vld [vmem:[%s1 + $0xec] sm:$0xf]
  %v107 = vld [vmem:[%s1 + $0xf0] sm:$0xf]
  %v108 = vld [vmem:[%s1 + $0xf4] sm:$0xf]
  %v109 = vld [vmem:[%s1 + $0xf8] sm:$0xf]
  %v110 = vld [vmem:[%s1 + $0xfc] sm:$0xf]
  %v111 = vld [vmem:[%s1 + $0x100] sm:$0xf]
  %v112 = vld [vmem:[%s1 + $0x104] sm:$0xf]
  %v113 = vld [vmem:[%s1 + $0x108] sm:$0xf]
  %v114 = vld [vmem:[%s1 + $0x10c] sm:$0xf]
  %v115 = vld [vmem:[%s1 + $0x110] sm:$0xf]
  %v116 = vld [vmem:[%s1 + $0x114] sm:$0xf]
  %v117 = vld [vmem:[%s1 + $0x118] sm:$0xf]
  %v118 = vld [vmem:[%s1 + $0x11c] sm:$0xf]
  %v119 = vld [vmem:[%s1 + $0x120] sm:$0xf]
  %v120 = vld [vmem:[%s1 + $0x124] sm:$0xf]
  %v121 = vld [vmem:[%s1 + $0x128] sm:$0xf]
  %v122 = vld [vmem:[%s1 + $0x12c] sm:$0xf]
  %v123 = vld [vmem:[%s1 + $0x130] sm:$0xf]
  %v124 = vld [vmem:[%s1 + $0x134] sm:$0xf]
  %v125 = vld [vmem:[%s1 + $0x138] sm:$0xf]
  %v126 = vld [vmem:[%s1 + $0x13c] sm:$0xf]
  %v127 = vld [vmem:[%s1 + $0x140] sm:$0xf]
  %v128 = vld [vmem:[%s1 + $0x144] sm:$0xf]
  %v129 = vld [vmem:[%s1 + $0x148] sm:$0xf]
  %v130 = vld [vmem:[%s1 + $0x14c] sm:$0xf]
  %v131 = vld [vmem:[%s1 + $0x150] sm:$0xf]
  %v132 = vld [vmem:[%s1 + $0x154] sm:$0xf]
  %v133 = vld [vmem:[%s1 + $0x158] sm:$0xf]
  %v134 = vld [vmem:[%s1 + $0x15c] sm:$0xf]
  %v135 = vld [vmem:[%s1 + $0x160] sm:$0xf]
  %v136 = vld [vmem:[%s1 + $0x164] sm:$0xf]
  %v137 = vld [vmem:[%s1 + $0x168] sm:$0xf]
  %v138 = vld [vmem:[%s1 + $0x16c] sm:$0xf]
  %v139 = vld [vmem:[%s1 + $0x170] sm:$0xf]
  %v140 = vld [vmem:[%s1 + $0x174] sm:$0xf]
  %v141 = vld [vmem:[%s1 + $0x178] sm:$0xf]
  %v142 = vld [vmem:[%s1 + $0x17c] sm:$0xf]
  %v143 = vld [vmem:[%s1 + $0x180] sm:$0xf]
  %v144 = vld [vmem:[%s1 + $0x184] sm:$0xf]
  %v145 = vld [vmem:[%s1 + $0x188] sm:$0xf]
  %v146 = vld [vmem:[%s1 + $0x18c] sm:$0xf]
  %v147 = vld [vmem:[%s1 + $0x190] sm:$0xf]
  %v148 = vld [vmem:[%s1 + $0x194] sm:$0xf]
  %v149 = vld [vmem:[%s1 + $0x198] sm:$0xf]
  %v150 = vld [vmem:[%s1 + $0x19c] sm:$0xf]
  %v151 = vld [vmem:[%s1 + $0x1a0] sm:$0xf]
  %v152 = vld [vmem:[%s1 + $0x1a4] sm:$0xf]
  %v153 = vld [vmem:[%s1 + $0x1a8] sm:$0xf]
  %v154 = vld [vmem:[%s1 + $0x1ac] sm:$0xf]
  %v155 = vld [vmem:[%s1 + $0x1b0] sm:$0xf]
  %v156 = vld [vmem:[%s1 + $0x1b4] sm:$0xf]
  %v157 = vld [vmem:[%s1 + $0x1b8] sm:$0xf]
  %v158 = vld [vmem:[%s1 + $0x1bc] sm:$0xf]
  %v159 = vld [vmem:[%s1 + $0x1c0] sm:$0xf]
  %v160 = vld [vmem:[%s1 + $0x1c4] sm:$0xf]
  %v161 = vld [vmem:[%s1 + $0x1c8] sm:$0xf]
  %v162 = vld [vmem:[%s1 + $0x1cc] sm:$0xf]
  %v163 = vld [vmem:[%s1 + $0x1d0] sm:$0xf]
  %v164 = vld [vmem:[%s1 + $0x1d4] sm:$0xf]
  %v165 = vld [vmem:[%s1 + $0x1d8] sm:$0xf]
  %v166 = vld [vmem:[%s1 + $0x1dc] sm:$0xf]
  %v167 = vld [vmem:[%s1 + $0x1e0] sm:$0xf]
  %v168 = vld [vmem:[%s1 + $0x1e4] sm:$0xf]
  %v169 = vld [vmem:[%s1 + $0x1e8] sm:$0xf]
  %v170 = vld [vmem:[%s1 + $0x1ec] sm:$0xf]
  %v171 = vld [vmem:[%s1 + $0x1f0] sm:$0xf]
  %v172 = vld [vmem:[%s1 + $0x1f4] sm:$0xf]
  %v173 = vld [vmem:[%s1 + $0x1f8] sm:$0xf]
  %v174 = vld [vmem:[%s1 + $0x1fc] sm:$0xf]
  %v175 = vld [vmem:[%s1 + $0x200] sm:$0xf]
  %v176 = vld [vmem:[%s1 + $0x204] sm:$0xf]
  %v177 = vld [vmem:[%s1 + $0x208] sm:$0xf]
  %v178 = vld [vmem:[%s1 + $0x20c] sm:$0xf]
  %v179 = vld [vmem:[%s1 + $0x210] sm:$0xf]
  %v180 = vld [vmem:[%s1 + $0x214] sm:$0xf]
  %v181 = vld [vmem:[%s1 + $0x218] sm:$0xf]
  %v182 = vld [vmem:[%s1 + $0x21c] sm:$0xf]
  %v183 = vld [vmem:[%s1 + $0x220] sm:$0xf]
  %v184 = vld [vmem:[%s1 + $0x224] sm:$0xf]
  %v185 = vld [vmem:[%s1 + $0x228] sm:$0xf]
  %v186 = vld [vmem:[%s1 + $0x22c] sm:$0xf]
  %v187 = vld [vmem:[%s1 + $0x230] sm:$0xf]
  %v188 = vld [vmem:[%s1 + $0x234] sm:$0xf]
  %v189 = vld [vmem:[%s1 + $0x238] sm:$0xf]
  %v190 = vld [vmem:[%s1 + $0x23c] sm:$0xf]
  %v211 = vunpack.c.l.b16 %v27
  %v212 = vunpack.c.h.b16 %v27
  %v213 = vunpack.c.l.b16 %v28
  %v214 = vunpack.c.h.b16 %v28
  %v215 = vunpack.c.l.b16 %v29
  %v216 = vunpack.c.h.b16 %v29
  %v217 = vunpack.c.l.b16 %v30
  %v218 = vunpack.c.h.b16 %v30
  %v219 = vunpack.c.l.b16 %v31
  %v220 = vunpack.c.l.b16 %v32
  %v221 = vunpack.c.h.b16 %v32
  %v222 = vunpack.c.l.b16 %v33
  %v223 = vunpack.c.h.b16 %v33
  %v224 = vunpack.c.l.b16 %v34
  %v225 = vunpack.c.h.b16 %v34
  %v226 = vunpack.c.l.b16 %v35
  %v227 = vunpack.c.h.b16 %v35
  %v228 = vunpack.c.l.b16 %v36
  %v229 = vunpack.c.l.b16 %v37
  %v230 = vunpack.c.h.b16 %v37
  %v231 = vunpack.c.l.b16 %v38
  %v232 = vunpack.c.h.b16 %v38
  %v233 = vunpack.c.l.b16 %v39
  %v234 = vunpack.c.h.b16 %v39
  %v235 = vunpack.c.l.b16 %v40
  %v236 = vunpack.c.h.b16 %v40
  %v237 = vunpack.c.l.b16 %v41
  %v238 = vunpack.c.l.b16 %v42
  %v239 = vunpack.c.h.b16 %v42
  %v240 = vunpack.c.l.b16 %v43
  %v241 = vunpack.c.h.b16 %v43
  %v242 = vunpack.c.l.b16 %v44
  %v243 = vunpack.c.h.b16 %v44
  %v244 = vunpack.c.l.b16 %v45
  %v245 = vunpack.c.h.b16 %v45
  %v246 = vunpack.c.l.b16 %v46
  %v247 = vpack.c.b16 %v220, %v211
  %v248 = vpack.c.b16 %v221, %v212
  %v249 = vpack.c.b16 %v222, %v213
  %v250 = vpack.c.b16 %v223, %v214
  %v251 = vpack.c.b16 %v224, %v215
  %v252 = vpack.c.b16 %v225, %v216
  %v253 = vpack.c.b16 %v226, %v217
  %v254 = vpack.c.b16 %v227, %v218
  %v255 = vpack.c.b16 %v228, %v219
  %v256 = vpack.c.b16 %v238, %v229
  %v257 = vpack.c.b16 %v239, %v230
  %v258 = vpack.c.b16 %v240, %v231
  %v259 = vpack.c.b16 %v241, %v232
  %v260 = vpack.c.b16 %v242, %v233
  %v261 = vpack.c.b16 %v243, %v234
  %v262 = vpack.c.b16 %v244, %v235
  %v263 = vpack.c.b16 %v245, %v236
  %v264 = vpack.c.b16 %v246, %v237
  %v427 = vunpack.c.l.b16 %v47
  %v428 = vunpack.c.l.b16 %v48
  %v429 = vunpack.c.l.b16 %v49
  %v430 = vunpack.c.l.b16 %v50
  %v431 = vunpack.c.l.b16 %v51
  %v432 = vunpack.c.l.b16 %v52
  %v433 = vunpack.c.l.b16 %v53
  %v434 = vunpack.c.l.b16 %v54
  %v435 = vunpack.c.l.b16 %v55
  %v436 = vunpack.c.l.b16 %v56
  %v437 = vunpack.c.l.b16 %v57
  %v438 = vunpack.c.l.b16 %v58
  %v439 = vunpack.c.l.b16 %v59
  %v440 = vunpack.c.l.b16 %v60
  %v441 = vunpack.c.l.b16 %v61
  %v442 = vunpack.c.l.b16 %v62
  %v443 = vunpack.c.l.b16 %v63
  %v444 = vunpack.c.l.b16 %v64
  %v445 = vunpack.c.l.b16 %v65
  %v446 = vunpack.c.l.b16 %v66
  %v447 = vunpack.c.l.b16 %v67
  %v448 = vunpack.c.l.b16 %v68
  %v449 = vunpack.c.l.b16 %v69
  %v450 = vunpack.c.l.b16 %v70
  %v451 = vunpack.c.l.b16 %v71
  %v452 = vunpack.c.l.b16 %v72
  %v453 = vunpack.c.l.b16 %v73
  %v454 = vunpack.c.l.b16 %v74
  %v455 = vunpack.c.l.b16 %v75
  %v456 = vunpack.c.l.b16 %v76
  %v457 = vunpack.c.l.b16 %v77
  %v458 = vunpack.c.l.b16 %v78
  %v459 = vunpack.c.l.b16 %v79
  %v460 = vunpack.c.l.b16 %v80
  %v461 = vunpack.c.l.b16 %v81
  %v462 = vunpack.c.l.b16 %v82
  %v463 = vunpack.c.l.b16 %v83
  %v464 = vunpack.c.l.b16 %v84
  %v465 = vunpack.c.l.b16 %v85
  %v466 = vunpack.c.l.b16 %v86
  %v467 = vunpack.c.l.b16 %v87
  %v468 = vunpack.c.l.b16 %v88
  %v469 = vunpack.c.l.b16 %v89
  %v470 = vunpack.c.l.b16 %v90
  %v471 = vunpack.c.l.b16 %v91
  %v472 = vunpack.c.l.b16 %v92
  %v473 = vunpack.c.l.b16 %v93
  %v474 = vunpack.c.l.b16 %v94
  %v475 = vunpack.c.l.b16 %v95
  %v476 = vunpack.c.l.b16 %v96
  %v477 = vunpack.c.l.b16 %v97
  %v478 = vunpack.c.l.b16 %v98
  %v479 = vunpack.c.l.b16 %v99
  %v480 = vunpack.c.l.b16 %v100
  %v481 = vunpack.c.l.b16 %v101
  %v482 = vunpack.c.l.b16 %v102
  %v483 = vunpack.c.l.b16 %v103
  %v484 = vunpack.c.l.b16 %v104
  %v485 = vunpack.c.l.b16 %v105
  %v486 = vunpack.c.l.b16 %v106
  %v487 = vunpack.c.l.b16 %v107
  %v488 = vunpack.c.l.b16 %v108
  %v489 = vunpack.c.l.b16 %v109
  %v490 = vunpack.c.l.b16 %v110
  %v491 = vunpack.c.l.b16 %v111
  %v492 = vunpack.c.l.b16 %v112
  %v493 = vunpack.c.l.b16 %v113
  %v494 = vunpack.c.l.b16 %v114
  %v495 = vunpack.c.l.b16 %v115
  %v496 = vunpack.c.l.b16 %v116
  %v497 = vunpack.c.l.b16 %v117
  %v498 = vunpack.c.l.b16 %v118
  %v499 = vunpack.c.l.b16 %v119
  %v500 = vunpack.c.l.b16 %v120
  %v501 = vunpack.c.l.b16 %v121
  %v502 = vunpack.c.l.b16 %v122
  %v503 = vunpack.c.l.b16 %v123
  %v504 = vunpack.c.l.b16 %v124
  %v505 = vunpack.c.l.b16 %v125
  %v506 = vunpack.c.l.b16 %v126
  %v507 = vunpack.c.l.b16 %v127
  %v508 = vunpack.c.l.b16 %v128
  %v509 = vunpack.c.l.b16 %v129
  %v510 = vunpack.c.l.b16 %v130
  %v511 = vunpack.c.l.b16 %v131
  %v512 = vunpack.c.l.b16 %v132
  %v513 = vunpack.c.l.b16 %v133
  %v514 = vunpack.c.l.b16 %v134
  %v515 = vunpack.c.l.b16 %v135
  %v516 = vunpack.c.l.b16 %v136
  %v517 = vunpack.c.l.b16 %v137
  %v518 = vunpack.c.l.b16 %v138
  %v519 = vunpack.c.l.b16 %v139
  %v520 = vunpack.c.l.b16 %v140
  %v521 = vunpack.c.l.b16 %v141
  %v522 = vunpack.c.l.b16 %v142
  %v523 = vunpack.c.l.b16 %v143
  %v524 = vunpack.c.l.b16 %v144
  %v525 = vunpack.c.l.b16 %v145
  %v526 = vunpack.c.l.b16 %v146
  %v527 = vunpack.c.l.b16 %v147
  %v528 = vunpack.c.l.b16 %v148
  %v529 = vunpack.c.l.b16 %v149
  %v530 = vunpack.c.l.b16 %v150
  %v531 = vunpack.c.l.b16 %v151
  %v532 = vunpack.c.l.b16 %v152
  %v533 = vunpack.c.l.b16 %v153
  %v534 = vunpack.c.l.b16 %v154
  %v535 = vunpack.c.l.b16 %v155
  %v536 = vunpack.c.l.b16 %v156
  %v537 = vunpack.c.l.b16 %v157
  %v538 = vunpack.c.l.b16 %v158
  %v539 = vunpack.c.l.b16 %v159
  %v540 = vunpack.c.l.b16 %v160
  %v541 = vunpack.c.l.b16 %v161
  %v542 = vunpack.c.l.b16 %v162
  %v543 = vunpack.c.l.b16 %v163
  %v544 = vunpack.c.l.b16 %v164
  %v545 = vunpack.c.l.b16 %v165
  %v546 = vunpack.c.l.b16 %v166
  %v547 = vunpack.c.l.b16 %v167
  %v548 = vunpack.c.l.b16 %v168
  %v549 = vunpack.c.l.b16 %v169
  %v550 = vunpack.c.l.b16 %v170
  %v551 = vunpack.c.l.b16 %v171
  %v552 = vunpack.c.l.b16 %v172
  %v553 = vunpack.c.l.b16 %v173
  %v554 = vunpack.c.l.b16 %v174
  %v555 = vunpack.c.l.b16 %v175
  %v556 = vunpack.c.l.b16 %v176
  %v557 = vunpack.c.l.b16 %v177
  %v558 = vunpack.c.l.b16 %v178
  %v559 = vunpack.c.l.b16 %v179
  %v560 = vunpack.c.l.b16 %v180
  %v561 = vunpack.c.l.b16 %v181
  %v562 = vunpack.c.l.b16 %v182
  %v563 = vunpack.c.l.b16 %v183
  %v564 = vunpack.c.l.b16 %v184
  %v565 = vunpack.c.l.b16 %v185
  %v566 = vunpack.c.l.b16 %v186
  %v567 = vunpack.c.l.b16 %v187
  %v568 = vunpack.c.l.b16 %v188
  %v569 = vunpack.c.l.b16 %v189
  %v570 = vunpack.c.l.b16 %v190
  %v571 = vpack.c.b16 %v428, %v427
  %v572 = vpack.c.b16 %v430, %v429
  %v573 = vpack.c.b16 %v432, %v431
  %v574 = vpack.c.b16 %v434, %v433
  %v575 = vpack.c.b16 %v436, %v435
  %v576 = vpack.c.b16 %v438, %v437
  %v577 = vpack.c.b16 %v440, %v439
  %v578 = vpack.c.b16 %v442, %v441
  %v579 = vpack.c.b16 %v444, %v443
  %v580 = vpack.c.b16 %v446, %v445
  %v581 = vpack.c.b16 %v448, %v447
  %v582 = vpack.c.b16 %v450, %v449
  %v583 = vpack.c.b16 %v452, %v451
  %v584 = vpack.c.b16 %v454, %v453
  %v585 = vpack.c.b16 %v456, %v455
  %v586 = vpack.c.b16 %v458, %v457
  %v587 = vpack.c.b16 %v460, %v459
  %v588 = vpack.c.b16 %v462, %v461
  %v589 = vpack.c.b16 %v464, %v463
  %v590 = vpack.c.b16 %v466, %v465
  %v591 = vpack.c.b16 %v468, %v467
  %v592 = vpack.c.b16 %v470, %v469
  %v593 = vpack.c.b16 %v472, %v471
  %v594 = vpack.c.b16 %v474, %v473
  %v595 = vpack.c.b16 %v476, %v475
  %v596 = vpack.c.b16 %v478, %v477
  %v597 = vpack.c.b16 %v480, %v479
  %v598 = vpack.c.b16 %v482, %v481
  %v599 = vpack.c.b16 %v484, %v483
  %v600 = vpack.c.b16 %v486, %v485
  %v601 = vpack.c.b16 %v488, %v487
  %v602 = vpack.c.b16 %v490, %v489
  %v603 = vpack.c.b16 %v492, %v491
  %v604 = vpack.c.b16 %v494, %v493
  %v605 = vpack.c.b16 %v496, %v495
  %v606 = vpack.c.b16 %v498, %v497
  %v607 = vpack.c.b16 %v500, %v499
  %v608 = vpack.c.b16 %v502, %v501
  %v609 = vpack.c.b16 %v504, %v503
  %v610 = vpack.c.b16 %v506, %v505
  %v611 = vpack.c.b16 %v508, %v507
  %v612 = vpack.c.b16 %v510, %v509
  %v613 = vpack.c.b16 %v512, %v511
  %v614 = vpack.c.b16 %v514, %v513
  %v615 = vpack.c.b16 %v516, %v515
  %v616 = vpack.c.b16 %v518, %v517
  %v617 = vpack.c.b16 %v520, %v519
  %v618 = vpack.c.b16 %v522, %v521
  %v619 = vpack.c.b16 %v524, %v523
  %v620 = vpack.c.b16 %v526, %v525
  %v621 = vpack.c.b16 %v528, %v527
  %v622 = vpack.c.b16 %v530, %v529
  %v623 = vpack.c.b16 %v532, %v531
  %v624 = vpack.c.b16 %v534, %v533
  %v625 = vpack.c.b16 %v536, %v535
  %v626 = vpack.c.b16 %v538, %v537
  %v627 = vpack.c.b16 %v540, %v539
  %v628 = vpack.c.b16 %v542, %v541
  %v629 = vpack.c.b16 %v544, %v543
  %v630 = vpack.c.b16 %v546, %v545
  %v631 = vpack.c.b16 %v548, %v547
  %v632 = vpack.c.b16 %v550, %v549
  %v633 = vpack.c.b16 %v552, %v551
  %v634 = vpack.c.b16 %v554, %v553
  %v635 = vpack.c.b16 %v556, %v555
  %v636 = vpack.c.b16 %v558, %v557
  %v637 = vpack.c.b16 %v560, %v559
  %v638 = vpack.c.b16 %v562, %v561
  %v639 = vpack.c.b16 %v564, %v563
  %v640 = vpack.c.b16 %v566, %v565
  %v641 = vpack.c.b16 %v568, %v567
  %v642 = vpack.c.b16 %v570, %v569
  %715 = vmatprep.subr.bf16.mxu0 0
  %716 = vmatpush1.bf16.msra.mxu0 %v571
  %717 = vmatprep.subr.bf16.mxu0 0
  %718 = vmatpush1.bf16.msra.mxu0 %v572
  %719 = vmatprep.subr.bf16.mxu0 0
  %720 = vmatpush1.bf16.msra.mxu0 %v573
  %721 = vmatprep.subr.bf16.mxu0 0
  %722 = vmatpush1.bf16.msra.mxu0 %v574
  %723 = vmatprep.subr.bf16.mxu0 0
  %724 = vmatpush1.bf16.msra.mxu0 %v575
  %725 = vmatprep.subr.bf16.mxu0 0
  %726 = vmatpush1.bf16.msra.mxu0 %v576
  %727 = vmatprep.subr.bf16.mxu0 0
  %728 = vmatpush1.bf16.msra.mxu0 %v577
  %729 = vmatprep.subr.bf16.mxu0 0
  %730 = vmatpush1.bf16.msra.mxu0 %v578
  %731 = vmatprep.subr.bf16.mxu0 0
  %732 = vmatpush1.bf16.msra.mxu0 %v579
  %733 = vmatprep.subr.bf16.mxu0 0
  %734 = vmatpush1.bf16.msra.mxu0 %v580
  %735 = vmatprep.subr.bf16.mxu0 0
  %736 = vmatpush1.bf16.msra.mxu0 %v581
  %737 = vmatprep.subr.bf16.mxu0 0
  %738 = vmatpush1.bf16.msra.mxu0 %v582
  %739 = vmatprep.subr.bf16.mxu0 0
  %740 = vmatpush1.bf16.msra.mxu0 %v583
  %741 = vmatprep.subr.bf16.mxu0 0
  %742 = vmatpush1.bf16.msra.mxu0 %v584
  %743 = vmatprep.subr.bf16.mxu0 0
  %744 = vmatpush1.bf16.msra.mxu0 %v585
  %745 = vmatprep.subr.bf16.mxu0 0
  %746 = vmatpush1.bf16.msra.mxu0 %v586
  %747 = vmatprep.mubr.bf16.mxu0 %v248
  %748 = vmatmul.mubr.bf16.gmra.mrb[0].mxu0 %v247
  %v749 = vpop.f32.mrb[0].mxu0
  %v750 = vadd.f32 0.0, %v749
  %v751 = vpop.f32.mrb[0].mxu0
  %v752 = vpop.f32.mrb[0].mxu0
  %v753 = vadd.f32 0.0, %v752
  %v754 = vpop.f32.mrb[0].mxu0
  %755 = vmatprep.mubr.bf16.mxu0 %v257
  %756 = vmatmul.mubr.bf16.gmra.mrb[0].mxu0 %v256
  %v757 = vpop.f32.mrb[0].mxu0
  %v758 = vadd.f32 0.0, %v757
  %v759 = vpop.f32.mrb[0].mxu0
  %v760 = vpop.f32.mrb[0].mxu0
  %v761 = vadd.f32 0.0, %v760
  %v762 = vpop.f32.mrb[0].mxu0
  %763 = vdwg.mxu0
  %764 = vmatprep.subr.bf16.mxu0 0
  %765 = vmatpush1.bf16.msra.mxu0 %v587
  %766 = vmatprep.subr.bf16.mxu0 0
  %767 = vmatpush1.bf16.msra.mxu0 %v588
  %768 = vmatprep.subr.bf16.mxu0 0
  %769 = vmatpush1.bf16.msra.mxu0 %v589
  %770 = vmatprep.subr.bf16.mxu0 0
  %771 = vmatpush1.bf16.msra.mxu0 %v590
  %772 = vmatprep.subr.bf16.mxu0 0
  %773 = vmatpush1.bf16.msra.mxu0 %v591
  %774 = vmatprep.subr.bf16.mxu0 0
  %775 = vmatpush1.bf16.msra.mxu0 %v592
  %776 = vmatprep.subr.bf16.mxu0 0
  %777 = vmatpush1.bf16.msra.mxu0 %v593
  %778 = vmatprep.subr.bf16.mxu0 0
  %779 = vmatpush1.bf16.msra.mxu0 %v594
  %780 = vmatprep.subr.bf16.mxu0 0
  %781 = vmatpush1.bf16.msra.mxu0 %v595
  %782 = vmatprep.subr.bf16.mxu0 0
  %783 = vmatpush1.bf16.msra.mxu0 %v596
  %784 = vmatprep.subr.bf16.mxu0 0
  %785 = vmatpush1.bf16.msra.mxu0 %v597
  %786 = vmatprep.subr.bf16.mxu0 0
  %787 = vmatpush1.bf16.msra.mxu0 %v598
  %788 = vmatprep.subr.bf16.mxu0 0
  %789 = vmatpush1.bf16.msra.mxu0 %v599
  %790 = vmatprep.subr.bf16.mxu0 0
  %791 = vmatpush1.bf16.msra.mxu0 %v600
  %792 = vmatprep.subr.bf16.mxu0 0
  %793 = vmatpush1.bf16.msra.mxu0 %v601
  %794 = vmatprep.subr.bf16.mxu0 0
  %795 = vmatpush1.bf16.msra.mxu0 %v602
  %796 = vmatprep.mubr.bf16.mxu0 %v250
  %797 = vmatmul.mubr.bf16.gmra.mrb[0].mxu0 %v249
  %v798 = vpop.f32.mrb[0].mxu0
  %v799 = vadd.f32 %v750, %v798
  %v800 = vpop.f32.mrb[0].mxu0
  %v801 = vpop.f32.mrb[0].mxu0
  %v802 = vadd.f32 %v753, %v801
  %v803 = vpop.f32.mrb[0].mxu0
  %804 = vmatprep.mubr.bf16.mxu0 %v259
  %805 = vmatmul.mubr.bf16.gmra.mrb[0].mxu0 %v258
  %v806 = vpop.f32.mrb[0].mxu0
  %v807 = vadd.f32 %v758, %v806
  %v808 = vpop.f32.mrb[0].mxu0
  %v809 = vpop.f32.mrb[0].mxu0
  %v810 = vadd.f32 %v761, %v809
  %v811 = vpop.f32.mrb[0].mxu0
  %812 = vdwg.mxu0
  %813 = vmatprep.subr.bf16.mxu0 0
  %814 = vmatpush1.bf16.msra.mxu0 %v603
  %815 = vmatprep.subr.bf16.mxu0 0
  %816 = vmatpush1.bf16.msra.mxu0 %v604
  %817 = vmatprep.subr.bf16.mxu0 0
  %818 = vmatpush1.bf16.msra.mxu0 %v605
  %819 = vmatprep.subr.bf16.mxu0 0
  %820 = vmatpush1.bf16.msra.mxu0 %v606
  %821 = vmatprep.subr.bf16.mxu0 0
  %822 = vmatpush1.bf16.msra.mxu0 %v607
  %823 = vmatprep.subr.bf16.mxu0 0
  %824 = vmatpush1.bf16.msra.mxu0 %v608
  %825 = vmatprep.subr.bf16.mxu0 0
  %826 = vmatpush1.bf16.msra.mxu0 %v609
  %827 = vmatprep.subr.bf16.mxu0 0
  %828 = vmatpush1.bf16.msra.mxu0 %v610
  %829 = vmatprep.subr.bf16.mxu0 0
  %830 = vmatpush1.bf16.msra.mxu0 %v611
  %831 = vmatprep.subr.bf16.mxu0 0
  %832 = vmatpush1.bf16.msra.mxu0 %v612
  %833 = vmatprep.subr.bf16.mxu0 0
  %834 = vmatpush1.bf16.msra.mxu0 %v613
  %835 = vmatprep.subr.bf16.mxu0 0
  %836 = vmatpush1.bf16.msra.mxu0 %v614
  %837 = vmatprep.subr.bf16.mxu0 0
  %838 = vmatpush1.bf16.msra.mxu0 %v615
  %839 = vmatprep.subr.bf16.mxu0 0
  %840 = vmatpush1.bf16.msra.mxu0 %v616
  %841 = vmatprep.subr.bf16.mxu0 0
  %842 = vmatpush1.bf16.msra.mxu0 %v617
  %843 = vmatprep.subr.bf16.mxu0 0
  %844 = vmatpush1.bf16.msra.mxu0 %v618
  %845 = vmatprep.mubr.bf16.mxu0 %v252
  %846 = vmatmul.mubr.bf16.gmra.mrb[0].mxu0 %v251
  %v847 = vpop.f32.mrb[0].mxu0
  %v848 = vadd.f32 %v799, %v847
  %v849 = vpop.f32.mrb[0].mxu0
  %v850 = vpop.f32.mrb[0].mxu0
  %v851 = vadd.f32 %v802, %v850
  %v852 = vpop.f32.mrb[0].mxu0
  %853 = vmatprep.mubr.bf16.mxu0 %v261
  %854 = vmatmul.mubr.bf16.gmra.mrb[0].mxu0 %v260
  %v855 = vpop.f32.mrb[0].mxu0
  %v856 = vadd.f32 %v807, %v855
  %v857 = vpop.f32.mrb[0].mxu0
  %v858 = vpop.f32.mrb[0].mxu0
  %v859 = vadd.f32 %v810, %v858
  %v860 = vpop.f32.mrb[0].mxu0
  %861 = vdwg.mxu0
  %862 = vmatprep.subr.bf16.mxu0 0
  %863 = vmatpush1.bf16.msra.mxu0 %v619
  %864 = vmatprep.subr.bf16.mxu0 0
  %865 = vmatpush1.bf16.msra.mxu0 %v620
  %866 = vmatprep.subr.bf16.mxu0 0
  %867 = vmatpush1.bf16.msra.mxu0 %v621
  %868 = vmatprep.subr.bf16.mxu0 0
  %869 = vmatpush1.bf16.msra.mxu0 %v622
  %870 = vmatprep.subr.bf16.mxu0 0
  %871 = vmatpush1.bf16.msra.mxu0 %v623
  %872 = vmatprep.subr.bf16.mxu0 0
  %873 = vmatpush1.bf16.msra.mxu0 %v624
  %874 = vmatprep.subr.bf16.mxu0 0
  %875 = vmatpush1.bf16.msra.mxu0 %v625
  %876 = vmatprep.subr.bf16.mxu0 0
  %877 = vmatpush1.bf16.msra.mxu0 %v626
  %878 = vmatprep.subr.bf16.mxu0 0
  %879 = vmatpush1.bf16.msra.mxu0 %v627
  %880 = vmatprep.subr.bf16.mxu0 0
  %881 = vmatpush1.bf16.msra.mxu0 %v628
  %882 = vmatprep.subr.bf16.mxu0 0
  %883 = vmatpush1.bf16.msra.mxu0 %v629
  %884 = vmatprep.subr.bf16.mxu0 0
  %885 = vmatpush1.bf16.msra.mxu0 %v630
  %886 = vmatprep.subr.bf16.mxu0 0
  %887 = vmatpush1.bf16.msra.mxu0 %v631
  %888 = vmatprep.subr.bf16.mxu0 0
  %889 = vmatpush1.bf16.msra.mxu0 %v632
  %890 = vmatprep.subr.bf16.mxu0 0
  %891 = vmatpush1.bf16.msra.mxu0 %v633
  %892 = vmatprep.subr.bf16.mxu0 0
  %893 = vmatpush1.bf16.msra.mxu0 %v634
  %894 = vmatprep.mubr.bf16.mxu0 %v254
  %895 = vmatmul.mubr.bf16.gmra.mrb[0].mxu0 %v253
  %v896 = vpop.f32.mrb[0].mxu0
  %v897 = vadd.f32 %v848, %v896
  %v898 = vpop.f32.mrb[0].mxu0
  %v899 = vpop.f32.mrb[0].mxu0
  %v900 = vadd.f32 %v851, %v899
  %v901 = vpop.f32.mrb[0].mxu0
  %902 = vmatprep.mubr.bf16.mxu0 %v263
  %903 = vmatmul.mubr.bf16.gmra.mrb[0].mxu0 %v262
  %v904 = vpop.f32.mrb[0].mxu0
  %v905 = vadd.f32 %v856, %v904
  %v906 = vpop.f32.mrb[0].mxu0
  %v907 = vpop.f32.mrb[0].mxu0
  %v908 = vadd.f32 %v859, %v907
  %v909 = vpop.f32.mrb[0].mxu0
  %910 = vdwg.mxu0
  %911 = vmatprep.subr.bf16.mxu0 0
  %912 = vmatpush1.bf16.msra.mxu0 %v635
  %913 = vmatprep.subr.bf16.mxu0 0
  %914 = vmatpush1.bf16.msra.mxu0 %v636
  %915 = vmatprep.subr.bf16.mxu0 0
  %916 = vmatpush1.bf16.msra.mxu0 %v637
  %917 = vmatprep.subr.bf16.mxu0 0
  %918 = vmatpush1.bf16.msra.mxu0 %v638
  %919 = vmatprep.subr.bf16.mxu0 0
  %920 = vmatpush1.bf16.msra.mxu0 %v639
  %921 = vmatprep.subr.bf16.mxu0 0
  %922 = vmatpush1.bf16.msra.mxu0 %v640
  %923 = vmatprep.subr.bf16.mxu0 0
  %924 = vmatpush1.bf16.msra.mxu0 %v641
  %925 = vmatprep.subr.bf16.mxu0 0
  %926 = vmatpush1.bf16.msra.mxu0 %v642
  %927 = vmatprep.subr.bf16.mxu0 0
  %928 = vmatpush1.bf16.msra.mxu0 0
  %929 = vmatprep.subr.bf16.mxu0 0
  %930 = vmatpush1.bf16.msra.mxu0 0
  %931 = vmatprep.subr.bf16.mxu0 0
  %932 = vmatpush1.bf16.msra.mxu0 0
  %933 = vmatprep.subr.bf16.mxu0 0
  %934 = vmatpush1.bf16.msra.mxu0 0
  %935 = vmatprep.subr.bf16.mxu0 0
  %936 = vmatpush1.bf16.msra.mxu0 0
  %937 = vmatprep.subr.bf16.mxu0 0
  %938 = vmatpush1.bf16.msra.mxu0 0
  %939 = vmatprep.subr.bf16.mxu0 0
  %940 = vmatpush1.bf16.msra.mxu0 0
  %941 = vmatprep.subr.bf16.mxu0 0
  %942 = vmatpush1.bf16.msra.mxu0 0
  %943 = vmatprep.mubr.bf16.mxu0 0
  %944 = vmatmul.mubr.bf16.gmra.mrb[0].mxu0 %v255
  %v945 = vpop.f32.mrb[0].mxu0
  %v946 = vadd.f32 %v897, %v945
  %v947 = vpop.f32.mrb[0].mxu0
  %v948 = vpop.f32.mrb[0].mxu0
  %v949 = vadd.f32 %v900, %v948
  %v950 = vpop.f32.mrb[0].mxu0
  %951 = vmatprep.mubr.bf16.mxu0 0
  %952 = vmatmul.mubr.bf16.gmra.mrb[0].mxu0 %v264
  %v953 = vpop.f32.mrb[0].mxu0
  %v954 = vadd.f32 %v905, %v953
  %v955 = vpop.f32.mrb[0].mxu0
  %v956 = vpop.f32.mrb[0].mxu0
  %v957 = vadd.f32 %v908, %v956
  %v958 = vpop.f32.mrb[0].mxu0
  %959 = vdwg.mxu0
  %v960 = vadd.f32 %v23, %v946
  %v961 = vadd.f32 %v24, %v949
  %v962 = vadd.f32 %v25, %v954
  %v963 = vadd.f32 %v26, %v957
  %964 = vst [vmem:[#allocation2] sm:$0xff] %v960
  %965 = vst [vmem:[#allocation2 + $0x8] sm:$0xff] %v961
  %966 = vst [vmem:[#allocation2 + $0x10] sm:$0xff] %v962
  %967 = vst [vmem:[#allocation2 + $0x18] sm:$0xff] %v963
  // Predicated region
  $region18: #{neural_network_forward.6} parent=0 // pred_check
    %p968 = pneg %p15
  $region19: #{neural_network_forward.6} parent=0 // pred_check_branch
    %970 = sbr.rel (%p968) target = $region21
  $region20: #{neural_network_forward.6} parent=0 // pred_region
    %v971 = vld [vmem:[#allocation2] sm:$0xff]
    %v972 = vld [vmem:[#allocation2 + $0x8] sm:$0xff]
    %v973 = vld [vmem:[#allocation2 + $0x10] sm:$0xff]
    %v974 = vld [vmem:[#allocation2 + $0x18] sm:$0xff]
    %v975 = vld [vmem:[%s2] sm:$0x1]
    %v977 = vlaneseq
    %v978 = vshrl.u32 %v977, 7
    %v979 = vsub.s32 0, %v978
    %v980 = vrot.slane %v975, %v979
    %v982 = vadd.f32 %v971, %v980
    %v983 = vadd.f32 %v972, %v980
    %v984 = vadd.f32 %v973, %v980
    %v985 = vadd.f32 %v974, %v980
    %v986 = vmax.f32 %v982, 0.0
    %v987 = vmax.f32 %v983, 0.0
    %v988 = vmax.f32 %v984, 0.0
    %v989 = vmax.f32 %v985, 0.0
    %v990 = vpack.c.bf16 %v987, %v986
    %v991 = vpack.c.bf16 %v989, %v988
    %v994 = vunpack.c.l.b16 %v990
    %v995 = vunpack.c.h.b16 %v990
    %v996 = vunpack.c.l.b16 %v991
    %v997 = vunpack.c.h.b16 %v991
    %v998 = vpack.c.b16 %v994, %v994
    %v999 = vpack.c.b16 %v995, %v995
    %v1000 = vpack.c.b16 %v996, %v996
    %v1001 = vpack.c.b16 %v997, %v997
    %1006 = vst [vmem:[%s3] sm:$0xf] %v998
    %1007 = vst [vmem:[%s3 + $0x4] sm:$0xf] %v999
    %1008 = vst [vmem:[%s3 + $0x8] sm:$0xf] %v1000
    %1009 = vst [vmem:[%s3 + $0xc] sm:$0xf] %v1001
  $region21: #{neural_network_forward.6} parent=0 // pred_fallthru
    _
  // Predicated region
  $region22: #{neural_network_forward.6} parent=0 // pred_check
    _
  $region23: #{neural_network_forward.6} parent=0 // pred_check_branch
    %1011 = sbr.rel (0) target = $region25
  $region24: #{neural_network_forward.6} parent=0 // pred_region
    _
  $region25: #{neural_network_forward.6} parent=0 // pred_fallthru
    _
  // Predicated region
  $region26: #{neural_network_forward.6} parent=0 // pred_check
    _
  $region27: #{neural_network_forward.6} parent=0 // pred_check_branch
    %1013 = sbr.rel (0) target = $region29
  $region28: #{neural_network_forward.6} parent=0 // pred_region
    _
  $region29: #{neural_network_forward.6} parent=0 // pred_fallthru
    _

// kernel: neural_network_forward.7
$region0: #{neural_network_forward.7}
  #allocation0 [shape = 'u32[]', space=smem, size = 0x4, offset = 0x4, fixed_abs, tag = 'smem constant byte address 0x4 - core index']
  #allocation1 [shape = 'u32[144,128]{1,0:T(1,128)}', space=vmem, size = 0x12000, scoped, tag = 'internal scratch']
  %s0 = inlined_call_operand.vmem [shape: bf16[8,1024], index: 0, kind: input, shape index: {}]
  %s1 = inlined_call_operand.vmem [shape: bf16[1024,512], index: 1, kind: input, shape index: {}]
  %s2 = inlined_call_operand.vmem [shape: f32[1,512], index: 2, kind: input, shape index: {}]
  %s3 = inlined_call_operand.vmem [shape: bf16[512,128], index: 3, kind: input, shape index: {}]
  %s4 = inlined_call_operand.vmem [shape: f32[1,128], index: 4, kind: input, shape index: {}]
  %s5 = inlined_call_operand.vmem [shape: f32[8,128], index: 5, kind: output, shape index: {}]
  %s6 = sld [smem:[#allocation0]]
  $region30: #{neural_network_forward.7} parent=0
    _
  %s8 = ssub.s32 1, %s6
  %s9 = scalar_select 0, %s8, %s6
  // Predicated region
  $region2: #{neural_network_forward.7} parent=0 // pred_check
    _
  $region3: #{neural_network_forward.7} parent=0 // pred_check_branch
    %11 = sbr.rel (0) target = $region5
  $region4: #{neural_network_forward.7} parent=0 // pred_region
    _
  $region5: #{neural_network_forward.7} parent=0 // pred_fallthru
    _
  // Predicated region
  $region6: #{neural_network_forward.7} parent=0 // pred_check
    _
  $region7: #{neural_network_forward.7} parent=0 // pred_check_branch
    %13 = sbr.rel (0) target = $region9
  $region8: #{neural_network_forward.7} parent=0 // pred_region
    _
  $region9: #{neural_network_forward.7} parent=0 // pred_fallthru
    _
  // Predicated region
  $region10: #{neural_network_forward.7} parent=0 // pred_check
    _
  $region11: #{neural_network_forward.7} parent=0 // pred_check_branch
    %15 = sbr.rel (0) target = $region13
  $region12: #{neural_network_forward.7} parent=0 // pred_region
    _
  $region13: #{neural_network_forward.7} parent=0 // pred_fallthru
    _
  // Predicated region
  $region14: #{neural_network_forward.7} parent=0 // pred_check
    _
  $region15: #{neural_network_forward.7} parent=0 // pred_check_branch
    %17 = sbr.rel (0) target = $region17
  $region16: #{neural_network_forward.7} parent=0 // pred_region
    _
  $region17: #{neural_network_forward.7} parent=0 // pred_fallthru
    _
  // Predicated region
  $region18: #{neural_network_forward.7} parent=0 // pred_check
    _
  $region19: #{neural_network_forward.7} parent=0 // pred_check_branch
    %19 = sbr.rel (0) target = $region21
  $region20: #{neural_network_forward.7} parent=0 // pred_region
    _
  $region21: #{neural_network_forward.7} parent=0 // pred_fallthru
    _
  %v21 = vld [vmem:[%s0] sm:$0xff]
  %v22 = vld [vmem:[%s0 + $0x8] sm:$0xff]
  %v23 = vld [vmem:[%s0 + $0x10] sm:$0xff]
  %v24 = vld [vmem:[%s0 + $0x18] sm:$0xff]
  %v25 = vld [vmem:[%s1] sm:$0xff]
  %v26 = vld [vmem:[%s1 + $0x8] sm:$0xff]
  %v27 = vld [vmem:[%s1 + $0x10] sm:$0xff]
  %v28 = vld [vmem:[%s1 + $0x18] sm:$0xff]
  %v29 = vld [vmem:[%s1 + $0x20] sm:$0xff]
  %v30 = vld [vmem:[%s1 + $0x28] sm:$0xff]
  %v31 = vld [vmem:[%s1 + $0x30] sm:$0xff]
  %v32 = vld [vmem:[%s1 + $0x38] sm:$0xff]
  %v33 = vld [vmem:[%s1 + $0x40] sm:$0xff]
  %v34 = vld [vmem:[%s1 + $0x48] sm:$0xff]
  %v35 = vld [vmem:[%s1 + $0x50] sm:$0xff]
  %v36 = vld [vmem:[%s1 + $0x58] sm:$0xff]
  %v37 = vld [vmem:[%s1 + $0x60] sm:$0xff]
  %v38 = vld [vmem:[%s1 + $0x68] sm:$0xff]
  %v39 = vld [vmem:[%s1 + $0x70] sm:$0xff]
  %v40 = vld [vmem:[%s1 + $0x78] sm:$0xff]
  %v41 = vld [vmem:[%s1 + $0x80] sm:$0xff]
  %v42 = vld [vmem:[%s1 + $0x88] sm:$0xff]
  %v43 = vld [vmem:[%s1 + $0x90] sm:$0xff]
  %v44 = vld [vmem:[%s1 + $0x98] sm:$0xff]
  %v45 = vld [vmem:[%s1 + $0xa0] sm:$0xff]
  %v46 = vld [vmem:[%s1 + $0xa8] sm:$0xff]
  %v47 = vld [vmem:[%s1 + $0xb0] sm:$0xff]
  %v48 = vld [vmem:[%s1 + $0xb8] sm:$0xff]
  %v49 = vld [vmem:[%s1 + $0xc0] sm:$0xff]
  %v50 = vld [vmem:[%s1 + $0xc8] sm:$0xff]
  %v51 = vld [vmem:[%s1 + $0xd0] sm:$0xff]
  %v52 = vld [vmem:[%s1 + $0xd8] sm:$0xff]
  %v53 = vld [vmem:[%s1 + $0xe0] sm:$0xff]
  %v54 = vld [vmem:[%s1 + $0xe8] sm:$0xff]
  %v55 = vld [vmem:[%s1 + $0xf0] sm:$0xff]
  %v56 = vld [vmem:[%s1 + $0xf8] sm:$0xff]
  %v57 = vld [vmem:[%s1 + $0x100] sm:$0xff]
  %v58 = vld [vmem:[%s1 + $0x108] sm:$0xff]
  %v59 = vld [vmem:[%s1 + $0x110] sm:$0xff]
  %v60 = vld [vmem:[%s1 + $0x118] sm:$0xff]
  %v61 = vld [vmem:[%s1 + $0x120] sm:$0xff]
  %v62 = vld [vmem:[%s1 + $0x128] sm:$0xff]
  %v63 = vld [vmem:[%s1 + $0x130] sm:$0xff]
  %v64 = vld [vmem:[%s1 + $0x138] sm:$0xff]
  %v65 = vld [vmem:[%s1 + $0x140] sm:$0xff]
  %v66 = vld [vmem:[%s1 + $0x148] sm:$0xff]
  %v67 = vld [vmem:[%s1 + $0x150] sm:$0xff]
  %v68 = vld [vmem:[%s1 + $0x158] sm:$0xff]
  %v69 = vld [vmem:[%s1 + $0x160] sm:$0xff]
  %v70 = vld [vmem:[%s1 + $0x168] sm:$0xff]
  %v71 = vld [vmem:[%s1 + $0x170] sm:$0xff]
  %v72 = vld [vmem:[%s1 + $0x178] sm:$0xff]
  %v73 = vld [vmem:[%s1 + $0x180] sm:$0xff]
  %v74 = vld [vmem:[%s1 + $0x188] sm:$0xff]
  %v75 = vld [vmem:[%s1 + $0x190] sm:$0xff]
  %v76 = vld [vmem:[%s1 + $0x198] sm:$0xff]
  %v77 = vld [vmem:[%s1 + $0x1a0] sm:$0xff]
  %v78 = vld [vmem:[%s1 + $0x1a8] sm:$0xff]
  %v79 = vld [vmem:[%s1 + $0x1b0] sm:$0xff]
  %v80 = vld [vmem:[%s1 + $0x1b8] sm:$0xff]
  %v81 = vld [vmem:[%s1 + $0x1c0] sm:$0xff]
  %v82 = vld [vmem:[%s1 + $0x1c8] sm:$0xff]
  %v83 = vld [vmem:[%s1 + $0x1d0] sm:$0xff]
  %v84 = vld [vmem:[%s1 + $0x1d8] sm:$0xff]
  %v85 = vld [vmem:[%s1 + $0x1e0] sm:$0xff]
  %v86 = vld [vmem:[%s1 + $0x1e8] sm:$0xff]
  %v87 = vld [vmem:[%s1 + $0x1f0] sm:$0xff]
  %v88 = vld [vmem:[%s1 + $0x1f8] sm:$0xff]
  %v89 = vld [vmem:[%s1 + $0x200] sm:$0xff]
  %v90 = vld [vmem:[%s1 + $0x208] sm:$0xff]
  %v91 = vld [vmem:[%s1 + $0x210] sm:$0xff]
  %v92 = vld [vmem:[%s1 + $0x218] sm:$0xff]
  %v93 = vld [vmem:[%s1 + $0x220] sm:$0xff]
  %v94 = vld [vmem:[%s1 + $0x228] sm:$0xff]
  %v95 = vld [vmem:[%s1 + $0x230] sm:$0xff]
  %v96 = vld [vmem:[%s1 + $0x238] sm:$0xff]
  %v97 = vld [vmem:[%s1 + $0x240] sm:$0xff]
  %v98 = vld [vmem:[%s1 + $0x248] sm:$0xff]
  %v99 = vld [vmem:[%s1 + $0x250] sm:$0xff]
  %v100 = vld [vmem:[%s1 + $0x258] sm:$0xff]
  %v101 = vld [vmem:[%s1 + $0x260] sm:$0xff]
  %v102 = vld [vmem:[%s1 + $0x268] sm:$0xff]
  %v103 = vld [vmem:[%s1 + $0x270] sm:$0xff]
  %v104 = vld [vmem:[%s1 + $0x278] sm:$0xff]
  %v105 = vld [vmem:[%s1 + $0x280] sm:$0xff]
  %v106 = vld [vmem:[%s1 + $0x288] sm:$0xff]
  %v107 = vld [vmem:[%s1 + $0x290] sm:$0xff]
  %v108 = vld [vmem:[%s1 + $0x298] sm:$0xff]
  %v109 = vld [vmem:[%s1 + $0x2a0] sm:$0xff]
  %v110 = vld [vmem:[%s1 + $0x2a8] sm:$0xff]
  %v111 = vld [vmem:[%s1 + $0x2b0] sm:$0xff]
  %v112 = vld [vmem:[%s1 + $0x2b8] sm:$0xff]
  %v113 = vld [vmem:[%s1 + $0x2c0] sm:$0xff]
  %v114 = vld [vmem:[%s1 + $0x2c8] sm:$0xff]
  %v115 = vld [vmem:[%s1 + $0x2d0] sm:$0xff]
  %v116 = vld [vmem:[%s1 + $0x2d8] sm:$0xff]
  %v117 = vld [vmem:[%s1 + $0x2e0] sm:$0xff]
  %v118 = vld [vmem:[%s1 + $0x2e8] sm:$0xff]
  %v119 = vld [vmem:[%s1 + $0x2f0] sm:$0xff]
  %v120 = vld [vmem:[%s1 + $0x2f8] sm:$0xff]
  %v121 = vld [vmem:[%s1 + $0x300] sm:$0xff]
  %v122 = vld [vmem:[%s1 + $0x308] sm:$0xff]
  %v123 = vld [vmem:[%s1 + $0x310] sm:$0xff]
  %v124 = vld [vmem:[%s1 + $0x318] sm:$0xff]
  %v125 = vld [vmem:[%s1 + $0x320] sm:$0xff]
  %v126 = vld [vmem:[%s1 + $0x328] sm:$0xff]
  %v127 = vld [vmem:[%s1 + $0x330] sm:$0xff]
  %v128 = vld [vmem:[%s1 + $0x338] sm:$0xff]
  %v129 = vld [vmem:[%s1 + $0x340] sm:$0xff]
  %v130 = vld [vmem:[%s1 + $0x348] sm:$0xff]
  %v131 = vld [vmem:[%s1 + $0x350] sm:$0xff]
  %v132 = vld [vmem:[%s1 + $0x358] sm:$0xff]
  %v133 = vld [vmem:[%s1 + $0x360] sm:$0xff]
  %v134 = vld [vmem:[%s1 + $0x368] sm:$0xff]
  %v135 = vld [vmem:[%s1 + $0x370] sm:$0xff]
  %v136 = vld [vmem:[%s1 + $0x378] sm:$0xff]
  %v137 = vld [vmem:[%s1 + $0x380] sm:$0xff]
  %v138 = vld [vmem:[%s1 + $0x388] sm:$0xff]
  %v139 = vld [vmem:[%s1 + $0x390] sm:$0xff]
  %v140 = vld [vmem:[%s1 + $0x398] sm:$0xff]
  %v141 = vld [vmem:[%s1 + $0x3a0] sm:$0xff]
  %v142 = vld [vmem:[%s1 + $0x3a8] sm:$0xff]
  %v143 = vld [vmem:[%s1 + $0x3b0] sm:$0xff]
  %v144 = vld [vmem:[%s1 + $0x3b8] sm:$0xff]
  %v145 = vld [vmem:[%s1 + $0x3c0] sm:$0xff]
  %v146 = vld [vmem:[%s1 + $0x3c8] sm:$0xff]
  %v147 = vld [vmem:[%s1 + $0x3d0] sm:$0xff]
  %v148 = vld [vmem:[%s1 + $0x3d8] sm:$0xff]
  %v149 = vld [vmem:[%s1 + $0x3e0] sm:$0xff]
  %v150 = vld [vmem:[%s1 + $0x3e8] sm:$0xff]
  %v151 = vld [vmem:[%s1 + $0x3f0] sm:$0xff]
  %v152 = vld [vmem:[%s1 + $0x3f8] sm:$0xff]
  %v153 = vld [vmem:[%s1 + $0x400] sm:$0xff]
  %v154 = vld [vmem:[%s1 + $0x408] sm:$0xff]
  %v155 = vld [vmem:[%s1 + $0x410] sm:$0xff]
  %v156 = vld [vmem:[%s1 + $0x418] sm:$0xff]
  %v157 = vld [vmem:[%s1 + $0x420] sm:$0xff]
  %v158 = vld [vmem:[%s1 + $0x428] sm:$0xff]
  %v159 = vld [vmem:[%s1 + $0x430] sm:$0xff]
  %v160 = vld [vmem:[%s1 + $0x438] sm:$0xff]
  %v161 = vld [vmem:[%s1 + $0x440] sm:$0xff]
  %v162 = vld [vmem:[%s1 + $0x448] sm:$0xff]
  %v163 = vld [vmem:[%s1 + $0x450] sm:$0xff]
  %v164 = vld [vmem:[%s1 + $0x458] sm:$0xff]
  %v165 = vld [vmem:[%s1 + $0x460] sm:$0xff]
  %v166 = vld [vmem:[%s1 + $0x468] sm:$0xff]
  %v167 = vld [vmem:[%s1 + $0x470] sm:$0xff]
  %v168 = vld [vmem:[%s1 + $0x478] sm:$0xff]
  %v169 = vld [vmem:[%s1 + $0x480] sm:$0xff]
  %v170 = vld [vmem:[%s1 + $0x488] sm:$0xff]
  %v171 = vld [vmem:[%s1 + $0x490] sm:$0xff]
  %v172 = vld [vmem:[%s1 + $0x498] sm:$0xff]
  %v173 = vld [vmem:[%s1 + $0x4a0] sm:$0xff]
  %v174 = vld [vmem:[%s1 + $0x4a8] sm:$0xff]
  %v175 = vld [vmem:[%s1 + $0x4b0] sm:$0xff]
  %v176 = vld [vmem:[%s1 + $0x4b8] sm:$0xff]
  %v177 = vld [vmem:[%s1 + $0x4c0] sm:$0xff]
  %v178 = vld [vmem:[%s1 + $0x4c8] sm:$0xff]
  %v179 = vld [vmem:[%s1 + $0x4d0] sm:$0xff]
  %v180 = vld [vmem:[%s1 + $0x4d8] sm:$0xff]
  %v181 = vld [vmem:[%s1 + $0x4e0] sm:$0xff]
  %v182 = vld [vmem:[%s1 + $0x4e8] sm:$0xff]
  %v183 = vld [vmem:[%s1 + $0x4f0] sm:$0xff]
  %v184 = vld [vmem:[%s1 + $0x4f8] sm:$0xff]
  %v185 = vld [vmem:[%s1 + $0x500] sm:$0xff]
  %v186 = vld [vmem:[%s1 + $0x508] sm:$0xff]
  %v187 = vld [vmem:[%s1 + $0x510] sm:$0xff]
  %v188 = vld [vmem:[%s1 + $0x518] sm:$0xff]
  %v189 = vld [vmem:[%s1 + $0x520] sm:$0xff]
  %v190 = vld [vmem:[%s1 + $0x528] sm:$0xff]
  %v191 = vld [vmem:[%s1 + $0x530] sm:$0xff]
  %v192 = vld [vmem:[%s1 + $0x538] sm:$0xff]
  %v193 = vld [vmem:[%s1 + $0x540] sm:$0xff]
  %v194 = vld [vmem:[%s1 + $0x548] sm:$0xff]
  %v195 = vld [vmem:[%s1 + $0x550] sm:$0xff]
  %v196 = vld [vmem:[%s1 + $0x558] sm:$0xff]
  %v197 = vld [vmem:[%s1 + $0x560] sm:$0xff]
  %v198 = vld [vmem:[%s1 + $0x568] sm:$0xff]
  %v199 = vld [vmem:[%s1 + $0x570] sm:$0xff]
  %v200 = vld [vmem:[%s1 + $0x578] sm:$0xff]
  %v201 = vld [vmem:[%s1 + $0x580] sm:$0xff]
  %v202 = vld [vmem:[%s1 + $0x588] sm:$0xff]
  %v203 = vld [vmem:[%s1 + $0x590] sm:$0xff]
  %v204 = vld [vmem:[%s1 + $0x598] sm:$0xff]
  %v205 = vld [vmem:[%s1 + $0x5a0] sm:$0xff]
  %v206 = vld [vmem:[%s1 + $0x5a8] sm:$0xff]
  %v207 = vld [vmem:[%s1 + $0x5b0] sm:$0xff]
  %v208 = vld [vmem:[%s1 + $0x5b8] sm:$0xff]
  %v209 = vld [vmem:[%s1 + $0x5c0] sm:$0xff]
  %v210 = vld [vmem:[%s1 + $0x5c8] sm:$0xff]
  %v211 = vld [vmem:[%s1 + $0x5d0] sm:$0xff]
  %v212 = vld [vmem:[%s1 + $0x5d8] sm:$0xff]
  %v213 = vld [vmem:[%s1 + $0x5e0] sm:$0xff]
  %v214 = vld [vmem:[%s1 + $0x5e8] sm:$0xff]
  %v215 = vld [vmem:[%s1 + $0x5f0] sm:$0xff]
  %v216 = vld [vmem:[%s1 + $0x5f8] sm:$0xff]
  %v217 = vld [vmem:[%s1 + $0x600] sm:$0xff]
  %v218 = vld [vmem:[%s1 + $0x608] sm:$0xff]
  %v219 = vld [vmem:[%s1 + $0x610] sm:$0xff]
  %v220 = vld [vmem:[%s1 + $0x618] sm:$0xff]
  %v221 = vld [vmem:[%s1 + $0x620] sm:$0xff]
  %v222 = vld [vmem:[%s1 + $0x628] sm:$0xff]
  %v223 = vld [vmem:[%s1 + $0x630] sm:$0xff]
  %v224 = vld [vmem:[%s1 + $0x638] sm:$0xff]
  %v225 = vld [vmem:[%s1 + $0x640] sm:$0xff]
  %v226 = vld [vmem:[%s1 + $0x648] sm:$0xff]
  %v227 = vld [vmem:[%s1 + $0x650] sm:$0xff]
  %v228 = vld [vmem:[%s1 + $0x658] sm:$0xff]
  %v229 = vld [vmem:[%s1 + $0x660] sm:$0xff]
  %v230 = vld [vmem:[%s1 + $0x668] sm:$0xff]
  %v231 = vld [vmem:[%s1 + $0x670] sm:$0xff]
  %v232 = vld [vmem:[%s1 + $0x678] sm:$0xff]
  %v233 = vld [vmem:[%s1 + $0x680] sm:$0xff]
  %v234 = vld [vmem:[%s1 + $0x688] sm:$0xff]
  %v235 = vld [vmem:[%s1 + $0x690] sm:$0xff]
  %v236 = vld [vmem:[%s1 + $0x698] sm:$0xff]
  %v237 = vld [vmem:[%s1 + $0x6a0] sm:$0xff]
  %v238 = vld [vmem:[%s1 + $0x6a8] sm:$0xff]
  %v239 = vld [vmem:[%s1 + $0x6b0] sm:$0xff]
  %v240 = vld [vmem:[%s1 + $0x6b8] sm:$0xff]
  %v241 = vld [vmem:[%s1 + $0x6c0] sm:$0xff]
  %v242 = vld [vmem:[%s1 + $0x6c8] sm:$0xff]
  %v243 = vld [vmem:[%s1 + $0x6d0] sm:$0xff]
  %v244 = vld [vmem:[%s1 + $0x6d8] sm:$0xff]
  %v245 = vld [vmem:[%s1 + $0x6e0] sm:$0xff]
  %v246 = vld [vmem:[%s1 + $0x6e8] sm:$0xff]
  %v247 = vld [vmem:[%s1 + $0x6f0] sm:$0xff]
  %v248 = vld [vmem:[%s1 + $0x6f8] sm:$0xff]
  %v249 = vld [vmem:[%s1 + $0x700] sm:$0xff]
  %v250 = vld [vmem:[%s1 + $0x708] sm:$0xff]
  %v251 = vld [vmem:[%s1 + $0x710] sm:$0xff]
  %v252 = vld [vmem:[%s1 + $0x718] sm:$0xff]
  %v253 = vld [vmem:[%s1 + $0x720] sm:$0xff]
  %v254 = vld [vmem:[%s1 + $0x728] sm:$0xff]
  %v255 = vld [vmem:[%s1 + $0x730] sm:$0xff]
  %v256 = vld [vmem:[%s1 + $0x738] sm:$0xff]
  %v257 = vld [vmem:[%s1 + $0x740] sm:$0xff]
  %v258 = vld [vmem:[%s1 + $0x748] sm:$0xff]
  %v259 = vld [vmem:[%s1 + $0x750] sm:$0xff]
  %v260 = vld [vmem:[%s1 + $0x758] sm:$0xff]
  %v261 = vld [vmem:[%s1 + $0x760] sm:$0xff]
  %v262 = vld [vmem:[%s1 + $0x768] sm:$0xff]
  %v263 = vld [vmem:[%s1 + $0x770] sm:$0xff]
  %v264 = vld [vmem:[%s1 + $0x778] sm:$0xff]
  %v265 = vld [vmem:[%s1 + $0x780] sm:$0xff]
  %v266 = vld [vmem:[%s1 + $0x788] sm:$0xff]
  %v267 = vld [vmem:[%s1 + $0x790] sm:$0xff]
  %v268 = vld [vmem:[%s1 + $0x798] sm:$0xff]
  %v269 = vld [vmem:[%s1 + $0x7a0] sm:$0xff]
  %v270 = vld [vmem:[%s1 + $0x7a8] sm:$0xff]
  %v271 = vld [vmem:[%s1 + $0x7b0] sm:$0xff]
  %v272 = vld [vmem:[%s1 + $0x7b8] sm:$0xff]
  %v273 = vld [vmem:[%s1 + $0x7c0] sm:$0xff]
  %v274 = vld [vmem:[%s1 + $0x7c8] sm:$0xff]
  %v275 = vld [vmem:[%s1 + $0x7d0] sm:$0xff]
  %v276 = vld [vmem:[%s1 + $0x7d8] sm:$0xff]
  %v277 = vld [vmem:[%s1 + $0x7e0] sm:$0xff]
  %v278 = vld [vmem:[%s1 + $0x7e8] sm:$0xff]
  %v279 = vld [vmem:[%s1 + $0x7f0] sm:$0xff]
  %v280 = vld [vmem:[%s1 + $0x7f8] sm:$0xff]
  %v281 = vld [vmem:[%s2] sm:$0xf]
  %v283 = vlaneseq
  %v284 = vshrl.u32 %v283, 7
  %v285 = vsub.s32 0, %v284
  %v286 = vrot.slane %v281, %v285
  %v287 = vlaneseq
  %v288 = vshrl.u32 %v287, 7
  %v289 = vsub.s32 1, %v288
  %v290 = vrot.slane %v281, %v289
  %v291 = vlaneseq
  %v292 = vshrl.u32 %v291, 7
  %v293 = vsub.s32 2, %v292
  %v294 = vrot.slane %v281, %v293
  %v295 = vlaneseq
  %v296 = vshrl.u32 %v295, 7
  %v297 = vsub.s32 3, %v296
  %v298 = vrot.slane %v281, %v297
  %v307 = vunpack.c.l.b16 %v21
  %v308 = vunpack.c.h.b16 %v21
  %v309 = vunpack.c.l.b16 %v22
  %v310 = vunpack.c.h.b16 %v22
  %v311 = vunpack.c.l.b16 %v23
  %v312 = vunpack.c.h.b16 %v23
  %v313 = vunpack.c.l.b16 %v24
  %v314 = vunpack.c.h.b16 %v24
  %v315 = vpack.c.b16 %v307, %v307
  %v316 = vpack.c.b16 %v308, %v308
  %v317 = vpack.c.b16 %v309, %v309
  %v318 = vpack.c.b16 %v310, %v310
  %v319 = vpack.c.b16 %v311, %v311
  %v320 = vpack.c.b16 %v312, %v312
  %v321 = vpack.c.b16 %v313, %v313
  %v322 = vpack.c.b16 %v314, %v314
  %v587 = vunpack.c.l.b16 %v25
  %v588 = vunpack.c.h.b16 %v25
  %v589 = vunpack.c.l.b16 %v26
  %v590 = vunpack.c.h.b16 %v26
  %v591 = vunpack.c.l.b16 %v27
  %v592 = vunpack.c.h.b16 %v27
  %v593 = vunpack.c.l.b16 %v28
  %v594 = vunpack.c.h.b16 %v28
  %v595 = vunpack.c.l.b16 %v29
  %v596 = vunpack.c.h.b16 %v29
  %v597 = vunpack.c.l.b16 %v30
  %v598 = vunpack.c.h.b16 %v30
  %v599 = vunpack.c.l.b16 %v31
  %v600 = vunpack.c.h.b16 %v31
  %v601 = vunpack.c.l.b16 %v32
  %v602 = vunpack.c.h.b16 %v32
  %v603 = vunpack.c.l.b16 %v33
  %v604 = vunpack.c.h.b16 %v33
  %v605 = vunpack.c.l.b16 %v34
  %v606 = vunpack.c.h.b16 %v34
  %v607 = vunpack.c.l.b16 %v35
  %v608 = vunpack.c.h.b16 %v35
  %v609 = vunpack.c.l.b16 %v36
  %v610 = vunpack.c.h.b16 %v36
  %v611 = vunpack.c.l.b16 %v37
  %v612 = vunpack.c.h.b16 %v37
  %v613 = vunpack.c.l.b16 %v38
  %v614 = vunpack.c.h.b16 %v38
  %v615 = vunpack.c.l.b16 %v39
  %v616 = vunpack.c.h.b16 %v39
  %v617 = vunpack.c.l.b16 %v40
  %v618 = vunpack.c.h.b16 %v40
  %v619 = vunpack.c.l.b16 %v41
  %v620 = vunpack.c.h.b16 %v41
  %v621 = vunpack.c.l.b16 %v42
  %v622 = vunpack.c.h.b16 %v42
  %v623 = vunpack.c.l.b16 %v43
  %v624 = vunpack.c.h.b16 %v43
  %v625 = vunpack.c.l.b16 %v44
  %v626 = vunpack.c.h.b16 %v44
  %v627 = vunpack.c.l.b16 %v45
  %v628 = vunpack.c.h.b16 %v45
  %v629 = vunpack.c.l.b16 %v46
  %v630 = vunpack.c.h.b16 %v46
  %v631 = vunpack.c.l.b16 %v47
  %v632 = vunpack.c.h.b16 %v47
  %v633 = vunpack.c.l.b16 %v48
  %v634 = vunpack.c.h.b16 %v48
  %v635 = vunpack.c.l.b16 %v49
  %v636 = vunpack.c.h.b16 %v49
  %v637 = vunpack.c.l.b16 %v50
  %v638 = vunpack.c.h.b16 %v50
  %v639 = vunpack.c.l.b16 %v51
  %v640 = vunpack.c.h.b16 %v51
  %v641 = vunpack.c.l.b16 %v52
  %v642 = vunpack.c.h.b16 %v52
  %v643 = vunpack.c.l.b16 %v53
  %v644 = vunpack.c.h.b16 %v53
  %v645 = vunpack.c.l.b16 %v54
  %v646 = vunpack.c.h.b16 %v54
  %v647 = vunpack.c.l.b16 %v55
  %v648 = vunpack.c.h.b16 %v55
  %v649 = vunpack.c.l.b16 %v56
  %v650 = vunpack.c.h.b16 %v56
  %v651 = vunpack.c.l.b16 %v57
  %v652 = vunpack.c.h.b16 %v57
  %v653 = vunpack.c.l.b16 %v58
  %v654 = vunpack.c.h.b16 %v58
  %v655 = vunpack.c.l.b16 %v59
  %v656 = vunpack.c.h.b16 %v59
  %v657 = vunpack.c.l.b16 %v60
  %v658 = vunpack.c.h.b16 %v60
  %v659 = vunpack.c.l.b16 %v61
  %v660 = vunpack.c.h.b16 %v61
  %v661 = vunpack.c.l.b16 %v62
  %v662 = vunpack.c.h.b16 %v62
  %v663 = vunpack.c.l.b16 %v63
  %v664 = vunpack.c.h.b16 %v63
  %v665 = vunpack.c.l.b16 %v64
  %v666 = vunpack.c.h.b16 %v64
  %v667 = vunpack.c.l.b16 %v65
  %v668 = vunpack.c.h.b16 %v65
  %v669 = vunpack.c.l.b16 %v66
  %v670 = vunpack.c.h.b16 %v66
  %v671 = vunpack.c.l.b16 %v67
  %v672 = vunpack.c.h.b16 %v67
  %v673 = vunpack.c.l.b16 %v68
  %v674 = vunpack.c.h.b16 %v68
  %v675 = vunpack.c.l.b16 %v69
  %v676 = vunpack.c.h.b16 %v69
  %v677 = vunpack.c.l.b16 %v70
  %v678 = vunpack.c.h.b16 %v70
  %v679 = vunpack.c.l.b16 %v71
  %v680 = vunpack.c.h.b16 %v71
  %v681 = vunpack.c.l.b16 %v72
  %v682 = vunpack.c.h.b16 %v72
  %v683 = vunpack.c.l.b16 %v73
  %v684 = vunpack.c.h.b16 %v73
  %v685 = vunpack.c.l.b16 %v74
  %v686 = vunpack.c.h.b16 %v74
  %v687 = vunpack.c.l.b16 %v75
  %v688 = vunpack.c.h.b16 %v75
  %v689 = vunpack.c.l.b16 %v76
  %v690 = vunpack.c.h.b16 %v76
  %v691 = vunpack.c.l.b16 %v77
  %v692 = vunpack.c.h.b16 %v77
  %v693 = vunpack.c.l.b16 %v78
  %v694 = vunpack.c.h.b16 %v78
  %v695 = vunpack.c.l.b16 %v79
  %v696 = vunpack.c.h.b16 %v79
  %v697 = vunpack.c.l.b16 %v80
  %v698 = vunpack.c.h.b16 %v80
  %v699 = vunpack.c.l.b16 %v81
  %v700 = vunpack.c.h.b16 %v81
  %v701 = vunpack.c.l.b16 %v82
  %v702 = vunpack.c.h.b16 %v82
  %v703 = vunpack.c.l.b16 %v83
  %v704 = vunpack.c.h.b16 %v83
  %v705 = vunpack.c.l.b16 %v84
  %v706 = vunpack.c.h.b16 %v84
  %v707 = vunpack.c.l.b16 %v85
  %v708 = vunpack.c.h.b16 %v85
  %v709 = vunpack.c.l.b16 %v86
  %v710 = vunpack.c.h.b16 %v86
  %v711 = vunpack.c.l.b16 %v87
  %v712 = vunpack.c.h.b16 %v87
  %v713 = vunpack.c.l.b16 %v88
  %v714 = vunpack.c.h.b16 %v88
  %v715 = vunpack.c.l.b16 %v89
  %v716 = vunpack.c.h.b16 %v89
  %v717 = vunpack.c.l.b16 %v90
  %v718 = vunpack.c.h.b16 %v90
  %v719 = vunpack.c.l.b16 %v91
  %v720 = vunpack.c.h.b16 %v91
  %v721 = vunpack.c.l.b16 %v92
  %v722 = vunpack.c.h.b16 %v92
  %v723 = vunpack.c.l.b16 %v93
  %v724 = vunpack.c.h.b16 %v93
  %v725 = vunpack.c.l.b16 %v94
  %v726 = vunpack.c.h.b16 %v94
  %v727 = vunpack.c.l.b16 %v95
  %v728 = vunpack.c.h.b16 %v95
  %v729 = vunpack.c.l.b16 %v96
  %v730 = vunpack.c.h.b16 %v96
  %v731 = vunpack.c.l.b16 %v97
  %v732 = vunpack.c.h.b16 %v97
  %v733 = vunpack.c.l.b16 %v98
  %v734 = vunpack.c.h.b16 %v98
  %v735 = vunpack.c.l.b16 %v99
  %v736 = vunpack.c.h.b16 %v99
  %v737 = vunpack.c.l.b16 %v100
  %v738 = vunpack.c.h.b16 %v100
  %v739 = vunpack.c.l.b16 %v101
  %v740 = vunpack.c.h.b16 %v101
  %v741 = vunpack.c.l.b16 %v102
  %v742 = vunpack.c.h.b16 %v102
  %v743 = vunpack.c.l.b16 %v103
  %v744 = vunpack.c.h.b16 %v103
  %v745 = vunpack.c.l.b16 %v104
  %v746 = vunpack.c.h.b16 %v104
  %v747 = vunpack.c.l.b16 %v105
  %v748 = vunpack.c.h.b16 %v105
  %v749 = vunpack.c.l.b16 %v106
  %v750 = vunpack.c.h.b16 %v106
  %v751 = vunpack.c.l.b16 %v107
  %v752 = vunpack.c.h.b16 %v107
  %v753 = vunpack.c.l.b16 %v108
  %v754 = vunpack.c.h.b16 %v108
  %v755 = vunpack.c.l.b16 %v109
  %v756 = vunpack.c.h.b16 %v109
  %v757 = vunpack.c.l.b16 %v110
  %v758 = vunpack.c.h.b16 %v110
  %v759 = vunpack.c.l.b16 %v111
  %v760 = vunpack.c.h.b16 %v111
  %v761 = vunpack.c.l.b16 %v112
  %v762 = vunpack.c.h.b16 %v112
  %v763 = vunpack.c.l.b16 %v113
  %v764 = vunpack.c.h.b16 %v113
  %v765 = vunpack.c.l.b16 %v114
  %v766 = vunpack.c.h.b16 %v114
  %v767 = vunpack.c.l.b16 %v115
  %v768 = vunpack.c.h.b16 %v115
  %v769 = vunpack.c.l.b16 %v116
  %v770 = vunpack.c.h.b16 %v116
  %v771 = vunpack.c.l.b16 %v117
  %v772 = vunpack.c.h.b16 %v117
  %v773 = vunpack.c.l.b16 %v118
  %v774 = vunpack.c.h.b16 %v118
  %v775 = vunpack.c.l.b16 %v119
  %v776 = vunpack.c.h.b16 %v119
  %v777 = vunpack.c.l.b16 %v120
  %v778 = vunpack.c.h.b16 %v120
  %v779 = vunpack.c.l.b16 %v121
  %v780 = vunpack.c.h.b16 %v121
  %v781 = vunpack.c.l.b16 %v122
  %v782 = vunpack.c.h.b16 %v122
  %v783 = vunpack.c.l.b16 %v123
  %v784 = vunpack.c.h.b16 %v123
  %v785 = vunpack.c.l.b16 %v124
  %v786 = vunpack.c.h.b16 %v124
  %v787 = vunpack.c.l.b16 %v125
  %v788 = vunpack.c.h.b16 %v125
  %v789 = vunpack.c.l.b16 %v126
  %v790 = vunpack.c.h.b16 %v126
  %v791 = vunpack.c.l.b16 %v127
  %v792 = vunpack.c.h.b16 %v127
  %v793 = vunpack.c.l.b16 %v128
  %v794 = vunpack.c.h.b16 %v128
  %v795 = vunpack.c.l.b16 %v129
  %v796 = vunpack.c.h.b16 %v129
  %v797 = vunpack.c.l.b16 %v130
  %v798 = vunpack.c.h.b16 %v130
  %v799 = vunpack.c.l.b16 %v131
  %v800 = vunpack.c.h.b16 %v131
  %v801 = vunpack.c.l.b16 %v132
  %v802 = vunpack.c.h.b16 %v132
  %v803 = vunpack.c.l.b16 %v133
  %v804 = vunpack.c.h.b16 %v133
  %v805 = vunpack.c.l.b16 %v134
  %v806 = vunpack.c.h.b16 %v134
  %v807 = vunpack.c.l.b16 %v135
  %v808 = vunpack.c.h.b16 %v135
  %v809 = vunpack.c.l.b16 %v136
  %v810 = vunpack.c.h.b16 %v136
  %v811 = vunpack.c.l.b16 %v137
  %v812 = vunpack.c.h.b16 %v137
  %v813 = vunpack.c.l.b16 %v138
  %v814 = vunpack.c.h.b16 %v138
  %v815 = vunpack.c.l.b16 %v139
  %v816 = vunpack.c.h.b16 %v139
  %v817 = vunpack.c.l.b16 %v140
  %v818 = vunpack.c.h.b16 %v140
  %v819 = vunpack.c.l.b16 %v141
  %v820 = vunpack.c.h.b16 %v141
  %v821 = vunpack.c.l.b16 %v142
  %v822 = vunpack.c.h.b16 %v142
  %v823 = vunpack.c.l.b16 %v143
  %v824 = vunpack.c.h.b16 %v143
  %v825 = vunpack.c.l.b16 %v144
  %v826 = vunpack.c.h.b16 %v144
  %v827 = vunpack.c.l.b16 %v145
  %v828 = vunpack.c.h.b16 %v145
  %v829 = vunpack.c.l.b16 %v146
  %v830 = vunpack.c.h.b16 %v146
  %v831 = vunpack.c.l.b16 %v147
  %v832 = vunpack.c.h.b16 %v147
  %v833 = vunpack.c.l.b16 %v148
  %v834 = vunpack.c.h.b16 %v148
  %v835 = vunpack.c.l.b16 %v149
  %v836 = vunpack.c.h.b16 %v149
  %v837 = vunpack.c.l.b16 %v150
  %v838 = vunpack.c.h.b16 %v150
  %v839 = vunpack.c.l.b16 %v151
  %v840 = vunpack.c.h.b16 %v151
  %v841 = vunpack.c.l.b16 %v152
  %v842 = vunpack.c.h.b16 %v152
  %v843 = vunpack.c.l.b16 %v153
  %v844 = vunpack.c.h.b16 %v153
  %v845 = vunpack.c.l.b16 %v154
  %v846 = vunpack.c.h.b16 %v154
  %v847 = vunpack.c.l.b16 %v155
  %v848 = vunpack.c.h.b16 %v155
  %v849 = vunpack.c.l.b16 %v156
  %v850 = vunpack.c.h.b16 %v156
  %v851 = vunpack.c.l.b16 %v157
  %v852 = vunpack.c.h.b16 %v157
  %v853 = vunpack.c.l.b16 %v158
  %v854 = vunpack.c.h.b16 %v158
  %v855 = vunpack.c.l.b16 %v159
  %v856 = vunpack.c.h.b16 %v159
  %v857 = vunpack.c.l.b16 %v160
  %v858 = vunpack.c.h.b16 %v160
  %v859 = vunpack.c.l.b16 %v161
  %v860 = vunpack.c.h.b16 %v161
  %v861 = vunpack.c.l.b16 %v162
  %v862 = vunpack.c.h.b16 %v162
  %v863 = vunpack.c.l.b16 %v163
  %v864 = vunpack.c.h.b16 %v163
  %v865 = vunpack.c.l.b16 %v164
  %v866 = vunpack.c.h.b16 %v164
  %v867 = vunpack.c.l.b16 %v165
  %v868 = vunpack.c.h.b16 %v165
  %v869 = vunpack.c.l.b16 %v166
  %v870 = vunpack.c.h.b16 %v166
  %v871 = vunpack.c.l.b16 %v167
  %v872 = vunpack.c.h.b16 %v167
  %v873 = vunpack.c.l.b16 %v168
  %v874 = vunpack.c.h.b16 %v168
  %v875 = vunpack.c.l.b16 %v169
  %v876 = vunpack.c.h.b16 %v169
  %v877 = vunpack.c.l.b16 %v170
  %v878 = vunpack.c.h.b16 %v170
  %v879 = vunpack.c.l.b16 %v171
  %v880 = vunpack.c.h.b16 %v171
  %v881 = vunpack.c.l.b16 %v172
  %v882 = vunpack.c.h.b16 %v172
  %v883 = vunpack.c.l.b16 %v173
  %v884 = vunpack.c.h.b16 %v173
  %v885 = vunpack.c.l.b16 %v174
  %v886 = vunpack.c.h.b16 %v174
  %v887 = vunpack.c.l.b16 %v175
  %v888 = vunpack.c.h.b16 %v175
  %v889 = vunpack.c.l.b16 %v176
  %v890 = vunpack.c.h.b16 %v176
  %v891 = vunpack.c.l.b16 %v177
  %v892 = vunpack.c.h.b16 %v177
  %v893 = vunpack.c.l.b16 %v178
  %v894 = vunpack.c.h.b16 %v178
  %v895 = vunpack.c.l.b16 %v179
  %v896 = vunpack.c.h.b16 %v179
  %v897 = vunpack.c.l.b16 %v180
  %v898 = vunpack.c.h.b16 %v180
  %v899 = vunpack.c.l.b16 %v181
  %v900 = vunpack.c.h.b16 %v181
  %v901 = vunpack.c.l.b16 %v182
  %v902 = vunpack.c.h.b16 %v182
  %v903 = vunpack.c.l.b16 %v183
  %v904 = vunpack.c.h.b16 %v183
  %v905 = vunpack.c.l.b16 %v184
  %v906 = vunpack.c.h.b16 %v184
  %v907 = vunpack.c.l.b16 %v185
  %v908 = vunpack.c.h.b16 %v185
  %v909 = vunpack.c.l.b16 %v186
  %v910 = vunpack.c.h.b16 %v186
  %v911 = vunpack.c.l.b16 %v187
  %v912 = vunpack.c.h.b16 %v187
  %v913 = vunpack.c.l.b16 %v188
  %v914 = vunpack.c.h.b16 %v188
  %v915 = vunpack.c.l.b16 %v189
  %v916 = vunpack.c.h.b16 %v189
  %v917 = vunpack.c.l.b16 %v190
  %v918 = vunpack.c.h.b16 %v190
  %v919 = vunpack.c.l.b16 %v191
  %v920 = vunpack.c.h.b16 %v191
  %v921 = vunpack.c.l.b16 %v192
  %v922 = vunpack.c.h.b16 %v192
  %v923 = vunpack.c.l.b16 %v193
  %v924 = vunpack.c.h.b16 %v193
  %v925 = vunpack.c.l.b16 %v194
  %v926 = vunpack.c.h.b16 %v194
  %v927 = vunpack.c.l.b16 %v195
  %v928 = vunpack.c.h.b16 %v195
  %v929 = vunpack.c.l.b16 %v196
  %v930 = vunpack.c.h.b16 %v196
  %v931 = vunpack.c.l.b16 %v197
  %v932 = vunpack.c.h.b16 %v197
  %v933 = vunpack.c.l.b16 %v198
  %v934 = vunpack.c.h.b16 %v198
  %v935 = vunpack.c.l.b16 %v199
  %v936 = vunpack.c.h.b16 %v199
  %v937 = vunpack.c.l.b16 %v200
  %v938 = vunpack.c.h.b16 %v200
  %v939 = vunpack.c.l.b16 %v201
  %v940 = vunpack.c.h.b16 %v201
  %v941 = vunpack.c.l.b16 %v202
  %v942 = vunpack.c.h.b16 %v202
  %v943 = vunpack.c.l.b16 %v203
  %v944 = vunpack.c.h.b16 %v203
  %v945 = vunpack.c.l.b16 %v204
  %v946 = vunpack.c.h.b16 %v204
  %v947 = vunpack.c.l.b16 %v205
  %v948 = vunpack.c.h.b16 %v205
  %v949 = vunpack.c.l.b16 %v206
  %v950 = vunpack.c.h.b16 %v206
  %v951 = vunpack.c.l.b16 %v207
  %v952 = vunpack.c.h.b16 %v207
  %v953 = vunpack.c.l.b16 %v208
  %v954 = vunpack.c.h.b16 %v208
  %v955 = vunpack.c.l.b16 %v209
  %v956 = vunpack.c.h.b16 %v209
  %v957 = vunpack.c.l.b16 %v210
  %v958 = vunpack.c.h.b16 %v210
  %v959 = vunpack.c.l.b16 %v211
  %v960 = vunpack.c.h.b16 %v211
  %v961 = vunpack.c.l.b16 %v212
  %v962 = vunpack.c.h.b16 %v212
  %v963 = vunpack.c.l.b16 %v213
  %v964 = vunpack.c.h.b16 %v213
  %v965 = vunpack.c.l.b16 %v214
  %v966 = vunpack.c.h.b16 %v214
  %v967 = vunpack.c.l.b16 %v215
  %v968 = vunpack.c.h.b16 %v215
  %v969 = vunpack.c.l.b16 %v216
  %v970 = vunpack.c.h.b16 %v216
  %v971 = vunpack.c.l.b16 %v217
  %v972 = vunpack.c.h.b16 %v217
  %v973 = vunpack.c.l.b16 %v218
  %v974 = vunpack.c.h.b16 %v218
  %v975 = vunpack.c.l.b16 %v219
  %v976 = vunpack.c.h.b16 %v219
  %v977 = vunpack.c.l.b16 %v220
  %v978 = vunpack.c.h.b16 %v220
  %v979 = vunpack.c.l.b16 %v221
  %v980 = vunpack.c.h.b16 %v221
  %v981 = vunpack.c.l.b16 %v222
  %v982 = vunpack.c.h.b16 %v222
  %v983 = vunpack.c.l.b16 %v223
  %v984 = vunpack.c.h.b16 %v223
  %v985 = vunpack.c.l.b16 %v224
  %v986 = vunpack.c.h.b16 %v224
  %v987 = vunpack.c.l.b16 %v225
  %v988 = vunpack.c.h.b16 %v225
  %v989 = vunpack.c.l.b16 %v226
  %v990 = vunpack.c.h.b16 %v226
  %v991 = vunpack.c.l.b16 %v227
  %v992 = vunpack.c.h.b16 %v227
  %v993 = vunpack.c.l.b16 %v228
  %v994 = vunpack.c.h.b16 %v228
  %v995 = vunpack.c.l.b16 %v229
  %v996 = vunpack.c.h.b16 %v229
  %v997 = vunpack.c.l.b16 %v230
  %v998 = vunpack.c.h.b16 %v230
  %v999 = vunpack.c.l.b16 %v231
  %v1000 = vunpack.c.h.b16 %v231
  %v1001 = vunpack.c.l.b16 %v232
  %v1002 = vunpack.c.h.b16 %v232
  %v1003 = vunpack.c.l.b16 %v233
  %v1004 = vunpack.c.h.b16 %v233
  %v1005 = vunpack.c.l.b16 %v234
  %v1006 = vunpack.c.h.b16 %v234
  %v1007 = vunpack.c.l.b16 %v235
  %v1008 = vunpack.c.h.b16 %v235
  %v1009 = vunpack.c.l.b16 %v236
  %v1010 = vunpack.c.h.b16 %v236
  %v1011 = vunpack.c.l.b16 %v237
  %v1012 = vunpack.c.h.b16 %v237
  %v1013 = vunpack.c.l.b16 %v238
  %v1014 = vunpack.c.h.b16 %v238
  %v1015 = vunpack.c.l.b16 %v239
  %v1016 = vunpack.c.h.b16 %v239
  %v1017 = vunpack.c.l.b16 %v240
  %v1018 = vunpack.c.h.b16 %v240
  %v1019 = vunpack.c.l.b16 %v241
  %v1020 = vunpack.c.h.b16 %v241
  %v1021 = vunpack.c.l.b16 %v242
  %v1022 = vunpack.c.h.b16 %v242
  %v1023 = vunpack.c.l.b16 %v243
  %v1024 = vunpack.c.h.b16 %v243
  %v1025 = vunpack.c.l.b16 %v244
  %v1026 = vunpack.c.h.b16 %v244
  %v1027 = vunpack.c.l.b16 %v245
  %v1028 = vunpack.c.h.b16 %v245
  %v1029 = vunpack.c.l.b16 %v246
  %v1030 = vunpack.c.h.b16 %v246
  %v1031 = vunpack.c.l.b16 %v247
  %v1032 = vunpack.c.h.b16 %v247
  %v1033 = vunpack.c.l.b16 %v248
  %v1034 = vunpack.c.h.b16 %v248
  %v1035 = vunpack.c.l.b16 %v249
  %v1036 = vunpack.c.h.b16 %v249
  %v1037 = vunpack.c.l.b16 %v250
  %v1038 = vunpack.c.h.b16 %v250
  %v1039 = vunpack.c.l.b16 %v251
  %v1040 = vunpack.c.h.b16 %v251
  %v1041 = vunpack.c.l.b16 %v252
  %v1042 = vunpack.c.h.b16 %v252
  %v1043 = vunpack.c.l.b16 %v253
  %v1044 = vunpack.c.h.b16 %v253
  %v1045 = vunpack.c.l.b16 %v254
  %v1046 = vunpack.c.h.b16 %v254
  %v1047 = vunpack.c.l.b16 %v255
  %v1048 = vunpack.c.h.b16 %v255
  %v1049 = vunpack.c.l.b16 %v256
  %v1050 = vunpack.c.h.b16 %v256
  %v1051 = vunpack.c.l.b16 %v257
  %v1052 = vunpack.c.h.b16 %v257
  %v1053 = vunpack.c.l.b16 %v258
  %v1054 = vunpack.c.h.b16 %v258
  %v1055 = vunpack.c.l.b16 %v259
  %v1056 = vunpack.c.h.b16 %v259
  %v1057 = vunpack.c.l.b16 %v260
  %v1058 = vunpack.c.h.b16 %v260
  %v1059 = vunpack.c.l.b16 %v261
  %v1060 = vunpack.c.h.b16 %v261
  %v1061 = vunpack.c.l.b16 %v262
  %v1062 = vunpack.c.h.b16 %v262
  %v1063 = vunpack.c.l.b16 %v263
  %v1064 = vunpack.c.h.b16 %v263
  %v1065 = vunpack.c.l.b16 %v264
  %v1066 = vunpack.c.h.b16 %v264
  %v1067 = vunpack.c.l.b16 %v265
  %v1068 = vunpack.c.h.b16 %v265
  %v1069 = vunpack.c.l.b16 %v266
  %v1070 = vunpack.c.h.b16 %v266
  %v1071 = vunpack.c.l.b16 %v267
  %v1072 = vunpack.c.h.b16 %v267
  %v1073 = vunpack.c.l.b16 %v268
  %v1074 = vunpack.c.h.b16 %v268
  %v1075 = vunpack.c.l.b16 %v269
  %v1076 = vunpack.c.h.b16 %v269
  %v1077 = vunpack.c.l.b16 %v270
  %v1078 = vunpack.c.h.b16 %v270
  %v1079 = vunpack.c.l.b16 %v271
  %v1080 = vunpack.c.h.b16 %v271
  %v1081 = vunpack.c.l.b16 %v272
  %v1082 = vunpack.c.h.b16 %v272
  %v1083 = vunpack.c.l.b16 %v273
  %v1084 = vunpack.c.h.b16 %v273
  %v1085 = vunpack.c.l.b16 %v274
  %v1086 = vunpack.c.h.b16 %v274
  %v1087 = vunpack.c.l.b16 %v275
  %v1088 = vunpack.c.h.b16 %v275
  %v1089 = vunpack.c.l.b16 %v276
  %v1090 = vunpack.c.h.b16 %v276
  %v1091 = vunpack.c.l.b16 %v277
  %v1092 = vunpack.c.h.b16 %v277
  %v1093 = vunpack.c.l.b16 %v278
  %v1094 = vunpack.c.h.b16 %v278
  %v1095 = vunpack.c.l.b16 %v279
  %v1096 = vunpack.c.h.b16 %v279
  %v1097 = vunpack.c.l.b16 %v280
  %v1098 = vunpack.c.h.b16 %v280
  %v1099 = vpack.c.b16 %v591, %v587
  %v1100 = vpack.c.b16 %v592, %v588
  %v1101 = vpack.c.b16 %v593, %v589
  %v1102 = vpack.c.b16 %v594, %v590
  %v1103 = vpack.c.b16 %v599, %v595
  %v1104 = vpack.c.b16 %v600, %v596
  %v1105 = vpack.c.b16 %v601, %v597
  %v1106 = vpack.c.b16 %v602, %v598
  %v1107 = vpack.c.b16 %v607, %v603
  %v1108 = vpack.c.b16 %v608, %v604
  %v1109 = vpack.c.b16 %v609, %v605
  %v1110 = vpack.c.b16 %v610, %v606
  %v1111 = vpack.c.b16 %v615, %v611
  %v1112 = vpack.c.b16 %v616, %v612
  %v1113 = vpack.c.b16 %v617, %v613
  %v1114 = vpack.c.b16 %v618, %v614
  %v1115 = vpack.c.b16 %v623, %v619
  %v1116 = vpack.c.b16 %v624, %v620
  %v1117 = vpack.c.b16 %v625, %v621
  %v1118 = vpack.c.b16 %v626, %v622
  %v1119 = vpack.c.b16 %v631, %v627
  %v1120 = vpack.c.b16 %v632, %v628
  %v1121 = vpack.c.b16 %v633, %v629
  %v1122 = vpack.c.b16 %v634, %v630
  %v1123 = vpack.c.b16 %v639, %v635
  %v1124 = vpack.c.b16 %v640, %v636
  %v1125 = vpack.c.b16 %v641, %v637
  %v1126 = vpack.c.b16 %v642, %v638
  %v1127 = vpack.c.b16 %v647, %v643
  %v1128 = vpack.c.b16 %v648, %v644
  %v1129 = vpack.c.b16 %v649, %v645
  %v1130 = vpack.c.b16 %v650, %v646
  %v1131 = vpack.c.b16 %v655, %v651
  %v1132 = vpack.c.b16 %v656, %v652
  %v1133 = vpack.c.b16 %v657, %v653
  %v1134 = vpack.c.b16 %v658, %v654
  %v1135 = vpack.c.b16 %v663, %v659
  %v1136 = vpack.c.b16 %v664, %v660
  %v1137 = vpack.c.b16 %v665, %v661
  %v1138 = vpack.c.b16 %v666, %v662
  %v1139 = vpack.c.b16 %v671, %v667
  %v1140 = vpack.c.b16 %v672, %v668
  %v1141 = vpack.c.b16 %v673, %v669
  %v1142 = vpack.c.b16 %v674, %v670
  %v1143 = vpack.c.b16 %v679, %v675
  %v1144 = vpack.c.b16 %v680, %v676
  %v1145 = vpack.c.b16 %v681, %v677
  %v1146 = vpack.c.b16 %v682, %v678
  %v1147 = vpack.c.b16 %v687, %v683
  %v1148 = vpack.c.b16 %v688, %v684
  %v1149 = vpack.c.b16 %v689, %v685
  %v1150 = vpack.c.b16 %v690, %v686
  %v1151 = vpack.c.b16 %v695, %v691
  %v1152 = vpack.c.b16 %v696, %v692
  %v1153 = vpack.c.b16 %v697, %v693
  %v1154 = vpack.c.b16 %v698, %v694
  %v1155 = vpack.c.b16 %v703, %v699
  %v1156 = vpack.c.b16 %v704, %v700
  %v1157 = vpack.c.b16 %v705, %v701
  %v1158 = vpack.c.b16 %v706, %v702
  %v1159 = vpack.c.b16 %v711, %v707
  %v1160 = vpack.c.b16 %v712, %v708
  %v1161 = vpack.c.b16 %v713, %v709
  %v1162 = vpack.c.b16 %v714, %v710
  %v1163 = vpack.c.b16 %v719, %v715
  %v1164 = vpack.c.b16 %v720, %v716
  %v1165 = vpack.c.b16 %v721, %v717
  %v1166 = vpack.c.b16 %v722, %v718
  %v1167 = vpack.c.b16 %v727, %v723
  %v1168 = vpack.c.b16 %v728, %v724
  %v1169 = vpack.c.b16 %v729, %v725
  %v1170 = vpack.c.b16 %v730, %v726
  %v1171 = vpack.c.b16 %v735, %v731
  %v1172 = vpack.c.b16 %v736, %v732
  %v1173 = vpack.c.b16 %v737, %v733
  %v1174 = vpack.c.b16 %v738, %v734
  %v1175 = vpack.c.b16 %v743, %v739
  %v1176 = vpack.c.b16 %v744, %v740
  %v1177 = vpack.c.b16 %v745, %v741
  %v1178 = vpack.c.b16 %v746, %v742
  %v1179 = vpack.c.b16 %v751, %v747
  %v1180 = vpack.c.b16 %v752, %v748
  %v1181 = vpack.c.b16 %v753, %v749
  %v1182 = vpack.c.b16 %v754, %v750
  %v1183 = vpack.c.b16 %v759, %v755
  %v1184 = vpack.c.b16 %v760, %v756
  %v1185 = vpack.c.b16 %v761, %v757
  %v1186 = vpack.c.b16 %v762, %v758
  %v1187 = vpack.c.b16 %v767, %v763
  %v1188 = vpack.c.b16 %v768, %v764
  %v1189 = vpack.c.b16 %v769, %v765
  %v1190 = vpack.c.b16 %v770, %v766
  %v1191 = vpack.c.b16 %v775, %v771
  %v1192 = vpack.c.b16 %v776, %v772
  %v1193 = vpack.c.b16 %v777, %v773
  %v1194 = vpack.c.b16 %v778, %v774
  %v1195 = vpack.c.b16 %v783, %v779
  %v1196 = vpack.c.b16 %v784, %v780
  %v1197 = vpack.c.b16 %v785, %v781
  %v1198 = vpack.c.b16 %v786, %v782
  %v1199 = vpack.c.b16 %v791, %v787
  %v1200 = vpack.c.b16 %v792, %v788
  %v1201 = vpack.c.b16 %v793, %v789
  %v1202 = vpack.c.b16 %v794, %v790
  %v1203 = vpack.c.b16 %v799, %v795
  %v1204 = vpack.c.b16 %v800, %v796
  %v1205 = vpack.c.b16 %v801, %v797
  %v1206 = vpack.c.b16 %v802, %v798
  %v1207 = vpack.c.b16 %v807, %v803
  %v1208 = vpack.c.b16 %v808, %v804
  %v1209 = vpack.c.b16 %v809, %v805
  %v1210 = vpack.c.b16 %v810, %v806
  %v1211 = vpack.c.b16 %v815, %v811
  %v1212 = vpack.c.b16 %v816, %v812
  %v1213 = vpack.c.b16 %v817, %v813
  %v1214 = vpack.c.b16 %v818, %v814
  %v1215 = vpack.c.b16 %v823, %v819
  %v1216 = vpack.c.b16 %v824, %v820
  %v1217 = vpack.c.b16 %v825, %v821
  %v1218 = vpack.c.b16 %v826, %v822
  %v1219 = vpack.c.b16 %v831, %v827
  %v1220 = vpack.c.b16 %v832, %v828
  %v1221 = vpack.c.b16 %v833, %v829
  %v1222 = vpack.c.b16 %v834, %v830
  %v1223 = vpack.c.b16 %v839, %v835
  %v1224 = vpack.c.b16 %v840, %v836
  %v1225 = vpack.c.b16 %v841, %v837
  %v1226 = vpack.c.b16 %v842, %v838
  %v1227 = vpack.c.b16 %v847, %v843
  %v1228 = vpack.c.b16 %v848, %v844
  %v1229 = vpack.c.b16 %v849, %v845
  %v1230 = vpack.c.b16 %v850, %v846
  %v1231 = vpack.c.b16 %v855, %v851
  %v1232 = vpack.c.b16 %v856, %v852
  %v1233 = vpack.c.b16 %v857, %v853
  %v1234 = vpack.c.b16 %v858, %v854
  %v1235 = vpack.c.b16 %v863, %v859
  %v1236 = vpack.c.b16 %v864, %v860
  %v1237 = vpack.c.b16 %v865, %v861
  %v1238 = vpack.c.b16 %v866, %v862
  %v1239 = vpack.c.b16 %v871, %v867
  %v1240 = vpack.c.b16 %v872, %v868
  %v1241 = vpack.c.b16 %v873, %v869
  %v1242 = vpack.c.b16 %v874, %v870
  %v1243 = vpack.c.b16 %v879, %v875
  %v1244 = vpack.c.b16 %v880, %v876
  %v1245 = vpack.c.b16 %v881, %v877
  %v1246 = vpack.c.b16 %v882, %v878
  %v1247 = vpack.c.b16 %v887, %v883
  %v1248 = vpack.c.b16 %v888, %v884
  %v1249 = vpack.c.b16 %v889, %v885
  %v1250 = vpack.c.b16 %v890, %v886
  %v1251 = vpack.c.b16 %v895, %v891
  %v1252 = vpack.c.b16 %v896, %v892
  %v1253 = vpack.c.b16 %v897, %v893
  %v1254 = vpack.c.b16 %v898, %v894
  %v1255 = vpack.c.b16 %v903, %v899
  %v1256 = vpack.c.b16 %v904, %v900
  %v1257 = vpack.c.b16 %v905, %v901
  %v1258 = vpack.c.b16 %v906, %v902
  %v1259 = vpack.c.b16 %v911, %v907
  %v1260 = vpack.c.b16 %v912, %v908
  %v1261 = vpack.c.b16 %v913, %v909
  %v1262 = vpack.c.b16 %v914, %v910
  %v1263 = vpack.c.b16 %v919, %v915
  %v1264 = vpack.c.b16 %v920, %v916
  %v1265 = vpack.c.b16 %v921, %v917
  %v1266 = vpack.c.b16 %v922, %v918
  %v1267 = vpack.c.b16 %v927, %v923
  %v1268 = vpack.c.b16 %v928, %v924
  %v1269 = vpack.c.b16 %v929, %v925
  %v1270 = vpack.c.b16 %v930, %v926
  %v1271 = vpack.c.b16 %v935, %v931
  %v1272 = vpack.c.b16 %v936, %v932
  %v1273 = vpack.c.b16 %v937, %v933
  %v1274 = vpack.c.b16 %v938, %v934
  %v1275 = vpack.c.b16 %v943, %v939
  %v1276 = vpack.c.b16 %v944, %v940
  %v1277 = vpack.c.b16 %v945, %v941
  %v1278 = vpack.c.b16 %v946, %v942
  %v1279 = vpack.c.b16 %v951, %v947
  %v1280 = vpack.c.b16 %v952, %v948
  %v1281 = vpack.c.b16 %v953, %v949
  %v1282 = vpack.c.b16 %v954, %v950
  %v1283 = vpack.c.b16 %v959, %v955
  %v1284 = vpack.c.b16 %v960, %v956
  %v1285 = vpack.c.b16 %v961, %v957
  %v1286 = vpack.c.b16 %v962, %v958
  %v1287 = vpack.c.b16 %v967, %v963
  %v1288 = vpack.c.b16 %v968, %v964
  %v1289 = vpack.c.b16 %v969, %v965
  %v1290 = vpack.c.b16 %v970, %v966
  %v1291 = vpack.c.b16 %v975, %v971
  %v1292 = vpack.c.b16 %v976, %v972
  %v1293 = vpack.c.b16 %v977, %v973
  %v1294 = vpack.c.b16 %v978, %v974
  %v1295 = vpack.c.b16 %v983, %v979
  %v1296 = vpack.c.b16 %v984, %v980
  %v1297 = vpack.c.b16 %v985, %v981
  %v1298 = vpack.c.b16 %v986, %v982
  %v1299 = vpack.c.b16 %v991, %v987
  %v1300 = vpack.c.b16 %v992, %v988
  %v1301 = vpack.c.b16 %v993, %v989
  %v1302 = vpack.c.b16 %v994, %v990
  %v1303 = vpack.c.b16 %v999, %v995
  %v1304 = vpack.c.b16 %v1000, %v996
  %v1305 = vpack.c.b16 %v1001, %v997
  %v1306 = vpack.c.b16 %v1002, %v998
  %v1307 = vpack.c.b16 %v1007, %v1003
  %v1308 = vpack.c.b16 %v1008, %v1004
  %v1309 = vpack.c.b16 %v1009, %v1005
  %v1310 = vpack.c.b16 %v1010, %v1006
  %v1311 = vpack.c.b16 %v1015, %v1011
  %v1312 = vpack.c.b16 %v1016, %v1012
  %v1313 = vpack.c.b16 %v1017, %v1013
  %v1314 = vpack.c.b16 %v1018, %v1014
  %v1315 = vpack.c.b16 %v1023, %v1019
  %v1316 = vpack.c.b16 %v1024, %v1020
  %v1317 = vpack.c.b16 %v1025, %v1021
  %v1318 = vpack.c.b16 %v1026, %v1022
  %v1319 = vpack.c.b16 %v1031, %v1027
  %v1320 = vpack.c.b16 %v1032, %v1028
  %v1321 = vpack.c.b16 %v1033, %v1029
  %v1322 = vpack.c.b16 %v1034, %v1030
  %v1323 = vpack.c.b16 %v1039, %v1035
  %v1324 = vpack.c.b16 %v1040, %v1036
  %v1325 = vpack.c.b16 %v1041, %v1037
  %v1326 = vpack.c.b16 %v1042, %v1038
  %v1327 = vpack.c.b16 %v1047, %v1043
  %v1328 = vpack.c.b16 %v1048, %v1044
  %v1329 = vpack.c.b16 %v1049, %v1045
  %v1330 = vpack.c.b16 %v1050, %v1046
  %v1331 = vpack.c.b16 %v1055, %v1051
  %v1332 = vpack.c.b16 %v1056, %v1052
  %v1333 = vpack.c.b16 %v1057, %v1053
  %v1334 = vpack.c.b16 %v1058, %v1054
  %v1335 = vpack.c.b16 %v1063, %v1059
  %v1336 = vpack.c.b16 %v1064, %v1060
  %v1337 = vpack.c.b16 %v1065, %v1061
  %v1338 = vpack.c.b16 %v1066, %v1062
  %v1339 = vpack.c.b16 %v1071, %v1067
  %v1340 = vpack.c.b16 %v1072, %v1068
  %v1341 = vpack.c.b16 %v1073, %v1069
  %v1342 = vpack.c.b16 %v1074, %v1070
  %v1343 = vpack.c.b16 %v1079, %v1075
  %v1344 = vpack.c.b16 %v1080, %v1076
  %v1345 = vpack.c.b16 %v1081, %v1077
  %v1346 = vpack.c.b16 %v1082, %v1078
  %v1347 = vpack.c.b16 %v1087, %v1083
  %v1348 = vpack.c.b16 %v1088, %v1084
  %v1349 = vpack.c.b16 %v1089, %v1085
  %v1350 = vpack.c.b16 %v1090, %v1086
  %v1351 = vpack.c.b16 %v1095, %v1091
  %v1352 = vpack.c.b16 %v1096, %v1092
  %v1353 = vpack.c.b16 %v1097, %v1093
  %v1354 = vpack.c.b16 %v1098, %v1094
  %1611 = vmatprep.subr.bf16.mxu0 %v1100
  %1612 = vmatpush1.bf16.msra.mxu0 %v1099
  %1613 = vmatprep.subr.bf16.mxu0 %v1104
  %1614 = vmatpush1.bf16.msra.mxu0 %v1103
  %1615 = vmatprep.subr.bf16.mxu0 %v1108
  %1616 = vmatpush1.bf16.msra.mxu0 %v1107
  %1617 = vmatprep.subr.bf16.mxu0 %v1112
  %1618 = vmatpush1.bf16.msra.mxu0 %v1111
  %1619 = vmatprep.subr.bf16.mxu0 %v1116
  %1620 = vmatpush1.bf16.msra.mxu0 %v1115
  %1621 = vmatprep.subr.bf16.mxu0 %v1120
  %1622 = vmatpush1.bf16.msra.mxu0 %v1119
  %1623 = vmatprep.subr.bf16.mxu0 %v1124
  %1624 = vmatpush1.bf16.msra.mxu0 %v1123
  %1625 = vmatprep.subr.bf16.mxu0 %v1128
  %1626 = vmatpush1.bf16.msra.mxu0 %v1127
  %1627 = vmatprep.subr.bf16.mxu0 %v1132
  %1628 = vmatpush1.bf16.msra.mxu0 %v1131
  %1629 = vmatprep.subr.bf16.mxu0 %v1136
  %1630 = vmatpush1.bf16.msra.mxu0 %v1135
  %1631 = vmatprep.subr.bf16.mxu0 %v1140
  %1632 = vmatpush1.bf16.msra.mxu0 %v1139
  %1633 = vmatprep.subr.bf16.mxu0 %v1144
  %1634 = vmatpush1.bf16.msra.mxu0 %v1143
  %1635 = vmatprep.subr.bf16.mxu0 %v1148
  %1636 = vmatpush1.bf16.msra.mxu0 %v1147
  %1637 = vmatprep.subr.bf16.mxu0 %v1152
  %1638 = vmatpush1.bf16.msra.mxu0 %v1151
  %1639 = vmatprep.subr.bf16.mxu0 %v1156
  %1640 = vmatpush1.bf16.msra.mxu0 %v1155
  %1641 = vmatprep.subr.bf16.mxu0 %v1160
  %1642 = vmatpush1.bf16.msra.mxu0 %v1159
  %1643 = vmatprep.mubr.bf16.mxu0 %v316
  %1644 = vmatmul.mubr.bf16.gmra.mrb[0].mxu0 %v315
  %v1645 = vpop.f32.mrb[0].mxu0
  %v1646 = vadd.f32 %v286, %v1645
  %v1647 = vpop.f32.mrb[0].mxu0
  %v1648 = vadd.f32 %v290, %v1647
  %v1649 = vpop.f32.mrb[0].mxu0
  %v1650 = vpop.f32.mrb[0].mxu0
  %1651 = vdwg.mxu0
  %1652 = vmatprep.subr.bf16.mxu0 %v1164
  %1653 = vmatpush1.bf16.msra.mxu0 %v1163
  %1654 = vmatprep.subr.bf16.mxu0 %v1168
  %1655 = vmatpush1.bf16.msra.mxu0 %v1167
  %1656 = vmatprep.subr.bf16.mxu0 %v1172
  %1657 = vmatpush1.bf16.msra.mxu0 %v1171
  %1658 = vmatprep.subr.bf16.mxu0 %v1176
  %1659 = vmatpush1.bf16.msra.mxu0 %v1175
  %1660 = vmatprep.subr.bf16.mxu0 %v1180
  %1661 = vmatpush1.bf16.msra.mxu0 %v1179
  %1662 = vmatprep.subr.bf16.mxu0 %v1184
  %1663 = vmatpush1.bf16.msra.mxu0 %v1183
  %1664 = vmatprep.subr.bf16.mxu0 %v1188
  %1665 = vmatpush1.bf16.msra.mxu0 %v1187
  %1666 = vmatprep.subr.bf16.mxu0 %v1192
  %1667 = vmatpush1.bf16.msra.mxu0 %v1191
  %1668 = vmatprep.subr.bf16.mxu0 %v1196
  %1669 = vmatpush1.bf16.msra.mxu0 %v1195
  %1670 = vmatprep.subr.bf16.mxu0 %v1200
  %1671 = vmatpush1.bf16.msra.mxu0 %v1199
  %1672 = vmatprep.subr.bf16.mxu0 %v1204
  %1673 = vmatpush1.bf16.msra.mxu0 %v1203
  %1674 = vmatprep.subr.bf16.mxu0 %v1208
  %1675 = vmatpush1.bf16.msra.mxu0 %v1207
  %1676 = vmatprep.subr.bf16.mxu0 %v1212
  %1677 = vmatpush1.bf16.msra.mxu0 %v1211
  %1678 = vmatprep.subr.bf16.mxu0 %v1216
  %1679 = vmatpush1.bf16.msra.mxu0 %v1215
  %1680 = vmatprep.subr.bf16.mxu0 %v1220
  %1681 = vmatpush1.bf16.msra.mxu0 %v1219
  %1682 = vmatprep.subr.bf16.mxu0 %v1224
  %1683 = vmatpush1.bf16.msra.mxu0 %v1223
  %1684 = vmatprep.mubr.bf16.mxu0 %v318
  %1685 = vmatmul.mubr.bf16.gmra.mrb[0].mxu0 %v317
  %v1686 = vpop.f32.mrb[0].mxu0
  %v1687 = vadd.f32 %v1646, %v1686
  %v1688 = vpop.f32.mrb[0].mxu0
  %v1689 = vadd.f32 %v1648, %v1688
  %v1690 = vpop.f32.mrb[0].mxu0
  %v1691 = vpop.f32.mrb[0].mxu0
  %1692 = vdwg.mxu0
  %1693 = vmatprep.subr.bf16.mxu0 %v1228
  %1694 = vmatpush1.bf16.msra.mxu0 %v1227
  %1695 = vmatprep.subr.bf16.mxu0 %v1232
  %1696 = vmatpush1.bf16.msra.mxu0 %v1231
  %1697 = vmatprep.subr.bf16.mxu0 %v1236
  %1698 = vmatpush1.bf16.msra.mxu0 %v1235
  %1699 = vmatprep.subr.bf16.mxu0 %v1240
  %1700 = vmatpush1.bf16.msra.mxu0 %v1239
  %1701 = vmatprep.subr.bf16.mxu0 %v1244
  %1702 = vmatpush1.bf16.msra.mxu0 %v1243
  %1703 = vmatprep.subr.bf16.mxu0 %v1248
  %1704 = vmatpush1.bf16.msra.mxu0 %v1247
  %1705 = vmatprep.subr.bf16.mxu0 %v1252
  %1706 = vmatpush1.bf16.msra.mxu0 %v1251
  %1707 = vmatprep.subr.bf16.mxu0 %v1256
  %1708 = vmatpush1.bf16.msra.mxu0 %v1255
  %1709 = vmatprep.subr.bf16.mxu0 %v1260
  %1710 = vmatpush1.bf16.msra.mxu0 %v1259
  %1711 = vmatprep.subr.bf16.mxu0 %v1264
  %1712 = vmatpush1.bf16.msra.mxu0 %v1263
  %1713 = vmatprep.subr.bf16.mxu0 %v1268
  %1714 = vmatpush1.bf16.msra.mxu0 %v1267
  %1715 = vmatprep.subr.bf16.mxu0 %v1272
  %1716 = vmatpush1.bf16.msra.mxu0 %v1271
  %1717 = vmatprep.subr.bf16.mxu0 %v1276
  %1718 = vmatpush1.bf16.msra.mxu0 %v1275
  %1719 = vmatprep.subr.bf16.mxu0 %v1280
  %1720 = vmatpush1.bf16.msra.mxu0 %v1279
  %1721 = vmatprep.subr.bf16.mxu0 %v1284
  %1722 = vmatpush1.bf16.msra.mxu0 %v1283
  %1723 = vmatprep.subr.bf16.mxu0 %v1288
  %1724 = vmatpush1.bf16.msra.mxu0 %v1287
  %1725 = vmatprep.mubr.bf16.mxu0 %v320
  %1726 = vmatmul.mubr.bf16.gmra.mrb[0].mxu0 %v319
  %v1727 = vpop.f32.mrb[0].mxu0
  %v1728 = vadd.f32 %v1687, %v1727
  %v1729 = vpop.f32.mrb[0].mxu0
  %v1730 = vadd.f32 %v1689, %v1729
  %v1731 = vpop.f32.mrb[0].mxu0
  %v1732 = vpop.f32.mrb[0].mxu0
  %1733 = vdwg.mxu0
  %1734 = vmatprep.subr.bf16.mxu0 %v1292
  %1735 = vmatpush1.bf16.msra.mxu0 %v1291
  %1736 = vmatprep.subr.bf16.mxu0 %v1296
  %1737 = vmatpush1.bf16.msra.mxu0 %v1295
  %1738 = vmatprep.subr.bf16.mxu0 %v1300
  %1739 = vmatpush1.bf16.msra.mxu0 %v1299
  %1740 = vmatprep.subr.bf16.mxu0 %v1304
  %1741 = vmatpush1.bf16.msra.mxu0 %v1303
  %1742 = vmatprep.subr.bf16.mxu0 %v1308
  %1743 = vmatpush1.bf16.msra.mxu0 %v1307
  %1744 = vmatprep.subr.bf16.mxu0 %v1312
  %1745 = vmatpush1.bf16.msra.mxu0 %v1311
  %1746 = vmatprep.subr.bf16.mxu0 %v1316
  %1747 = vmatpush1.bf16.msra.mxu0 %v1315
  %1748 = vmatprep.subr.bf16.mxu0 %v1320
  %1749 = vmatpush1.bf16.msra.mxu0 %v1319
  %1750 = vmatprep.subr.bf16.mxu0 %v1324
  %1751 = vmatpush1.bf16.msra.mxu0 %v1323
  %1752 = vmatprep.subr.bf16.mxu0 %v1328
  %1753 = vmatpush1.bf16.msra.mxu0 %v1327
  %1754 = vmatprep.subr.bf16.mxu0 %v1332
  %1755 = vmatpush1.bf16.msra.mxu0 %v1331
  %1756 = vmatprep.subr.bf16.mxu0 %v1336
  %1757 = vmatpush1.bf16.msra.mxu0 %v1335
  %1758 = vmatprep.subr.bf16.mxu0 %v1340
  %1759 = vmatpush1.bf16.msra.mxu0 %v1339
  %1760 = vmatprep.subr.bf16.mxu0 %v1344
  %1761 = vmatpush1.bf16.msra.mxu0 %v1343
  %1762 = vmatprep.subr.bf16.mxu0 %v1348
  %1763 = vmatpush1.bf16.msra.mxu0 %v1347
  %1764 = vmatprep.subr.bf16.mxu0 %v1352
  %1765 = vmatpush1.bf16.msra.mxu0 %v1351
  %1766 = vmatprep.mubr.bf16.mxu0 %v322
  %1767 = vmatmul.mubr.bf16.gmra.mrb[0].mxu0 %v321
  %v1768 = vpop.f32.mrb[0].mxu0
  %v1769 = vadd.f32 %v1728, %v1768
  %v1770 = vpop.f32.mrb[0].mxu0
  %v1771 = vadd.f32 %v1730, %v1770
  %v1772 = vpop.f32.mrb[0].mxu0
  %v1773 = vpop.f32.mrb[0].mxu0
  %1774 = vdwg.mxu0
  %1775 = vmatprep.subr.bf16.mxu0 %v1102
  %1776 = vmatpush1.bf16.msra.mxu0 %v1101
  %1777 = vmatprep.subr.bf16.mxu0 %v1106
  %1778 = vmatpush1.bf16.msra.mxu0 %v1105
  %1779 = vmatprep.subr.bf16.mxu0 %v1110
  %1780 = vmatpush1.bf16.msra.mxu0 %v1109
  %1781 = vmatprep.subr.bf16.mxu0 %v1114
  %1782 = vmatpush1.bf16.msra.mxu0 %v1113
  %1783 = vmatprep.subr.bf16.mxu0 %v1118
  %1784 = vmatpush1.bf16.msra.mxu0 %v1117
  %1785 = vmatprep.subr.bf16.mxu0 %v1122
  %1786 = vmatpush1.bf16.msra.mxu0 %v1121
  %1787 = vmatprep.subr.bf16.mxu0 %v1126
  %1788 = vmatpush1.bf16.msra.mxu0 %v1125
  %1789 = vmatprep.subr.bf16.mxu0 %v1130
  %1790 = vmatpush1.bf16.msra.mxu0 %v1129
  %1791 = vmatprep.subr.bf16.mxu0 %v1134
  %1792 = vmatpush1.bf16.msra.mxu0 %v1133
  %1793 = vmatprep.subr.bf16.mxu0 %v1138
  %1794 = vmatpush1.bf16.msra.mxu0 %v1137
  %1795 = vmatprep.subr.bf16.mxu0 %v1142
  %1796 = vmatpush1.bf16.msra.mxu0 %v1141
  %1797 = vmatprep.subr.bf16.mxu0 %v1146
  %1798 = vmatpush1.bf16.msra.mxu0 %v1145
  %1799 = vmatprep.subr.bf16.mxu0 %v1150
  %1800 = vmatpush1.bf16.msra.mxu0 %v1149
  %1801 = vmatprep.subr.bf16.mxu0 %v1154
  %1802 = vmatpush1.bf16.msra.mxu0 %v1153
  %1803 = vmatprep.subr.bf16.mxu0 %v1158
  %1804 = vmatpush1.bf16.msra.mxu0 %v1157
  %1805 = vmatprep.subr.bf16.mxu0 %v1162
  %1806 = vmatpush1.bf16.msra.mxu0 %v1161
  %1807 = vmatprep.mubr.bf16.mxu0 %v316
  %1808 = vmatmul.mubr.bf16.gmra.mrb[0].mxu0 %v315
  %v1809 = vpop.f32.mrb[0].mxu0
  %v1810 = vadd.f32 %v294, %v1809
  %v1811 = vpop.f32.mrb[0].mxu0
  %v1812 = vadd.f32 %v298, %v1811
  %v1813 = vpop.f32.mrb[0].mxu0
  %v1814 = vpop.f32.mrb[0].mxu0
  %1815 = vdwg.mxu0
  %1816 = vmatprep.subr.bf16.mxu0 %v1166
  %1817 = vmatpush1.bf16.msra.mxu0 %v1165
  %1818 = vmatprep.subr.bf16.mxu0 %v1170
  %1819 = vmatpush1.bf16.msra.mxu0 %v1169
  %1820 = vmatprep.subr.bf16.mxu0 %v1174
  %1821 = vmatpush1.bf16.msra.mxu0 %v1173
  %1822 = vmatprep.subr.bf16.mxu0 %v1178
  %1823 = vmatpush1.bf16.msra.mxu0 %v1177
  %1824 = vmatprep.subr.bf16.mxu0 %v1182
  %1825 = vmatpush1.bf16.msra.mxu0 %v1181
  %1826 = vmatprep.subr.bf16.mxu0 %v1186
  %1827 = vmatpush1.bf16.msra.mxu0 %v1185
  %1828 = vmatprep.subr.bf16.mxu0 %v1190
  %1829 = vmatpush1.bf16.msra.mxu0 %v1189
  %1830 = vmatprep.subr.bf16.mxu0 %v1194
  %1831 = vmatpush1.bf16.msra.mxu0 %v1193
  %1832 = vmatprep.subr.bf16.mxu0 %v1198
  %1833 = vmatpush1.bf16.msra.mxu0 %v1197
  %1834 = vmatprep.subr.bf16.mxu0 %v1202
  %1835 = vmatpush1.bf16.msra.mxu0 %v1201
  %1836 = vmatprep.subr.bf16.mxu0 %v1206
  %1837 = vmatpush1.bf16.msra.mxu0 %v1205
  %1838 = vmatprep.subr.bf16.mxu0 %v1210
  %1839 = vmatpush1.bf16.msra.mxu0 %v1209
  %1840 = vmatprep.subr.bf16.mxu0 %v1214
  %1841 = vmatpush1.bf16.msra.mxu0 %v1213
  %1842 = vmatprep.subr.bf16.mxu0 %v1218
  %1843 = vmatpush1.bf16.msra.mxu0 %v1217
  %1844 = vmatprep.subr.bf16.mxu0 %v1222
  %1845 = vmatpush1.bf16.msra.mxu0 %v1221
  %1846 = vmatprep.subr.bf16.mxu0 %v1226
  %1847 = vmatpush1.bf16.msra.mxu0 %v1225
  %1848 = vmatprep.mubr.bf16.mxu0 %v318
  %1849 = vmatmul.mubr.bf16.gmra.mrb[0].mxu0 %v317
  %v1850 = vpop.f32.mrb[0].mxu0
  %v1851 = vadd.f32 %v1810, %v1850
  %v1852 = vpop.f32.mrb[0].mxu0
  %v1853 = vadd.f32 %v1812, %v1852
  %v1854 = vpop.f32.mrb[0].mxu0
  %v1855 = vpop.f32.mrb[0].mxu0
  %1856 = vdwg.mxu0
  %1857 = vmatprep.subr.bf16.mxu0 %v1230
  %1858 = vmatpush1.bf16.msra.mxu0 %v1229
  %1859 = vmatprep.subr.bf16.mxu0 %v1234
  %1860 = vmatpush1.bf16.msra.mxu0 %v1233
  %1861 = vmatprep.subr.bf16.mxu0 %v1238
  %1862 = vmatpush1.bf16.msra.mxu0 %v1237
  %1863 = vmatprep.subr.bf16.mxu0 %v1242
  %1864 = vmatpush1.bf16.msra.mxu0 %v1241
  %1865 = vmatprep.subr.bf16.mxu0 %v1246
  %1866 = vmatpush1.bf16.msra.mxu0 %v1245
  %1867 = vmatprep.subr.bf16.mxu0 %v1250
  %1868 = vmatpush1.bf16.msra.mxu0 %v1249
  %1869 = vmatprep.subr.bf16.mxu0 %v1254
  %1870 = vmatpush1.bf16.msra.mxu0 %v1253
  %1871 = vmatprep.subr.bf16.mxu0 %v1258
  %1872 = vmatpush1.bf16.msra.mxu0 %v1257
  %1873 = vmatprep.subr.bf16.mxu0 %v1262
  %1874 = vmatpush1.bf16.msra.mxu0 %v1261
  %1875 = vmatprep.subr.bf16.mxu0 %v1266
  %1876 = vmatpush1.bf16.msra.mxu0 %v1265
  %1877 = vmatprep.subr.bf16.mxu0 %v1270
  %1878 = vmatpush1.bf16.msra.mxu0 %v1269
  %1879 = vmatprep.subr.bf16.mxu0 %v1274
  %1880 = vmatpush1.bf16.msra.mxu0 %v1273
  %1881 = vmatprep.subr.bf16.mxu0 %v1278
  %1882 = vmatpush1.bf16.msra.mxu0 %v1277
  %1883 = vmatprep.subr.bf16.mxu0 %v1282
  %1884 = vmatpush1.bf16.msra.mxu0 %v1281
  %1885 = vmatprep.subr.bf16.mxu0 %v1286
  %1886 = vmatpush1.bf16.msra.mxu0 %v1285
  %1887 = vmatprep.subr.bf16.mxu0 %v1290
  %1888 = vmatpush1.bf16.msra.mxu0 %v1289
  %1889 = vmatprep.mubr.bf16.mxu0 %v320
  %1890 = vmatmul.mubr.bf16.gmra.mrb[0].mxu0 %v319
  %v1891 = vpop.f32.mrb[0].mxu0
  %v1892 = vadd.f32 %v1851, %v1891
  %v1893 = vpop.f32.mrb[0].mxu0
  %v1894 = vadd.f32 %v1853, %v1893
  %v1895 = vpop.f32.mrb[0].mxu0
  %v1896 = vpop.f32.mrb[0].mxu0
  %1897 = vdwg.mxu0
  %1898 = vmatprep.subr.bf16.mxu0 %v1294
  %1899 = vmatpush1.bf16.msra.mxu0 %v1293
  %1900 = vmatprep.subr.bf16.mxu0 %v1298
  %1901 = vmatpush1.bf16.msra.mxu0 %v1297
  %1902 = vmatprep.subr.bf16.mxu0 %v1302
  %1903 = vmatpush1.bf16.msra.mxu0 %v1301
  %1904 = vmatprep.subr.bf16.mxu0 %v1306
  %1905 = vmatpush1.bf16.msra.mxu0 %v1305
  %1906 = vmatprep.subr.bf16.mxu0 %v1310
  %1907 = vmatpush1.bf16.msra.mxu0 %v1309
  %1908 = vmatprep.subr.bf16.mxu0 %v1314
  %1909 = vmatpush1.bf16.msra.mxu0 %v1313
  %1910 = vmatprep.subr.bf16.mxu0 %v1318
  %1911 = vmatpush1.bf16.msra.mxu0 %v1317
  %1912 = vmatprep.subr.bf16.mxu0 %v1322
  %1913 = vmatpush1.bf16.msra.mxu0 %v1321
  %1914 = vmatprep.subr.bf16.mxu0 %v1326
  %1915 = vmatpush1.bf16.msra.mxu0 %v1325
  %1916 = vmatprep.subr.bf16.mxu0 %v1330
  %1917 = vmatpush1.bf16.msra.mxu0 %v1329
  %1918 = vmatprep.subr.bf16.mxu0 %v1334
  %1919 = vmatpush1.bf16.msra.mxu0 %v1333
  %1920 = vmatprep.subr.bf16.mxu0 %v1338
  %1921 = vmatpush1.bf16.msra.mxu0 %v1337
  %1922 = vmatprep.subr.bf16.mxu0 %v1342
  %1923 = vmatpush1.bf16.msra.mxu0 %v1341
  %1924 = vmatprep.subr.bf16.mxu0 %v1346
  %1925 = vmatpush1.bf16.msra.mxu0 %v1345
  %1926 = vmatprep.subr.bf16.mxu0 %v1350
  %1927 = vmatpush1.bf16.msra.mxu0 %v1349
  %1928 = vmatprep.subr.bf16.mxu0 %v1354
  %1929 = vmatpush1.bf16.msra.mxu0 %v1353
  %1930 = vmatprep.mubr.bf16.mxu0 %v322
  %1931 = vmatmul.mubr.bf16.gmra.mrb[0].mxu0 %v321
  %v1932 = vpop.f32.mrb[0].mxu0
  %v1933 = vadd.f32 %v1892, %v1932
  %v1934 = vpop.f32.mrb[0].mxu0
  %v1935 = vadd.f32 %v1894, %v1934
  %v1936 = vpop.f32.mrb[0].mxu0
  %v1937 = vpop.f32.mrb[0].mxu0
  %1938 = vdwg.mxu0
  %v1939 = vmax.f32 %v1769, 0.0
  %v1940 = vmax.f32 %v1771, 0.0
  %v1941 = vmax.f32 %v1933, 0.0
  %v1942 = vmax.f32 %v1935, 0.0
  %v1943 = vpack.c.bf16 %v1939, %v1939
  %v1944 = vpack.c.bf16 %v1940, %v1940
  %v1945 = vpack.c.bf16 %v1941, %v1941
  %v1946 = vpack.c.bf16 %v1942, %v1942
  %v1947 = vld [vmem:[%s3] sm:$0xf]
  %v1948 = vld [vmem:[%s3 + $0x4] sm:$0xf]
  %v1949 = vld [vmem:[%s3 + $0x8] sm:$0xf]
  %v1950 = vld [vmem:[%s3 + $0xc] sm:$0xf]
  %v1951 = vld [vmem:[%s3 + $0x10] sm:$0xf]
  %v1952 = vld [vmem:[%s3 + $0x14] sm:$0xf]
  %v1953 = vld [vmem:[%s3 + $0x18] sm:$0xf]
  %v1954 = vld [vmem:[%s3 + $0x1c] sm:$0xf]
  %v1955 = vld [vmem:[%s3 + $0x20] sm:$0xf]
  %v1956 = vld [vmem:[%s3 + $0x24] sm:$0xf]
  %v1957 = vld [vmem:[%s3 + $0x28] sm:$0xf]
  %v1958 = vld [vmem:[%s3 + $0x2c] sm:$0xf]
  %v1959 = vld [vmem:[%s3 + $0x30] sm:$0xf]
  %v1960 = vld [vmem:[%s3 + $0x34] sm:$0xf]
  %v1961 = vld [vmem:[%s3 + $0x38] sm:$0xf]
  %v1962 = vld [vmem:[%s3 + $0x3c] sm:$0xf]
  %v1963 = vld [vmem:[%s3 + $0x40] sm:$0xf]
  %v1964 = vld [vmem:[%s3 + $0x44] sm:$0xf]
  %v1965 = vld [vmem:[%s3 + $0x48] sm:$0xf]
  %v1966 = vld [vmem:[%s3 + $0x4c] sm:$0xf]
  %v1967 = vld [vmem:[%s3 + $0x50] sm:$0xf]
  %v1968 = vld [vmem:[%s3 + $0x54] sm:$0xf]
  %v1969 = vld [vmem:[%s3 + $0x58] sm:$0xf]
  %v1970 = vld [vmem:[%s3 + $0x5c] sm:$0xf]
  %v1971 = vld [vmem:[%s3 + $0x60] sm:$0xf]
  %v1972 = vld [vmem:[%s3 + $0x64] sm:$0xf]
  %v1973 = vld [vmem:[%s3 + $0x68] sm:$0xf]
  %v1974 = vld [vmem:[%s3 + $0x6c] sm:$0xf]
  %v1975 = vld [vmem:[%s3 + $0x70] sm:$0xf]
  %v1976 = vld [vmem:[%s3 + $0x74] sm:$0xf]
  %v1977 = vld [vmem:[%s3 + $0x78] sm:$0xf]
  %v1978 = vld [vmem:[%s3 + $0x7c] sm:$0xf]
  %v1979 = vld [vmem:[%s3 + $0x80] sm:$0xf]
  %v1980 = vld [vmem:[%s3 + $0x84] sm:$0xf]
  %v1981 = vld [vmem:[%s3 + $0x88] sm:$0xf]
  %v1982 = vld [vmem:[%s3 + $0x8c] sm:$0xf]
  %v1983 = vld [vmem:[%s3 + $0x90] sm:$0xf]
  %v1984 = vld [vmem:[%s3 + $0x94] sm:$0xf]
  %v1985 = vld [vmem:[%s3 + $0x98] sm:$0xf]
  %v1986 = vld [vmem:[%s3 + $0x9c] sm:$0xf]
  %v1987 = vld [vmem:[%s3 + $0xa0] sm:$0xf]
  %v1988 = vld [vmem:[%s3 + $0xa4] sm:$0xf]
  %v1989 = vld [vmem:[%s3 + $0xa8] sm:$0xf]
  %v1990 = vld [vmem:[%s3 + $0xac] sm:$0xf]
  %v1991 = vld [vmem:[%s3 + $0xb0] sm:$0xf]
  %v1992 = vld [vmem:[%s3 + $0xb4] sm:$0xf]
  %v1993 = vld [vmem:[%s3 + $0xb8] sm:$0xf]
  %v1994 = vld [vmem:[%s3 + $0xbc] sm:$0xf]
  %v1995 = vld [vmem:[%s3 + $0xc0] sm:$0xf]
  %v1996 = vld [vmem:[%s3 + $0xc4] sm:$0xf]
  %v1997 = vld [vmem:[%s3 + $0xc8] sm:$0xf]
  %v1998 = vld [vmem:[%s3 + $0xcc] sm:$0xf]
  %v1999 = vld [vmem:[%s3 + $0xd0] sm:$0xf]
  %v2000 = vld [vmem:[%s3 + $0xd4] sm:$0xf]
  %v2001 = vld [vmem:[%s3 + $0xd8] sm:$0xf]
  %v2002 = vld [vmem:[%s3 + $0xdc] sm:$0xf]
  %v2003 = vld [vmem:[%s3 + $0xe0] sm:$0xf]
  %v2004 = vld [vmem:[%s3 + $0xe4] sm:$0xf]
  %v2005 = vld [vmem:[%s3 + $0xe8] sm:$0xf]
  %v2006 = vld [vmem:[%s3 + $0xec] sm:$0xf]
  %v2007 = vld [vmem:[%s3 + $0xf0] sm:$0xf]
  %v2008 = vld [vmem:[%s3 + $0xf4] sm:$0xf]
  %v2009 = vld [vmem:[%s3 + $0xf8] sm:$0xf]
  %v2010 = vld [vmem:[%s3 + $0xfc] sm:$0xf]
  %v2011 = vld [vmem:[%s4] sm:$0x1]
  %v2013 = vlaneseq
  %v2014 = vshrl.u32 %v2013, 7
  %v2015 = vsub.s32 0, %v2014
  %v2016 = vrot.slane %v2011, %v2015
  %v2082 = vunpack.c.l.b16 %v1947
  %v2083 = vunpack.c.l.b16 %v1948
  %v2084 = vunpack.c.l.b16 %v1949
  %v2085 = vunpack.c.l.b16 %v1950
  %v2086 = vunpack.c.l.b16 %v1951
  %v2087 = vunpack.c.l.b16 %v1952
  %v2088 = vunpack.c.l.b16 %v1953
  %v2089 = vunpack.c.l.b16 %v1954
  %v2090 = vunpack.c.l.b16 %v1955
  %v2091 = vunpack.c.l.b16 %v1956
  %v2092 = vunpack.c.l.b16 %v1957
  %v2093 = vunpack.c.l.b16 %v1958
  %v2094 = vunpack.c.l.b16 %v1959
  %v2095 = vunpack.c.l.b16 %v1960
  %v2096 = vunpack.c.l.b16 %v1961
  %v2097 = vunpack.c.l.b16 %v1962
  %v2098 = vunpack.c.l.b16 %v1963
  %v2099 = vunpack.c.l.b16 %v1964
  %v2100 = vunpack.c.l.b16 %v1965
  %v2101 = vunpack.c.l.b16 %v1966
  %v2102 = vunpack.c.l.b16 %v1967
  %v2103 = vunpack.c.l.b16 %v1968
  %v2104 = vunpack.c.l.b16 %v1969
  %v2105 = vunpack.c.l.b16 %v1970
  %v2106 = vunpack.c.l.b16 %v1971
  %v2107 = vunpack.c.l.b16 %v1972
  %v2108 = vunpack.c.l.b16 %v1973
  %v2109 = vunpack.c.l.b16 %v1974
  %v2110 = vunpack.c.l.b16 %v1975
  %v2111 = vunpack.c.l.b16 %v1976
  %v2112 = vunpack.c.l.b16 %v1977
  %v2113 = vunpack.c.l.b16 %v1978
  %v2114 = vunpack.c.l.b16 %v1979
  %v2115 = vunpack.c.l.b16 %v1980
  %v2116 = vunpack.c.l.b16 %v1981
  %v2117 = vunpack.c.l.b16 %v1982
  %v2118 = vunpack.c.l.b16 %v1983
  %v2119 = vunpack.c.l.b16 %v1984
  %v2120 = vunpack.c.l.b16 %v1985
  %v2121 = vunpack.c.l.b16 %v1986
  %v2122 = vunpack.c.l.b16 %v1987
  %v2123 = vunpack.c.l.b16 %v1988
  %v2124 = vunpack.c.l.b16 %v1989
  %v2125 = vunpack.c.l.b16 %v1990
  %v2126 = vunpack.c.l.b16 %v1991
  %v2127 = vunpack.c.l.b16 %v1992
  %v2128 = vunpack.c.l.b16 %v1993
  %v2129 = vunpack.c.l.b16 %v1994
  %v2130 = vunpack.c.l.b16 %v1995
  %v2131 = vunpack.c.l.b16 %v1996
  %v2132 = vunpack.c.l.b16 %v1997
  %v2133 = vunpack.c.l.b16 %v1998
  %v2134 = vunpack.c.l.b16 %v1999
  %v2135 = vunpack.c.l.b16 %v2000
  %v2136 = vunpack.c.l.b16 %v2001
  %v2137 = vunpack.c.l.b16 %v2002
  %v2138 = vunpack.c.l.b16 %v2003
  %v2139 = vunpack.c.l.b16 %v2004
  %v2140 = vunpack.c.l.b16 %v2005
  %v2141 = vunpack.c.l.b16 %v2006
  %v2142 = vunpack.c.l.b16 %v2007
  %v2143 = vunpack.c.l.b16 %v2008
  %v2144 = vunpack.c.l.b16 %v2009
  %v2145 = vunpack.c.l.b16 %v2010
  %v2146 = vpack.c.b16 %v2083, %v2082
  %v2147 = vpack.c.b16 %v2085, %v2084
  %v2148 = vpack.c.b16 %v2087, %v2086
  %v2149 = vpack.c.b16 %v2089, %v2088
  %v2150 = vpack.c.b16 %v2091, %v2090
  %v2151 = vpack.c.b16 %v2093, %v2092
  %v2152 = vpack.c.b16 %v2095, %v2094
  %v2153 = vpack.c.b16 %v2097, %v2096
  %v2154 = vpack.c.b16 %v2099, %v2098
  %v2155 = vpack.c.b16 %v2101, %v2100
  %v2156 = vpack.c.b16 %v2103, %v2102
  %v2157 = vpack.c.b16 %v2105, %v2104
  %v2158 = vpack.c.b16 %v2107, %v2106
  %v2159 = vpack.c.b16 %v2109, %v2108
  %v2160 = vpack.c.b16 %v2111, %v2110
  %v2161 = vpack.c.b16 %v2113, %v2112
  %v2162 = vpack.c.b16 %v2115, %v2114
  %v2163 = vpack.c.b16 %v2117, %v2116
  %v2164 = vpack.c.b16 %v2119, %v2118
  %v2165 = vpack.c.b16 %v2121, %v2120
  %v2166 = vpack.c.b16 %v2123, %v2122
  %v2167 = vpack.c.b16 %v2125, %v2124
  %v2168 = vpack.c.b16 %v2127, %v2126
  %v2169 = vpack.c.b16 %v2129, %v2128
  %v2170 = vpack.c.b16 %v2131, %v2130
  %v2171 = vpack.c.b16 %v2133, %v2132
  %v2172 = vpack.c.b16 %v2135, %v2134
  %v2173 = vpack.c.b16 %v2137, %v2136
  %v2174 = vpack.c.b16 %v2139, %v2138
  %v2175 = vpack.c.b16 %v2141, %v2140
  %v2176 = vpack.c.b16 %v2143, %v2142
  %v2177 = vpack.c.b16 %v2145, %v2144
  %2210 = vmatprep.subr.bf16.mxu0 0
  %2211 = vmatpush1.bf16.msra.mxu0 %v2146
  %2212 = vmatprep.subr.bf16.mxu0 0
  %2213 = vmatpush1.bf16.msra.mxu0 %v2147
  %2214 = vmatprep.subr.bf16.mxu0 0
  %2215 = vmatpush1.bf16.msra.mxu0 %v2148
  %2216 = vmatprep.subr.bf16.mxu0 0
  %2217 = vmatpush1.bf16.msra.mxu0 %v2149
  %2218 = vmatprep.subr.bf16.mxu0 0
  %2219 = vmatpush1.bf16.msra.mxu0 %v2150
  %2220 = vmatprep.subr.bf16.mxu0 0
  %2221 = vmatpush1.bf16.msra.mxu0 %v2151
  %2222 = vmatprep.subr.bf16.mxu0 0
  %2223 = vmatpush1.bf16.msra.mxu0 %v2152
  %2224 = vmatprep.subr.bf16.mxu0 0
  %2225 = vmatpush1.bf16.msra.mxu0 %v2153
  %2226 = vmatprep.subr.bf16.mxu0 0
  %2227 = vmatpush1.bf16.msra.mxu0 %v2154
  %2228 = vmatprep.subr.bf16.mxu0 0
  %2229 = vmatpush1.bf16.msra.mxu0 %v2155
  %2230 = vmatprep.subr.bf16.mxu0 0
  %2231 = vmatpush1.bf16.msra.mxu0 %v2156
  %2232 = vmatprep.subr.bf16.mxu0 0
  %2233 = vmatpush1.bf16.msra.mxu0 %v2157
  %2234 = vmatprep.subr.bf16.mxu0 0
  %2235 = vmatpush1.bf16.msra.mxu0 %v2158
  %2236 = vmatprep.subr.bf16.mxu0 0
  %2237 = vmatpush1.bf16.msra.mxu0 %v2159
  %2238 = vmatprep.subr.bf16.mxu0 0
  %2239 = vmatpush1.bf16.msra.mxu0 %v2160
  %2240 = vmatprep.subr.bf16.mxu0 0
  %2241 = vmatpush1.bf16.msra.mxu0 %v2161
  %2242 = vmatprep.mubr.bf16.mxu0 %v1944
  %2243 = vmatmul.mubr.bf16.gmra.mrb[0].mxu0 %v1943
  %v2244 = vpop.f32.mrb[0].mxu0
  %v2245 = vadd.f32 %v2016, %v2244
  %v2246 = vpop.f32.mrb[0].mxu0
  %v2247 = vpop.f32.mrb[0].mxu0
  %v2248 = vpop.f32.mrb[0].mxu0
  %2249 = vdwg.mxu0
  %2250 = vmatprep.subr.bf16.mxu0 0
  %2251 = vmatpush1.bf16.msra.mxu0 %v2162
  %2252 = vmatprep.subr.bf16.mxu0 0
  %2253 = vmatpush1.bf16.msra.mxu0 %v2163
  %2254 = vmatprep.subr.bf16.mxu0 0
  %2255 = vmatpush1.bf16.msra.mxu0 %v2164
  %2256 = vmatprep.subr.bf16.mxu0 0
  %2257 = vmatpush1.bf16.msra.mxu0 %v2165
  %2258 = vmatprep.subr.bf16.mxu0 0
  %2259 = vmatpush1.bf16.msra.mxu0 %v2166
  %2260 = vmatprep.subr.bf16.mxu0 0
  %2261 = vmatpush1.bf16.msra.mxu0 %v2167
  %2262 = vmatprep.subr.bf16.mxu0 0
  %2263 = vmatpush1.bf16.msra.mxu0 %v2168
  %2264 = vmatprep.subr.bf16.mxu0 0
  %2265 = vmatpush1.bf16.msra.mxu0 %v2169
  %2266 = vmatprep.subr.bf16.mxu0 0
  %2267 = vmatpush1.bf16.msra.mxu0 %v2170
  %2268 = vmatprep.subr.bf16.mxu0 0
  %2269 = vmatpush1.bf16.msra.mxu0 %v2171
  %2270 = vmatprep.subr.bf16.mxu0 0
  %2271 = vmatpush1.bf16.msra.mxu0 %v2172
  %2272 = vmatprep.subr.bf16.mxu0 0
  %2273 = vmatpush1.bf16.msra.mxu0 %v2173
  %2274 = vmatprep.subr.bf16.mxu0 0
  %2275 = vmatpush1.bf16.msra.mxu0 %v2174
  %2276 = vmatprep.subr.bf16.mxu0 0
  %2277 = vmatpush1.bf16.msra.mxu0 %v2175
  %2278 = vmatprep.subr.bf16.mxu0 0
  %2279 = vmatpush1.bf16.msra.mxu0 %v2176
  %2280 = vmatprep.subr.bf16.mxu0 0
  %2281 = vmatpush1.bf16.msra.mxu0 %v2177
  %2282 = vmatprep.mubr.bf16.mxu0 %v1946
  %2283 = vmatmul.mubr.bf16.gmra.mrb[0].mxu0 %v1945
  %v2284 = vpop.f32.mrb[0].mxu0
  %v2285 = vadd.f32 %v2245, %v2284
  %v2286 = vpop.f32.mrb[0].mxu0
  %v2287 = vpop.f32.mrb[0].mxu0
  %v2288 = vpop.f32.mrb[0].mxu0
  %2289 = vdwg.mxu0
  %v2290 = vlaneseq
  %v2291 = vand.u32 %v2290, 127
  %vm2292 = vcmp.lt.s32.totalorder %v2291, 5
  %v2293 = vsel %vm2292, %v2285, -inf
  %2294 = vmax.xlane.f32.xlu0 %v2293
  %v2295 = vpop.xlane.xlu0 %2294
  %v2296 = vsub.f32 %v2293, %v2295
  %v2297 = vmul.f32 %v2296, 1.442695
  %v2298 = vpow.pop %v2297
  %2299 = vadd.xlane.f32.xlu0 %v2298
  %v2300 = vpop.xlane.xlu0 %2299
  %v2301 = vrcp.pop %v2300
  %v2302 = vmul.f32 %v2298, %v2301
  %2303 = vst [vmem:[%s5] sm:$0xff] %v2302
  // Predicated region
  $region22: #{neural_network_forward.7} parent=0 // pred_check
    _
  $region23: #{neural_network_forward.7} parent=0 // pred_check_branch
    %2305 = sbr.rel (0) target = $region25
  $region24: #{neural_network_forward.7} parent=0 // pred_region
    _
  $region25: #{neural_network_forward.7} parent=0 // pred_fallthru
    _
  // Predicated region
  $region26: #{neural_network_forward.7} parent=0 // pred_check
    _
  $region27: #{neural_network_forward.7} parent=0 // pred_check_branch
    %2307 = sbr.rel (0) target = $region29
  $region28: #{neural_network_forward.7} parent=0 // pred_region
    _
  $region29: #{neural_network_forward.7} parent=0 // pred_fallthru
    _

</llo_original>
